<compile_context>
chip_gen: v6e
topology: v6e:2x2x1
jax: 0.10.0
libtpu: 0.0.40
codegen_flags: <defaults>
</compile_context>

<pallas_src>
import math

import numpy as np
import jax
import jax.numpy as jnp
from jax.experimental import pallas as pl
from jax.experimental.pallas import tpu as pltpu

QMAX = 127.0                                            # signed + narrow_range 8-bit
ACT_SCALE = 2.0 ** math.ceil(math.log2(10.0 / QMAX))    # power-of-two act scale (max_val=10)


# ----------------------------------------------------------------------------
# In-kernel helpers
# ----------------------------------------------------------------------------
def _fake_quant(x, scale=ACT_SCALE):
    """Signed, narrow-range 8-bit fake quant (quant-dequant) with a fixed scale."""
    return jnp.clip(jnp.round(x * (1.0 / scale)), -QMAX, QMAX) * scale


def _shift_lanes(x, k):
    """y[..., l] = x[..., l + k] (zero fill at the tail).  Pure lane-shift work (XLU),
    no masked stores.  Used for the width half of the 2x2 max-pools."""
    zeros = jnp.zeros(x.shape[:-1] + (k,), x.dtype)
    return jnp.concatenate([x[..., k:], zeros], axis=-1)


# ----------------------------------------------------------------------------
# The fused kernel: one batch tile per grid step, everything stays in vregs/VMEM
# ----------------------------------------------------------------------------
def _lenet_kernel(x_ref, w1_ref, b1_ref, w2_ref, b2_ref,
                  wf1_ref, bf1_ref, wf2_ref, bf2_ref, wf3_ref, bf3_ref, o_ref):
    bt = x_ref.shape[0]
    f32, bf16 = jnp.float32, jnp.bfloat16

    # -- quant_inp: fake-quant the input once; bf16 is exact on the quant grid ----------
    # input lane layout: l = w*8 + c (c < 3 real, rest zero-padded); rows = (b, h)
    xq = _fake_quant(x_ref[...]).astype(bf16).reshape(bt * 32, 256)

    # -- conv1 (5x5, 3->6) + bias + relu1 + act quant ------------------------------------
    # 5 banded matmuls (one per kernel row di); output lane layout: l = ow*8 + co.
    acc1 = None
    for di in range(5):
        part = jnp.dot(xq, w1_ref[di], preferred_element_type=f32)        # (bt*32, 256)
        part = part.reshape(bt, 32, 256)[:, di:di + 28, :]
        acc1 = part if acc1 is None else acc1 + part
    a1 = _fake_quant(jnp.maximum(acc1 + b1_ref[...], 0.0))                # (bt, 28, 256)

    # -- pool1 (2x2/2) --------------------------------------------------------------------
    # width pairs: 8-lane shift + max; row pairs: 1-row shift + max.  The pooled map is
    # kept strided (valid at rows 2h', lanes 16w'+c); conv2's weights read that layout.
    pw = jnp.maximum(a1, _shift_lanes(a1, 8))
    rmax = jnp.maximum(pw[:, 0:27, :], pw[:, 1:28, :])                    # (bt, 27, 256)
    p1 = jnp.concatenate([rmax, jnp.zeros((bt, 5, 256), f32)], axis=1)    # rows -> 32
    p1 = p1.astype(bf16).reshape(bt * 32, 256)

    # -- conv2 (5x5, 6->16) + bias + relu2 + act quant ------------------------------------
    # output kept on the raw (strided) row grid: valid rows 2*oh2, lanes 16*ow2 + co.
    acc2 = None
    for di in range(5):
        part = jnp.dot(p1, w2_ref[di], preferred_element_type=f32)        # (bt*32, 256)
        part = part.reshape(bt, 32, 256)[:, 2 * di:2 * di + 20, :]
        acc2 = part if acc2 is None else acc2 + part
    a2 = _fake_quant(jnp.maximum(acc2 + b2_ref[...], 0.0))                # (bt, 20, 256)

    # -- pool2 (2x2/2) + NCHW flatten + fc1 + relu3 + act quant ---------------------------
    # width pairs: 16-lane shift + max (valid lanes 32*w''+co); row pairs are folded into
    # the fc1 accumulation (pooled row r lives at raw rows 4r and 4r+2); the PyTorch NCHW
    # flatten order is baked into wf1's host-side column permutation.
    a2w = jnp.maximum(a2, _shift_lanes(a2, 16))
    h1 = None
    for r in range(5):
        row = jnp.maximum(a2w[:, 4 * r, :], a2w[:, 4 * r + 2, :]).astype(bf16)   # (bt, 256)
        part = jnp.dot(row, wf1_ref[r], preferred_element_type=f32)              # (bt, 128)
        h1 = part if h1 is None else h1 + part
    h1 = _fake_quant(jnp.maximum(h1 + bf1_ref[...], 0.0))

    # -- fc2 + relu4 + act quant, then fc3 (return_quant_tensor=False -> plain float) ----
    h2 = jnp.dot(h1.astype(bf16), wf2_ref[...], preferred_element_type=f32)
    h2 = _fake_quant(jnp.maximum(h2 + bf2_ref[...], 0.0))
    o_ref[...] = jnp.dot(h2.astype(bf16), wf3_ref[...],
                         preferred_element_type=f32) + bf3_ref[...]


# ----------------------------------------------------------------------------
# Host-side (eager, one-time) parameter prep: fake-quant + banded lane-dense layouts
# ----------------------------------------------------------------------------
def _quantize_weight_po2(w):
    """CustomWeightQuant: signed narrow-range int8, per-tensor power-of-two scale (MAX)."""
    amax = max(float(np.max(np.abs(w))), 1e-12)
    scale = 2.0 ** math.ceil(math.log2(amax / QMAX))
    return np.clip(np.round(w / scale), -QMAX, QMAX) * scale, scale


def _quantize_bias(b, w_scale):
    """IntBias-style: round(b / (act_scale * w_scale)) * scale."""
    s = ACT_SCALE * w_scale
    return np.round(b / s) * s


def _conv_toeplitz(wq, in_stride, out_w, out_stride, k_pad, n_pad):
    """Banded matmul weights for a 5x5 valid conv whose input rows use lane = w*in_stride + c.
    Returns (KH, k_pad, n_pad); the di-th partial matmul of input row h (= oh + di) produces
    the conv partial sum at output lane = ow*out_stride + co."""
    cout, cin, kh, kw = wq.shape
    W = np.zeros((kh, k_pad, n_pad), np.float32)
    for di in range(kh):
        for dj in range(kw):
            blk = wq[:, :, di, dj].T                                      # (cin, cout)
            for ow in range(out_w):
                r0 = (ow + dj) * in_stride
                c0 = ow * out_stride
                W[di, r0:r0 + cin, c0:c0 + cout] = blk
    return W


def _conv_bias(bq, out_w, out_stride, n_pad):
    v = np.zeros((1, n_pad), np.float32)
    for ow in range(out_w):
        v[0, ow * out_stride: ow * out_stride + bq.shape[0]] = bq
    return v


def _fc1_weights(wq):
    """fc1 weight, split per pooled row r, columns permuted so the kernel's
    (row=r, lane=32*w+c) pooled layout reproduces PyTorch's NCHW flatten c*25 + h*5 + w."""
    w4 = wq.reshape(120, 16, 5, 5)                                        # (out, c, h, w)
    W = np.zeros((5, 256, 128), np.float32)
    for r in range(5):
        for w in range(5):
            W[r, 32 * w: 32 * w + 16, :120] = w4[:, :, r, w].T
    return W


def _fc_pad(wq, k_pad, n_pad):
    out_dim, in_dim = wq.shape
    W = np.zeros((k_pad, n_pad), np.float32)
    W[:in_dim, :out_dim] = wq.T
    return W


def _bias_pad(bq, n_pad):
    v = np.zeros((1, n_pad), np.float32)
    v[0, :bq.shape[0]] = bq
    return v


def prepare_params(params):
    g = lambda k: np.asarray(params[k], np.float32)
    w1q, s1 = _quantize_weight_po2(g("conv1_w"))
    w2q, s2 = _quantize_weight_po2(g("conv2_w"))
    wf1q, sf1 = _quantize_weight_po2(g("fc1_w"))
    wf2q, sf2 = _quantize_weight_po2(g("fc2_w"))
    wf3q, sf3 = _quantize_weight_po2(g("fc3_w"))

    prep = {
        "w1": _conv_toeplitz(w1q, 8, 28, 8, 256, 256),
        "b1": _conv_bias(_quantize_bias(g("conv1_b"), s1), 28, 8, 256),
        "w2": _conv_toeplitz(w2q, 16, 10, 16, 256, 256),
        "b2": _conv_bias(_quantize_bias(g("conv2_b"), s2), 10, 16, 256),
        "wf1": _fc1_weights(wf1q),
        "bf1": _bias_pad(_quantize_bias(g("fc1_b"), sf1), 128),
        "wf2": _fc_pad(wf2q, 128, 128),
        "bf2": _bias_pad(_quantize_bias(g("fc2_b"), sf2), 128),
        "wf3": _fc_pad(wf3q, 128, 128),
        "bf3": _bias_pad(_quantize_bias(g("fc3_b"), sf3), 128),
    }
    # weights -> bf16 (exact: quantized codes are int*2^k, |int| <= 127); biases stay f32
    return {k: jnp.asarray(v, jnp.bfloat16 if k.startswith("w") else jnp.float32)
            for k, v in prep.items()}


# ----------------------------------------------------------------------------
# Full forward pass (matches LeNetQuant.forward) -- one pallas_call, batch-tiled grid
# ----------------------------------------------------------------------------
def lenet_quant_forward(x_nchw, prep, *, batch_tile=2):
    nb = x_nchw.shape[0]
    bt = max(1, min(batch_tile, nb))                  # keep per-step epilogues vreg-sized
    nb_pad = ((nb + bt - 1) // bt) * bt
    n_tiles = nb_pad // bt

    # NCHW -> NHWC, pad channels 3 -> 8, merge (W, C) into one dense 256-lane axis.
    x = jnp.transpose(x_nchw.astype(jnp.float32), (0, 2, 3, 1))           # (nb, 32, 32, 3)
    x = jnp.pad(x, ((0, nb_pad - nb), (0, 0), (0, 0), (0, 5)))
    x = x.reshape(nb_pad, 32, 256)

    def const(shape):
        return pl.BlockSpec(shape, lambda i: (0,) * len(shape))

    out = pl.pallas_call(
        _lenet_kernel,
        out_shape=jax.ShapeDtypeStruct((n_tiles, bt, 128), jnp.float32),
        grid=(n_tiles,),
        in_specs=[
            pl.BlockSpec((bt, 32, 256), lambda i: (i, 0, 0)),             # input batch tile
            const((5, 256, 256)), const((1, 256)),                        # conv1 W / bias
            const((5, 256, 256)), const((1, 256)),                        # conv2 W / bias
            const((5, 256, 128)), const((1, 128)),                        # fc1   W / bias
            const((128, 128)), const((1, 128)),                           # fc2   W / bias
            const((128, 128)), const((1, 128)),                           # fc3   W / bias
        ],
        out_specs=pl.BlockSpec((None, bt, 128), lambda i: (i, 0, 0)),
        compiler_params=pltpu.CompilerParams(dimension_semantics=("parallel",)),
    )(x, prep["w1"], prep["b1"], prep["w2"], prep["b2"],
      prep["wf1"], prep["bf1"], prep["wf2"], prep["bf2"], prep["wf3"], prep["bf3"])

    return out.reshape(nb_pad, 128)[:nb, :10]         # un-pad lane-dense logits -> (nb, 10)


# ----------------------------------------------------------------------------
# Deterministic parameter init (PyTorch default uniform(-1/sqrt(fan_in), ...))
# ----------------------------------------------------------------------------
def init_params(key):
    def uinit(k, shape, fan_in):
        bound = 1.0 / math.sqrt(fan_in)
        return jax.random.uniform(k, shape, jnp.float32, -bound, bound)

    ks = jax.random.split(key, 10)
    return {
        "conv1_w": uinit(ks[0], (6, 3, 5, 5), 3 * 25),     # PyTorch (Cout, Cin, KH, KW)
        "conv1_b": uinit(ks[1], (6,), 3 * 25),
        "conv2_w": uinit(ks[2], (16, 6, 5, 5), 6 * 25),
        "conv2_b": uinit(ks[3], (16,), 6 * 25),
        "fc1_w":   uinit(ks[4], (120, 16 * 5 * 5), 400),   # PyTorch (out, in)
        "fc1_b":   uinit(ks[5], (120,), 400),
        "fc2_w":   uinit(ks[6], (84, 120), 120),
        "fc2_b":   uinit(ks[7], (84,), 120),
        "fc3_w":   uinit(ks[8], (10, 84), 84),
        "fc3_b":   uinit(ks[9], (10,), 84),
    }


if __name__ == "__main__":
    key = jax.random.PRNGKey(0)
    pkey, xkey = jax.random.split(key)
    params = init_params(pkey)
    prep = prepare_params(params)

    # LeNet geometry requires 3x32x32 inputs (fc1 expects 16*5*5 = 400).  Batch 4 with
    # batch_tile 2 so the batch grid axis actually iterates (and can megacore-shard on v7x).
    x = jax.random.uniform(xkey, (4, 3, 32, 32), jnp.float32, 0.0, 1.0)

    fwd = jax.jit(lambda xx: lenet_quant_forward(xx, prep, batch_tile=2))
    out = fwd(x)
    jax.block_until_ready(out)
    assert out.shape == (4, 10) and out.dtype == jnp.float32
    print("KERNEL_OK")
</pallas_src>

<mosaic_0001>
module attributes {stable_mosaic.version = 11 : i64} {
  func.func @_lenet_kernel(%arg0: i32, %arg1: memref<2x32x256xf32, #tpu.memory_space<vmem>>, %arg2: memref<5x256x256xbf16, #tpu.memory_space<vmem>>, %arg3: memref<1x256xf32, #tpu.memory_space<vmem>>, %arg4: memref<5x256x256xbf16, #tpu.memory_space<vmem>>, %arg5: memref<1x256xf32, #tpu.memory_space<vmem>>, %arg6: memref<5x256x128xbf16, #tpu.memory_space<vmem>>, %arg7: memref<1x128xf32, #tpu.memory_space<vmem>>, %arg8: memref<128x128xbf16, #tpu.memory_space<vmem>>, %arg9: memref<1x128xf32, #tpu.memory_space<vmem>>, %arg10: memref<128x128xbf16, #tpu.memory_space<vmem>>, %arg11: memref<1x128xf32, #tpu.memory_space<vmem>>, %arg12: memref<1x2x128xf32, #tpu.memory_space<vmem>>) attributes {dimension_semantics = [#tpu.dimension_semantics<parallel>], iteration_bounds = array<i64: 2>, scalar_prefetch = 0 : i64, scratch_operands = 0 : i64, tpu.core_type = #tpu.core_type<tc>, window_params = [{transform_indices = @transform_0, window_bounds = array<i64: 2, 32, 256>}, {pipeline_mode = #tpu.pipeline_mode<synchronous>, transform_indices = @transform_1, window_bounds = array<i64: 5, 256, 256>}, {pipeline_mode = #tpu.pipeline_mode<synchronous>, transform_indices = @transform_2, window_bounds = array<i64: 1, 256>}, {pipeline_mode = #tpu.pipeline_mode<synchronous>, transform_indices = @transform_3, window_bounds = array<i64: 5, 256, 256>}, {pipeline_mode = #tpu.pipeline_mode<synchronous>, transform_indices = @transform_4, window_bounds = array<i64: 1, 256>}, {pipeline_mode = #tpu.pipeline_mode<synchronous>, transform_indices = @transform_5, window_bounds = array<i64: 5, 256, 128>}, {pipeline_mode = #tpu.pipeline_mode<synchronous>, transform_indices = @transform_6, window_bounds = array<i64: 1, 128>}, {pipeline_mode = #tpu.pipeline_mode<synchronous>, transform_indices = @transform_7, window_bounds = array<i64: 128, 128>}, {pipeline_mode = #tpu.pipeline_mode<synchronous>, transform_indices = @transform_8, window_bounds = array<i64: 1, 128>}, {pipeline_mode = #tpu.pipeline_mode<synchronous>, transform_indices = @transform_9, window_bounds = array<i64: 128, 128>}, {pipeline_mode = #tpu.pipeline_mode<synchronous>, transform_indices = @transform_10, window_bounds = array<i64: 1, 128>}, {transform_indices = @transform_11, window_bounds = array<i64: 1, 2, 128>}]} {
    %c0 = arith.constant 0 : index
    %c0_0 = arith.constant 0 : index
    %c0_1 = arith.constant 0 : index
    %0 = vector.load %arg1[%c0, %c0_0, %c0_1] : memref<2x32x256xf32, #tpu.memory_space<vmem>>, vector<2x32x256xf32>
    %cst = arith.constant 8.000000e+00 : f32
    %1 = vector.broadcast %cst : f32 to vector<2x32x256xf32>
    %2 = arith.mulf %0, %1 : vector<2x32x256xf32>
    %3 = math.roundeven %2 : vector<2x32x256xf32>
    %cst_2 = arith.constant -1.270000e+02 : f32
    %cst_3 = arith.constant 1.270000e+02 : f32
    %4 = vector.broadcast %cst_2 : f32 to vector<2x32x256xf32>
    %5 = arith.maximumf %4, %3 : vector<2x32x256xf32>
    %6 = vector.broadcast %cst_3 : f32 to vector<2x32x256xf32>
    %7 = arith.minimumf %6, %5 : vector<2x32x256xf32>
    %cst_4 = arith.constant 1.250000e-01 : f32
    %8 = vector.broadcast %cst_4 : f32 to vector<2x32x256xf32>
    %9 = arith.mulf %7, %8 : vector<2x32x256xf32>
    %10 = arith.truncf %9 : vector<2x32x256xf32> to vector<2x32x256xbf16>
    %11 = vector.shape_cast %10 : vector<2x32x256xbf16> to vector<64x256xbf16>
    %c0_5 = arith.constant 0 : index
    %c0_6 = arith.constant 0 : index
    %c0_7 = arith.constant 0 : index
    %12 = vector.load %arg2[%c0_5, %c0_6, %c0_7] : memref<5x256x256xbf16, #tpu.memory_space<vmem>>, vector<1x256x256xbf16>
    %13 = vector.shape_cast %12 : vector<1x256x256xbf16> to vector<256x256xbf16>
    %cst_8 = arith.constant dense<0.000000e+00> : vector<64x256xf32>
    %14 = tpu.matmul %11, %13, %cst_8 {dimension_numbers = #tpu.dot_dimension_numbers<[1], [0], [0], [1], [0, 0, 1, 1], [], []>} : vector<64x256xbf16>, vector<256x256xbf16>, vector<64x256xf32> -> vector<64x256xf32>
    %15 = vector.shape_cast %14 : vector<64x256xf32> to vector<2x32x256xf32>
    %16 = vector.extract_strided_slice %15 {offsets = [0, 0, 0], sizes = [2, 28, 256], strides = [1, 1, 1]} : vector<2x32x256xf32> to vector<2x28x256xf32>
    %c1 = arith.constant 1 : index
    %c0_9 = arith.constant 0 : index
    %c0_10 = arith.constant 0 : index
    %17 = vector.load %arg2[%c1, %c0_9, %c0_10] : memref<5x256x256xbf16, #tpu.memory_space<vmem>>, vector<1x256x256xbf16>
    %18 = vector.shape_cast %17 : vector<1x256x256xbf16> to vector<256x256xbf16>
    %cst_11 = arith.constant dense<0.000000e+00> : vector<64x256xf32>
    %19 = tpu.matmul %11, %18, %cst_11 {dimension_numbers = #tpu.dot_dimension_numbers<[1], [0], [0], [1], [0, 0, 1, 1], [], []>} : vector<64x256xbf16>, vector<256x256xbf16>, vector<64x256xf32> -> vector<64x256xf32>
    %20 = vector.shape_cast %19 : vector<64x256xf32> to vector<2x32x256xf32>
    %21 = vector.extract_strided_slice %20 {offsets = [0, 1, 0], sizes = [2, 28, 256], strides = [1, 1, 1]} : vector<2x32x256xf32> to vector<2x28x256xf32>
    %22 = arith.addf %16, %21 : vector<2x28x256xf32>
    %c2 = arith.constant 2 : index
    %c0_12 = arith.constant 0 : index
    %c0_13 = arith.constant 0 : index
    %23 = vector.load %arg2[%c2, %c0_12, %c0_13] : memref<5x256x256xbf16, #tpu.memory_space<vmem>>, vector<1x256x256xbf16>
    %24 = vector.shape_cast %23 : vector<1x256x256xbf16> to vector<256x256xbf16>
    %cst_14 = arith.constant dense<0.000000e+00> : vector<64x256xf32>
    %25 = tpu.matmul %11, %24, %cst_14 {dimension_numbers = #tpu.dot_dimension_numbers<[1], [0], [0], [1], [0, 0, 1, 1], [], []>} : vector<64x256xbf16>, vector<256x256xbf16>, vector<64x256xf32> -> vector<64x256xf32>
    %26 = vector.shape_cast %25 : vector<64x256xf32> to vector<2x32x256xf32>
    %27 = vector.extract_strided_slice %26 {offsets = [0, 2, 0], sizes = [2, 28, 256], strides = [1, 1, 1]} : vector<2x32x256xf32> to vector<2x28x256xf32>
    %28 = arith.addf %22, %27 : vector<2x28x256xf32>
    %c3 = arith.constant 3 : index
    %c0_15 = arith.constant 0 : index
    %c0_16 = arith.constant 0 : index
    %29 = vector.load %arg2[%c3, %c0_15, %c0_16] : memref<5x256x256xbf16, #tpu.memory_space<vmem>>, vector<1x256x256xbf16>
    %30 = vector.shape_cast %29 : vector<1x256x256xbf16> to vector<256x256xbf16>
    %cst_17 = arith.constant dense<0.000000e+00> : vector<64x256xf32>
    %31 = tpu.matmul %11, %30, %cst_17 {dimension_numbers = #tpu.dot_dimension_numbers<[1], [0], [0], [1], [0, 0, 1, 1], [], []>} : vector<64x256xbf16>, vector<256x256xbf16>, vector<64x256xf32> -> vector<64x256xf32>
    %32 = vector.shape_cast %31 : vector<64x256xf32> to vector<2x32x256xf32>
    %33 = vector.extract_strided_slice %32 {offsets = [0, 3, 0], sizes = [2, 28, 256], strides = [1, 1, 1]} : vector<2x32x256xf32> to vector<2x28x256xf32>
    %34 = arith.addf %28, %33 : vector<2x28x256xf32>
    %c4 = arith.constant 4 : index
    %c0_18 = arith.constant 0 : index
    %c0_19 = arith.constant 0 : index
    %35 = vector.load %arg2[%c4, %c0_18, %c0_19] : memref<5x256x256xbf16, #tpu.memory_space<vmem>>, vector<1x256x256xbf16>
    %36 = vector.shape_cast %35 : vector<1x256x256xbf16> to vector<256x256xbf16>
    %cst_20 = arith.constant dense<0.000000e+00> : vector<64x256xf32>
    %37 = tpu.matmul %11, %36, %cst_20 {dimension_numbers = #tpu.dot_dimension_numbers<[1], [0], [0], [1], [0, 0, 1, 1], [], []>} : vector<64x256xbf16>, vector<256x256xbf16>, vector<64x256xf32> -> vector<64x256xf32>
    %38 = vector.shape_cast %37 : vector<64x256xf32> to vector<2x32x256xf32>
    %39 = vector.extract_strided_slice %38 {offsets = [0, 4, 0], sizes = [2, 28, 256], strides = [1, 1, 1]} : vector<2x32x256xf32> to vector<2x28x256xf32>
    %40 = arith.addf %34, %39 : vector<2x28x256xf32>
    %c0_21 = arith.constant 0 : index
    %c0_22 = arith.constant 0 : index
    %41 = vector.load %arg3[%c0_21, %c0_22] : memref<1x256xf32, #tpu.memory_space<vmem>>, vector<1x256xf32>
    %42 = vector.shape_cast %41 : vector<1x256xf32> to vector<1x1x256xf32>
    %43 = vector.broadcast %42 : vector<1x1x256xf32> to vector<2x28x256xf32>
    %44 = arith.addf %40, %43 : vector<2x28x256xf32>
    %cst_23 = arith.constant 0.000000e+00 : f32
    %45 = vector.broadcast %cst_23 : f32 to vector<2x28x256xf32>
    %46 = arith.maximumf %44, %45 : vector<2x28x256xf32>
    %cst_24 = arith.constant 8.000000e+00 : f32
    %47 = vector.broadcast %cst_24 : f32 to vector<2x28x256xf32>
    %48 = arith.mulf %46, %47 : vector<2x28x256xf32>
    %49 = math.roundeven %48 : vector<2x28x256xf32>
    %cst_25 = arith.constant -1.270000e+02 : f32
    %cst_26 = arith.constant 1.270000e+02 : f32
    %50 = vector.broadcast %cst_25 : f32 to vector<2x28x256xf32>
    %51 = arith.maximumf %50, %49 : vector<2x28x256xf32>
    %52 = vector.broadcast %cst_26 : f32 to vector<2x28x256xf32>
    %53 = arith.minimumf %52, %51 : vector<2x28x256xf32>
    %cst_27 = arith.constant 1.250000e-01 : f32
    %54 = vector.broadcast %cst_27 : f32 to vector<2x28x256xf32>
    %55 = arith.mulf %53, %54 : vector<2x28x256xf32>
    %cst_28 = arith.constant 0.000000e+00 : f32
    %56 = vector.broadcast %cst_28 : f32 to vector<2x28x8xf32>
    %57 = vector.extract_strided_slice %55 {offsets = [0, 0, 8], sizes = [2, 28, 248], strides = [1, 1, 1]} : vector<2x28x256xf32> to vector<2x28x248xf32>
    %58 = tpu.concatenate %57, %56 in 2 : vector<2x28x248xf32>, vector<2x28x8xf32> -> vector<2x28x256xf32>
    %59 = arith.maximumf %55, %58 : vector<2x28x256xf32>
    %60 = vector.extract_strided_slice %59 {offsets = [0, 0, 0], sizes = [2, 27, 256], strides = [1, 1, 1]} : vector<2x28x256xf32> to vector<2x27x256xf32>
    %61 = vector.extract_strided_slice %59 {offsets = [0, 1, 0], sizes = [2, 27, 256], strides = [1, 1, 1]} : vector<2x28x256xf32> to vector<2x27x256xf32>
    %62 = arith.maximumf %60, %61 : vector<2x27x256xf32>
    %cst_29 = arith.constant 0.000000e+00 : f32
    %63 = vector.broadcast %cst_29 : f32 to vector<2x5x256xf32>
    %64 = tpu.concatenate %62, %63 in 1 : vector<2x27x256xf32>, vector<2x5x256xf32> -> vector<2x32x256xf32>
    %65 = arith.truncf %64 : vector<2x32x256xf32> to vector<2x32x256xbf16>
    %66 = vector.shape_cast %65 : vector<2x32x256xbf16> to vector<64x256xbf16>
    %c0_30 = arith.constant 0 : index
    %c0_31 = arith.constant 0 : index
    %c0_32 = arith.constant 0 : index
    %67 = vector.load %arg4[%c0_30, %c0_31, %c0_32] : memref<5x256x256xbf16, #tpu.memory_space<vmem>>, vector<1x256x256xbf16>
    %68 = vector.shape_cast %67 : vector<1x256x256xbf16> to vector<256x256xbf16>
    %cst_33 = arith.constant dense<0.000000e+00> : vector<64x256xf32>
    %69 = tpu.matmul %66, %68, %cst_33 {dimension_numbers = #tpu.dot_dimension_numbers<[1], [0], [0], [1], [0, 0, 1, 1], [], []>} : vector<64x256xbf16>, vector<256x256xbf16>, vector<64x256xf32> -> vector<64x256xf32>
    %70 = vector.shape_cast %69 : vector<64x256xf32> to vector<2x32x256xf32>
    %71 = vector.extract_strided_slice %70 {offsets = [0, 0, 0], sizes = [2, 20, 256], strides = [1, 1, 1]} : vector<2x32x256xf32> to vector<2x20x256xf32>
    %c1_34 = arith.constant 1 : index
    %c0_35 = arith.constant 0 : index
    %c0_36 = arith.constant 0 : index
    %72 = vector.load %arg4[%c1_34, %c0_35, %c0_36] : memref<5x256x256xbf16, #tpu.memory_space<vmem>>, vector<1x256x256xbf16>
    %73 = vector.shape_cast %72 : vector<1x256x256xbf16> to vector<256x256xbf16>
    %cst_37 = arith.constant dense<0.000000e+00> : vector<64x256xf32>
    %74 = tpu.matmul %66, %73, %cst_37 {dimension_numbers = #tpu.dot_dimension_numbers<[1], [0], [0], [1], [0, 0, 1, 1], [], []>} : vector<64x256xbf16>, vector<256x256xbf16>, vector<64x256xf32> -> vector<64x256xf32>
    %75 = vector.shape_cast %74 : vector<64x256xf32> to vector<2x32x256xf32>
    %76 = vector.extract_strided_slice %75 {offsets = [0, 2, 0], sizes = [2, 20, 256], strides = [1, 1, 1]} : vector<2x32x256xf32> to vector<2x20x256xf32>
    %77 = arith.addf %71, %76 : vector<2x20x256xf32>
    %c2_38 = arith.constant 2 : index
    %c0_39 = arith.constant 0 : index
    %c0_40 = arith.constant 0 : index
    %78 = vector.load %arg4[%c2_38, %c0_39, %c0_40] : memref<5x256x256xbf16, #tpu.memory_space<vmem>>, vector<1x256x256xbf16>
    %79 = vector.shape_cast %78 : vector<1x256x256xbf16> to vector<256x256xbf16>
    %cst_41 = arith.constant dense<0.000000e+00> : vector<64x256xf32>
    %80 = tpu.matmul %66, %79, %cst_41 {dimension_numbers = #tpu.dot_dimension_numbers<[1], [0], [0], [1], [0, 0, 1, 1], [], []>} : vector<64x256xbf16>, vector<256x256xbf16>, vector<64x256xf32> -> vector<64x256xf32>
    %81 = vector.shape_cast %80 : vector<64x256xf32> to vector<2x32x256xf32>
    %82 = vector.extract_strided_slice %81 {offsets = [0, 4, 0], sizes = [2, 20, 256], strides = [1, 1, 1]} : vector<2x32x256xf32> to vector<2x20x256xf32>
    %83 = arith.addf %77, %82 : vector<2x20x256xf32>
    %c3_42 = arith.constant 3 : index
    %c0_43 = arith.constant 0 : index
    %c0_44 = arith.constant 0 : index
    %84 = vector.load %arg4[%c3_42, %c0_43, %c0_44] : memref<5x256x256xbf16, #tpu.memory_space<vmem>>, vector<1x256x256xbf16>
    %85 = vector.shape_cast %84 : vector<1x256x256xbf16> to vector<256x256xbf16>
    %cst_45 = arith.constant dense<0.000000e+00> : vector<64x256xf32>
    %86 = tpu.matmul %66, %85, %cst_45 {dimension_numbers = #tpu.dot_dimension_numbers<[1], [0], [0], [1], [0, 0, 1, 1], [], []>} : vector<64x256xbf16>, vector<256x256xbf16>, vector<64x256xf32> -> vector<64x256xf32>
    %87 = vector.shape_cast %86 : vector<64x256xf32> to vector<2x32x256xf32>
    %88 = vector.extract_strided_slice %87 {offsets = [0, 6, 0], sizes = [2, 20, 256], strides = [1, 1, 1]} : vector<2x32x256xf32> to vector<2x20x256xf32>
    %89 = arith.addf %83, %88 : vector<2x20x256xf32>
    %c4_46 = arith.constant 4 : index
    %c0_47 = arith.constant 0 : index
    %c0_48 = arith.constant 0 : index
    %90 = vector.load %arg4[%c4_46, %c0_47, %c0_48] : memref<5x256x256xbf16, #tpu.memory_space<vmem>>, vector<1x256x256xbf16>
    %91 = vector.shape_cast %90 : vector<1x256x256xbf16> to vector<256x256xbf16>
    %cst_49 = arith.constant dense<0.000000e+00> : vector<64x256xf32>
    %92 = tpu.matmul %66, %91, %cst_49 {dimension_numbers = #tpu.dot_dimension_numbers<[1], [0], [0], [1], [0, 0, 1, 1], [], []>} : vector<64x256xbf16>, vector<256x256xbf16>, vector<64x256xf32> -> vector<64x256xf32>
    %93 = vector.shape_cast %92 : vector<64x256xf32> to vector<2x32x256xf32>
    %94 = vector.extract_strided_slice %93 {offsets = [0, 8, 0], sizes = [2, 20, 256], strides = [1, 1, 1]} : vector<2x32x256xf32> to vector<2x20x256xf32>
    %95 = arith.addf %89, %94 : vector<2x20x256xf32>
    %c0_50 = arith.constant 0 : index
    %c0_51 = arith.constant 0 : index
    %96 = vector.load %arg5[%c0_50, %c0_51] : memref<1x256xf32, #tpu.memory_space<vmem>>, vector<1x256xf32>
    %97 = vector.shape_cast %96 : vector<1x256xf32> to vector<1x1x256xf32>
    %98 = vector.broadcast %97 : vector<1x1x256xf32> to vector<2x20x256xf32>
    %99 = arith.addf %95, %98 : vector<2x20x256xf32>
    %cst_52 = arith.constant 0.000000e+00 : f32
    %100 = vector.broadcast %cst_52 : f32 to vector<2x20x256xf32>
    %101 = arith.maximumf %99, %100 : vector<2x20x256xf32>
    %cst_53 = arith.constant 8.000000e+00 : f32
    %102 = vector.broadcast %cst_53 : f32 to vector<2x20x256xf32>
    %103 = arith.mulf %101, %102 : vector<2x20x256xf32>
    %104 = math.roundeven %103 : vector<2x20x256xf32>
    %cst_54 = arith.constant -1.270000e+02 : f32
    %cst_55 = arith.constant 1.270000e+02 : f32
    %105 = vector.broadcast %cst_54 : f32 to vector<2x20x256xf32>
    %106 = arith.maximumf %105, %104 : vector<2x20x256xf32>
    %107 = vector.broadcast %cst_55 : f32 to vector<2x20x256xf32>
    %108 = arith.minimumf %107, %106 : vector<2x20x256xf32>
    %cst_56 = arith.constant 1.250000e-01 : f32
    %109 = vector.broadcast %cst_56 : f32 to vector<2x20x256xf32>
    %110 = arith.mulf %108, %109 : vector<2x20x256xf32>
    %cst_57 = arith.constant 0.000000e+00 : f32
    %111 = vector.broadcast %cst_57 : f32 to vector<2x20x16xf32>
    %112 = vector.extract_strided_slice %110 {offsets = [0, 0, 16], sizes = [2, 20, 240], strides = [1, 1, 1]} : vector<2x20x256xf32> to vector<2x20x240xf32>
    %113 = tpu.concatenate %112, %111 in 2 : vector<2x20x240xf32>, vector<2x20x16xf32> -> vector<2x20x256xf32>
    %114 = arith.maximumf %110, %113 : vector<2x20x256xf32>
    %115 = vector.extract_strided_slice %114 {offsets = [0, 0, 0], sizes = [2, 1, 256], strides = [1, 1, 1]} : vector<2x20x256xf32> to vector<2x1x256xf32>
    %116 = vector.shape_cast %115 : vector<2x1x256xf32> to vector<2x256xf32>
    %117 = vector.extract_strided_slice %114 {offsets = [0, 2, 0], sizes = [2, 1, 256], strides = [1, 1, 1]} : vector<2x20x256xf32> to vector<2x1x256xf32>
    %118 = vector.shape_cast %117 : vector<2x1x256xf32> to vector<2x256xf32>
    %119 = arith.maximumf %116, %118 : vector<2x256xf32>
    %120 = arith.truncf %119 : vector<2x256xf32> to vector<2x256xbf16>
    %c0_58 = arith.constant 0 : index
    %c0_59 = arith.constant 0 : index
    %c0_60 = arith.constant 0 : index
    %121 = vector.load %arg6[%c0_58, %c0_59, %c0_60] : memref<5x256x128xbf16, #tpu.memory_space<vmem>>, vector<1x256x128xbf16>
    %122 = vector.shape_cast %121 : vector<1x256x128xbf16> to vector<256x128xbf16>
    %cst_61 = arith.constant dense<0.000000e+00> : vector<2x128xf32>
    %123 = tpu.matmul %120, %122, %cst_61 {dimension_numbers = #tpu.dot_dimension_numbers<[1], [0], [0], [1], [0, 0, 1, 1], [], []>} : vector<2x256xbf16>, vector<256x128xbf16>, vector<2x128xf32> -> vector<2x128xf32>
    %124 = vector.extract_strided_slice %114 {offsets = [0, 4, 0], sizes = [2, 1, 256], strides = [1, 1, 1]} : vector<2x20x256xf32> to vector<2x1x256xf32>
    %125 = vector.shape_cast %124 : vector<2x1x256xf32> to vector<2x256xf32>
    %126 = vector.extract_strided_slice %114 {offsets = [0, 6, 0], sizes = [2, 1, 256], strides = [1, 1, 1]} : vector<2x20x256xf32> to vector<2x1x256xf32>
    %127 = vector.shape_cast %126 : vector<2x1x256xf32> to vector<2x256xf32>
    %128 = arith.maximumf %125, %127 : vector<2x256xf32>
    %129 = arith.truncf %128 : vector<2x256xf32> to vector<2x256xbf16>
    %c1_62 = arith.constant 1 : index
    %c0_63 = arith.constant 0 : index
    %c0_64 = arith.constant 0 : index
    %130 = vector.load %arg6[%c1_62, %c0_63, %c0_64] : memref<5x256x128xbf16, #tpu.memory_space<vmem>>, vector<1x256x128xbf16>
    %131 = vector.shape_cast %130 : vector<1x256x128xbf16> to vector<256x128xbf16>
    %cst_65 = arith.constant dense<0.000000e+00> : vector<2x128xf32>
    %132 = tpu.matmul %129, %131, %cst_65 {dimension_numbers = #tpu.dot_dimension_numbers<[1], [0], [0], [1], [0, 0, 1, 1], [], []>} : vector<2x256xbf16>, vector<256x128xbf16>, vector<2x128xf32> -> vector<2x128xf32>
    %133 = arith.addf %123, %132 : vector<2x128xf32>
    %134 = vector.extract_strided_slice %114 {offsets = [0, 8, 0], sizes = [2, 1, 256], strides = [1, 1, 1]} : vector<2x20x256xf32> to vector<2x1x256xf32>
    %135 = vector.shape_cast %134 : vector<2x1x256xf32> to vector<2x256xf32>
    %136 = vector.extract_strided_slice %114 {offsets = [0, 10, 0], sizes = [2, 1, 256], strides = [1, 1, 1]} : vector<2x20x256xf32> to vector<2x1x256xf32>
    %137 = vector.shape_cast %136 : vector<2x1x256xf32> to vector<2x256xf32>
    %138 = arith.maximumf %135, %137 : vector<2x256xf32>
    %139 = arith.truncf %138 : vector<2x256xf32> to vector<2x256xbf16>
    %c2_66 = arith.constant 2 : index
    %c0_67 = arith.constant 0 : index
    %c0_68 = arith.constant 0 : index
    %140 = vector.load %arg6[%c2_66, %c0_67, %c0_68] : memref<5x256x128xbf16, #tpu.memory_space<vmem>>, vector<1x256x128xbf16>
    %141 = vector.shape_cast %140 : vector<1x256x128xbf16> to vector<256x128xbf16>
    %cst_69 = arith.constant dense<0.000000e+00> : vector<2x128xf32>
    %142 = tpu.matmul %139, %141, %cst_69 {dimension_numbers = #tpu.dot_dimension_numbers<[1], [0], [0], [1], [0, 0, 1, 1], [], []>} : vector<2x256xbf16>, vector<256x128xbf16>, vector<2x128xf32> -> vector<2x128xf32>
    %143 = arith.addf %133, %142 : vector<2x128xf32>
    %144 = vector.extract_strided_slice %114 {offsets = [0, 12, 0], sizes = [2, 1, 256], strides = [1, 1, 1]} : vector<2x20x256xf32> to vector<2x1x256xf32>
    %145 = vector.shape_cast %144 : vector<2x1x256xf32> to vector<2x256xf32>
    %146 = vector.extract_strided_slice %114 {offsets = [0, 14, 0], sizes = [2, 1, 256], strides = [1, 1, 1]} : vector<2x20x256xf32> to vector<2x1x256xf32>
    %147 = vector.shape_cast %146 : vector<2x1x256xf32> to vector<2x256xf32>
    %148 = arith.maximumf %145, %147 : vector<2x256xf32>
    %149 = arith.truncf %148 : vector<2x256xf32> to vector<2x256xbf16>
    %c3_70 = arith.constant 3 : index
    %c0_71 = arith.constant 0 : index
    %c0_72 = arith.constant 0 : index
    %150 = vector.load %arg6[%c3_70, %c0_71, %c0_72] : memref<5x256x128xbf16, #tpu.memory_space<vmem>>, vector<1x256x128xbf16>
    %151 = vector.shape_cast %150 : vector<1x256x128xbf16> to vector<256x128xbf16>
    %cst_73 = arith.constant dense<0.000000e+00> : vector<2x128xf32>
    %152 = tpu.matmul %149, %151, %cst_73 {dimension_numbers = #tpu.dot_dimension_numbers<[1], [0], [0], [1], [0, 0, 1, 1], [], []>} : vector<2x256xbf16>, vector<256x128xbf16>, vector<2x128xf32> -> vector<2x128xf32>
    %153 = arith.addf %143, %152 : vector<2x128xf32>
    %154 = vector.extract_strided_slice %114 {offsets = [0, 16, 0], sizes = [2, 1, 256], strides = [1, 1, 1]} : vector<2x20x256xf32> to vector<2x1x256xf32>
    %155 = vector.shape_cast %154 : vector<2x1x256xf32> to vector<2x256xf32>
    %156 = vector.extract_strided_slice %114 {offsets = [0, 18, 0], sizes = [2, 1, 256], strides = [1, 1, 1]} : vector<2x20x256xf32> to vector<2x1x256xf32>
    %157 = vector.shape_cast %156 : vector<2x1x256xf32> to vector<2x256xf32>
    %158 = arith.maximumf %155, %157 : vector<2x256xf32>
    %159 = arith.truncf %158 : vector<2x256xf32> to vector<2x256xbf16>
    %c4_74 = arith.constant 4 : index
    %c0_75 = arith.constant 0 : index
    %c0_76 = arith.constant 0 : index
    %160 = vector.load %arg6[%c4_74, %c0_75, %c0_76] : memref<5x256x128xbf16, #tpu.memory_space<vmem>>, vector<1x256x128xbf16>
    %161 = vector.shape_cast %160 : vector<1x256x128xbf16> to vector<256x128xbf16>
    %cst_77 = arith.constant dense<0.000000e+00> : vector<2x128xf32>
    %162 = tpu.matmul %159, %161, %cst_77 {dimension_numbers = #tpu.dot_dimension_numbers<[1], [0], [0], [1], [0, 0, 1, 1], [], []>} : vector<2x256xbf16>, vector<256x128xbf16>, vector<2x128xf32> -> vector<2x128xf32>
    %163 = arith.addf %153, %162 : vector<2x128xf32>
    %c0_78 = arith.constant 0 : index
    %c0_79 = arith.constant 0 : index
    %164 = vector.load %arg7[%c0_78, %c0_79] : memref<1x128xf32, #tpu.memory_space<vmem>>, vector<1x128xf32>
    %165 = vector.broadcast %164 : vector<1x128xf32> to vector<2x128xf32>
    %166 = arith.addf %163, %165 : vector<2x128xf32>
    %cst_80 = arith.constant 0.000000e+00 : f32
    %167 = vector.broadcast %cst_80 : f32 to vector<2x128xf32>
    %168 = arith.maximumf %166, %167 : vector<2x128xf32>
    %cst_81 = arith.constant 8.000000e+00 : f32
    %169 = vector.broadcast %cst_81 : f32 to vector<2x128xf32>
    %170 = arith.mulf %168, %169 : vector<2x128xf32>
    %171 = math.roundeven %170 : vector<2x128xf32>
    %cst_82 = arith.constant -1.270000e+02 : f32
    %cst_83 = arith.constant 1.270000e+02 : f32
    %172 = vector.broadcast %cst_82 : f32 to vector<2x128xf32>
    %173 = arith.maximumf %172, %171 : vector<2x128xf32>
    %174 = vector.broadcast %cst_83 : f32 to vector<2x128xf32>
    %175 = arith.minimumf %174, %173 : vector<2x128xf32>
    %cst_84 = arith.constant 1.250000e-01 : f32
    %176 = vector.broadcast %cst_84 : f32 to vector<2x128xf32>
    %177 = arith.mulf %175, %176 : vector<2x128xf32>
    %178 = arith.truncf %177 : vector<2x128xf32> to vector<2x128xbf16>
    %c0_85 = arith.constant 0 : index
    %c0_86 = arith.constant 0 : index
    %179 = vector.load %arg8[%c0_85, %c0_86] : memref<128x128xbf16, #tpu.memory_space<vmem>>, vector<128x128xbf16>
    %cst_87 = arith.constant dense<0.000000e+00> : vector<2x128xf32>
    %180 = tpu.matmul %178, %179, %cst_87 {dimension_numbers = #tpu.dot_dimension_numbers<[1], [0], [0], [1], [0, 0, 1, 1], [], []>} : vector<2x128xbf16>, vector<128x128xbf16>, vector<2x128xf32> -> vector<2x128xf32>
    %c0_88 = arith.constant 0 : index
    %c0_89 = arith.constant 0 : index
    %181 = vector.load %arg9[%c0_88, %c0_89] : memref<1x128xf32, #tpu.memory_space<vmem>>, vector<1x128xf32>
    %182 = vector.broadcast %181 : vector<1x128xf32> to vector<2x128xf32>
    %183 = arith.addf %180, %182 : vector<2x128xf32>
    %cst_90 = arith.constant 0.000000e+00 : f32
    %184 = vector.broadcast %cst_90 : f32 to vector<2x128xf32>
    %185 = arith.maximumf %183, %184 : vector<2x128xf32>
    %cst_91 = arith.constant 8.000000e+00 : f32
    %186 = vector.broadcast %cst_91 : f32 to vector<2x128xf32>
    %187 = arith.mulf %185, %186 : vector<2x128xf32>
    %188 = math.roundeven %187 : vector<2x128xf32>
    %cst_92 = arith.constant -1.270000e+02 : f32
    %cst_93 = arith.constant 1.270000e+02 : f32
    %189 = vector.broadcast %cst_92 : f32 to vector<2x128xf32>
    %190 = arith.maximumf %189, %188 : vector<2x128xf32>
    %191 = vector.broadcast %cst_93 : f32 to vector<2x128xf32>
    %192 = arith.minimumf %191, %190 : vector<2x128xf32>
    %cst_94 = arith.constant 1.250000e-01 : f32
    %193 = vector.broadcast %cst_94 : f32 to vector<2x128xf32>
    %194 = arith.mulf %192, %193 : vector<2x128xf32>
    %195 = arith.truncf %194 : vector<2x128xf32> to vector<2x128xbf16>
    %c0_95 = arith.constant 0 : index
    %c0_96 = arith.constant 0 : index
    %196 = vector.load %arg10[%c0_95, %c0_96] : memref<128x128xbf16, #tpu.memory_space<vmem>>, vector<128x128xbf16>
    %cst_97 = arith.constant dense<0.000000e+00> : vector<2x128xf32>
    %197 = tpu.matmul %195, %196, %cst_97 {dimension_numbers = #tpu.dot_dimension_numbers<[1], [0], [0], [1], [0, 0, 1, 1], [], []>} : vector<2x128xbf16>, vector<128x128xbf16>, vector<2x128xf32> -> vector<2x128xf32>
    %c0_98 = arith.constant 0 : index
    %c0_99 = arith.constant 0 : index
    %198 = vector.load %arg11[%c0_98, %c0_99] : memref<1x128xf32, #tpu.memory_space<vmem>>, vector<1x128xf32>
    %199 = vector.broadcast %198 : vector<1x128xf32> to vector<2x128xf32>
    %200 = arith.addf %197, %199 : vector<2x128xf32>
    %c0_100 = arith.constant 0 : index
    %c0_101 = arith.constant 0 : index
    %c0_102 = arith.constant 0 : index
    %201 = vector.load %arg12[%c0_100, %c0_101, %c0_102] : memref<1x2x128xf32, #tpu.memory_space<vmem>>, vector<1x2x128xf32>
    %202 = vector.shape_cast %201 : vector<1x2x128xf32> to vector<2x128xf32>
    %203 = vector.shape_cast %200 : vector<2x128xf32> to vector<1x2x128xf32>
    tpu.vector_store %arg12[%c0_100, %c0_101, %c0_102], %203 {strides = array<i32>} : memref<1x2x128xf32, #tpu.memory_space<vmem>>, vector<1x2x128xf32>,
    return
  }
  func.func @transform_0(%arg0: i32) -> (i32, i32, i32) {
    %c0_i32 = arith.constant 0 : i32
    %c0_i32_0 = arith.constant 0 : i32
    %c0_i32_1 = arith.constant 0 : i32
    return %arg0, %c0_i32, %c0_i32_0 : i32, i32, i32
  }
  func.func @transform_1(%arg0: i32) -> (i32, i32, i32) {
    %c0_i32 = arith.constant 0 : i32
    %c0_i32_0 = arith.constant 0 : i32
    %c0_i32_1 = arith.constant 0 : i32
    %c0_i32_2 = arith.constant 0 : i32
    return %c0_i32, %c0_i32_0, %c0_i32_1 : i32, i32, i32
  }
  func.func @transform_2(%arg0: i32) -> (i32, i32) {
    %c0_i32 = arith.constant 0 : i32
    %c0_i32_0 = arith.constant 0 : i32
    %c0_i32_1 = arith.constant 0 : i32
    return %c0_i32, %c0_i32_0 : i32, i32
  }
  func.func @transform_3(%arg0: i32) -> (i32, i32, i32) {
    %c0_i32 = arith.constant 0 : i32
    %c0_i32_0 = arith.constant 0 : i32
    %c0_i32_1 = arith.constant 0 : i32
    %c0_i32_2 = arith.constant 0 : i32
    return %c0_i32, %c0_i32_0, %c0_i32_1 : i32, i32, i32
  }
  func.func @transform_4(%arg0: i32) -> (i32, i32) {
    %c0_i32 = arith.constant 0 : i32
    %c0_i32_0 = arith.constant 0 : i32
    %c0_i32_1 = arith.constant 0 : i32
    return %c0_i32, %c0_i32_0 : i32, i32
  }
  func.func @transform_5(%arg0: i32) -> (i32, i32, i32) {
    %c0_i32 = arith.constant 0 : i32
    %c0_i32_0 = arith.constant 0 : i32
    %c0_i32_1 = arith.constant 0 : i32
    %c0_i32_2 = arith.constant 0 : i32
    return %c0_i32, %c0_i32_0, %c0_i32_1 : i32, i32, i32
  }
  func.func @transform_6(%arg0: i32) -> (i32, i32) {
    %c0_i32 = arith.constant 0 : i32
    %c0_i32_0 = arith.constant 0 : i32
    %c0_i32_1 = arith.constant 0 : i32
    return %c0_i32, %c0_i32_0 : i32, i32
  }
  func.func @transform_7(%arg0: i32) -> (i32, i32) {
    %c0_i32 = arith.constant 0 : i32
    %c0_i32_0 = arith.constant 0 : i32
    %c0_i32_1 = arith.constant 0 : i32
    return %c0_i32, %c0_i32_0 : i32, i32
  }
  func.func @transform_8(%arg0: i32) -> (i32, i32) {
    %c0_i32 = arith.constant 0 : i32
    %c0_i32_0 = arith.constant 0 : i32
    %c0_i32_1 = arith.constant 0 : i32
    return %c0_i32, %c0_i32_0 : i32, i32
  }
  func.func @transform_9(%arg0: i32) -> (i32, i32) {
    %c0_i32 = arith.constant 0 : i32
    %c0_i32_0 = arith.constant 0 : i32
    %c0_i32_1 = arith.constant 0 : i32
    return %c0_i32, %c0_i32_0 : i32, i32
  }
  func.func @transform_10(%arg0: i32) -> (i32, i32) {
    %c0_i32 = arith.constant 0 : i32
    %c0_i32_0 = arith.constant 0 : i32
    %c0_i32_1 = arith.constant 0 : i32
    return %c0_i32, %c0_i32_0 : i32, i32
  }
  func.func @transform_11(%arg0: i32) -> (i32, i32, i32) {
    %c0_i32 = arith.constant 0 : i32
    %c0_i32_0 = arith.constant 0 : i32
    %c0_i32_1 = arith.constant 0 : i32
    return %arg0, %c0_i32, %c0_i32_0 : i32, i32, i32
  }
}

</mosaic_0001>

<llo_original>
// kernel: _lambda_.1
$region0: #{_lambda_.1}
  #allocation0 [shape = 'u32[]', space=smem, size = 0x4, offset = 0x4, fixed_abs, tag = 'smem constant byte address 0x4 - core index']
  #allocation1 [shape = 'u32[144,128]{1,0:T(1,128)}', space=vmem, size = 0x12000, scoped, tag = 'internal scratch']
  %s0 = inlined_call_operand.vmem [shape: f32[4,32,256], index: 0, kind: input, shape index: {}]
  %s1 = inlined_call_operand.vmem [shape: bf16[5,256,256], index: 1, kind: input, shape index: {}]
  %s2 = inlined_call_operand.vmem [shape: f32[1,256], index: 2, kind: input, shape index: {}]
  %s3 = inlined_call_operand.vmem [shape: bf16[5,256,256], index: 3, kind: input, shape index: {}]
  %s4 = inlined_call_operand.vmem [shape: f32[1,256], index: 4, kind: input, shape index: {}]
  %s5 = inlined_call_operand.vmem [shape: bf16[5,256,128], index: 5, kind: input, shape index: {}]
  %s6 = inlined_call_operand.vmem [shape: f32[1,128], index: 6, kind: input, shape index: {}]
  %s7 = inlined_call_operand.vmem [shape: bf16[128,128], index: 7, kind: input, shape index: {}]
  %s8 = inlined_call_operand.vmem [shape: f32[1,128], index: 8, kind: input, shape index: {}]
  %s9 = inlined_call_operand.vmem [shape: bf16[128,128], index: 9, kind: input, shape index: {}]
  %s10 = inlined_call_operand.vmem [shape: f32[1,128], index: 10, kind: input, shape index: {}]
  %s11 = inlined_call_operand.hbm [shape: f32[2,2,128], index: 11, kind: output, shape index: {}]
  %s12 = sld [smem:[#allocation0]]
  $region77: #{_lambda_.1} parent=0
    _
  %s14 = ssub.s32 1, %s12
  %s15 = scalar_select 0, %s14, %s12
  $region1: #{_lambda_.1} parent=0
    #allocation2 [shape = 'u8[2048]{0}', space=vmem, size = 0x800, scoped, tag = 'output window, operand 0']
    #allocation3 [shape = 's32[2]{0}', space=sflag, size = 0x8, scoped, tag = 'scoped memory for _lambda_.1']
    %16 = vsyncpa [#allocation3], 0
    %s17 = scalar_lea.sflag [#allocation3], 1
    %18 = vsyncpa %s17, 0
    loop: start=0, step=1, limit=4
    $region2: #{_lambda_.1} parent=1 // loop_pre_header
      _
    $region3: #{_lambda_.1} parent=1 // loop_header
      %s20 = sphi 0, %s24
      %p21 = scmp.ge.s32.totalorder %s20, 4
      %s30 = sphi 0, %s32
      %s33 = sphi 0, %s30
      %s34 = sphi 0, %s33
      %s50 = sphi 0, %s34
      %s54 = sphi 0, %s54
      %s56 = sphi 0, %s54
      %s57 = sphi 0, %s56
      %s71 = sphi 0, %s57
      %s75 = sphi 0, %s75
      %s77 = sphi 0, %s75
      %s78 = sphi 0, %s77
      %s92 = sphi 0, %s78
      %s96 = sphi 0, %s96
      %s98 = sphi 0, %s96
      %s99 = sphi 0, %s98
      %s113 = sphi 0, %s99
      %s117 = sphi 0, %s117
      %s119 = sphi 0, %s117
      %s120 = sphi 0, %s119
      %s134 = sphi 0, %s120
      %s138 = sphi 0, %s138
      %s140 = sphi 0, %s138
      %s141 = sphi 0, %s140
      %s155 = sphi 0, %s141
      %s159 = sphi 0, %s159
      %s161 = sphi 0, %s159
      %s162 = sphi 0, %s161
      %s176 = sphi 0, %s162
      %s180 = sphi 0, %s180
      %s182 = sphi 0, %s180
      %s183 = sphi 0, %s182
      %s197 = sphi 0, %s183
      %s201 = sphi 0, %s201
      %s203 = sphi 0, %s201
      %s204 = sphi 0, %s203
      %s218 = sphi 0, %s204
      %s222 = sphi 0, %s222
      %s224 = sphi 0, %s222
      %s225 = sphi 0, %s224
      %s239 = sphi 0, %s225
      %s243 = sphi 0, %s243
      %s245 = sphi 0, %s243
      %s246 = sphi 0, %s245
      %s260 = sphi 0, %s246
      %s266 = sphi 0, %s268
      %s269 = sphi 0, %s266
      %s270 = sphi 0, %s269
      %s286 = sphi 0, %s270
    $region4: #{_lambda_.1} parent=1 // loop_header_branch
      %23 = sbr.rel (%p21) target = $region8
    $region5: #{_lambda_.1} parent=1 // loop_body
      %s25 = ssub.s32 %s20, 1
      %s26 = ssub.s32 %s20, 2
      %s27 = sadd.s32 %s20, 1
      %s28 = ssub.s32 %s20, %s27
      %p29 = scmp.eq.s32.totalorder %s28, 0
      %s31 = sadd.s32 %s30, 1
      %s32 = scalar_select %p29, %s30, %s31
      %p35 = pneg %p29
      %p36 = scmp.eq.s32.totalorder %s20, 1
      %p37 = por %p35, %p36
      %p38 = scmp.ne.s32.totalorder %s30, %s33
      %p39 = scmp.eq.s32.totalorder %s20, 0
      %p40 = por %p38, %p39
      %p41 = scmp.ne.s32.totalorder %s30, %s33
      %p42 = scmp.eq.s32.totalorder %s25, 1
      %p43 = por %p41, %p42
      %p44 = scmp.ne.s32.totalorder %s33, %s34
      %p45 = scmp.eq.s32.totalorder %s25, 0
      %p46 = por %p44, %p45
      %p47 = scmp.ne.s32.totalorder %s33, %s34
      %p48 = scmp.eq.s32.totalorder %s26, 1
      %p49 = por %p47, %p48
      %p51 = scmp.ne.s32.totalorder %s34, %s50
      %p52 = scmp.eq.s32.totalorder %s26, 0
      %p53 = por %p51, %p52
      %s55 = sadd.s32 %s54, 1
      %p58 = scmp.eq.s32.totalorder %s20, 1
      %p59 = scmp.ne.s32.totalorder %s54, %s56
      %p60 = scmp.eq.s32.totalorder %s20, 0
      %p61 = por %p59, %p60
      %p62 = scmp.ne.s32.totalorder %s54, %s56
      %p63 = scmp.eq.s32.totalorder %s25, 1
      %p64 = por %p62, %p63
      %p65 = scmp.ne.s32.totalorder %s56, %s57
      %p66 = scmp.eq.s32.totalorder %s25, 0
      %p67 = por %p65, %p66
      %p68 = scmp.ne.s32.totalorder %s56, %s57
      %p69 = scmp.eq.s32.totalorder %s26, 1
      %p70 = por %p68, %p69
      %p72 = scmp.ne.s32.totalorder %s57, %s71
      %p73 = scmp.eq.s32.totalorder %s26, 0
      %p74 = por %p72, %p73
      %s76 = sadd.s32 %s75, 1
      %p79 = scmp.eq.s32.totalorder %s20, 1
      %p80 = scmp.ne.s32.totalorder %s75, %s77
      %p81 = scmp.eq.s32.totalorder %s20, 0
      %p82 = por %p80, %p81
      %p83 = scmp.ne.s32.totalorder %s75, %s77
      %p84 = scmp.eq.s32.totalorder %s25, 1
      %p85 = por %p83, %p84
      %p86 = scmp.ne.s32.totalorder %s77, %s78
      %p87 = scmp.eq.s32.totalorder %s25, 0
      %p88 = por %p86, %p87
      %p89 = scmp.ne.s32.totalorder %s77, %s78
      %p90 = scmp.eq.s32.totalorder %s26, 1
      %p91 = por %p89, %p90
      %p93 = scmp.ne.s32.totalorder %s78, %s92
      %p94 = scmp.eq.s32.totalorder %s26, 0
      %p95 = por %p93, %p94
      %s97 = sadd.s32 %s96, 1
      %p100 = scmp.eq.s32.totalorder %s20, 1
      %p101 = scmp.ne.s32.totalorder %s96, %s98
      %p102 = scmp.eq.s32.totalorder %s20, 0
      %p103 = por %p101, %p102
      %p104 = scmp.ne.s32.totalorder %s96, %s98
      %p105 = scmp.eq.s32.totalorder %s25, 1
      %p106 = por %p104, %p105
      %p107 = scmp.ne.s32.totalorder %s98, %s99
      %p108 = scmp.eq.s32.totalorder %s25, 0
      %p109 = por %p107, %p108
      %p110 = scmp.ne.s32.totalorder %s98, %s99
      %p111 = scmp.eq.s32.totalorder %s26, 1
      %p112 = por %p110, %p111
      %p114 = scmp.ne.s32.totalorder %s99, %s113
      %p115 = scmp.eq.s32.totalorder %s26, 0
      %p116 = por %p114, %p115
      %s118 = sadd.s32 %s117, 1
      %p121 = scmp.eq.s32.totalorder %s20, 1
      %p122 = scmp.ne.s32.totalorder %s117, %s119
      %p123 = scmp.eq.s32.totalorder %s20, 0
      %p124 = por %p122, %p123
      %p125 = scmp.ne.s32.totalorder %s117, %s119
      %p126 = scmp.eq.s32.totalorder %s25, 1
      %p127 = por %p125, %p126
      %p128 = scmp.ne.s32.totalorder %s119, %s120
      %p129 = scmp.eq.s32.totalorder %s25, 0
      %p130 = por %p128, %p129
      %p131 = scmp.ne.s32.totalorder %s119, %s120
      %p132 = scmp.eq.s32.totalorder %s26, 1
      %p133 = por %p131, %p132
      %p135 = scmp.ne.s32.totalorder %s120, %s134
      %p136 = scmp.eq.s32.totalorder %s26, 0
      %p137 = por %p135, %p136
      %s139 = sadd.s32 %s138, 1
      %p142 = scmp.eq.s32.totalorder %s20, 1
      %p143 = scmp.ne.s32.totalorder %s138, %s140
      %p144 = scmp.eq.s32.totalorder %s20, 0
      %p145 = por %p143, %p144
      %p146 = scmp.ne.s32.totalorder %s138, %s140
      %p147 = scmp.eq.s32.totalorder %s25, 1
      %p148 = por %p146, %p147
      %p149 = scmp.ne.s32.totalorder %s140, %s141
      %p150 = scmp.eq.s32.totalorder %s25, 0
      %p151 = por %p149, %p150
      %p152 = scmp.ne.s32.totalorder %s140, %s141
      %p153 = scmp.eq.s32.totalorder %s26, 1
      %p154 = por %p152, %p153
      %p156 = scmp.ne.s32.totalorder %s141, %s155
      %p157 = scmp.eq.s32.totalorder %s26, 0
      %p158 = por %p156, %p157
      %s160 = sadd.s32 %s159, 1
      %p163 = scmp.eq.s32.totalorder %s20, 1
      %p164 = scmp.ne.s32.totalorder %s159, %s161
      %p165 = scmp.eq.s32.totalorder %s20, 0
      %p166 = por %p164, %p165
      %p167 = scmp.ne.s32.totalorder %s159, %s161
      %p168 = scmp.eq.s32.totalorder %s25, 1
      %p169 = por %p167, %p168
      %p170 = scmp.ne.s32.totalorder %s161, %s162
      %p171 = scmp.eq.s32.totalorder %s25, 0
      %p172 = por %p170, %p171
      %p173 = scmp.ne.s32.totalorder %s161, %s162
      %p174 = scmp.eq.s32.totalorder %s26, 1
      %p175 = por %p173, %p174
      %p177 = scmp.ne.s32.totalorder %s162, %s176
      %p178 = scmp.eq.s32.totalorder %s26, 0
      %p179 = por %p177, %p178
      %s181 = sadd.s32 %s180, 1
      %p184 = scmp.eq.s32.totalorder %s20, 1
      %p185 = scmp.ne.s32.totalorder %s180, %s182
      %p186 = scmp.eq.s32.totalorder %s20, 0
      %p187 = por %p185, %p186
      %p188 = scmp.ne.s32.totalorder %s180, %s182
      %p189 = scmp.eq.s32.totalorder %s25, 1
      %p190 = por %p188, %p189
      %p191 = scmp.ne.s32.totalorder %s182, %s183
      %p192 = scmp.eq.s32.totalorder %s25, 0
      %p193 = por %p191, %p192
      %p194 = scmp.ne.s32.totalorder %s182, %s183
      %p195 = scmp.eq.s32.totalorder %s26, 1
      %p196 = por %p194, %p195
      %p198 = scmp.ne.s32.totalorder %s183, %s197
      %p199 = scmp.eq.s32.totalorder %s26, 0
      %p200 = por %p198, %p199
      %s202 = sadd.s32 %s201, 1
      %p205 = scmp.eq.s32.totalorder %s20, 1
      %p206 = scmp.ne.s32.totalorder %s201, %s203
      %p207 = scmp.eq.s32.totalorder %s20, 0
      %p208 = por %p206, %p207
      %p209 = scmp.ne.s32.totalorder %s201, %s203
      %p210 = scmp.eq.s32.totalorder %s25, 1
      %p211 = por %p209, %p210
      %p212 = scmp.ne.s32.totalorder %s203, %s204
      %p213 = scmp.eq.s32.totalorder %s25, 0
      %p214 = por %p212, %p213
      %p215 = scmp.ne.s32.totalorder %s203, %s204
      %p216 = scmp.eq.s32.totalorder %s26, 1
      %p217 = por %p215, %p216
      %p219 = scmp.ne.s32.totalorder %s204, %s218
      %p220 = scmp.eq.s32.totalorder %s26, 0
      %p221 = por %p219, %p220
      %s223 = sadd.s32 %s222, 1
      %p226 = scmp.eq.s32.totalorder %s20, 1
      %p227 = scmp.ne.s32.totalorder %s222, %s224
      %p228 = scmp.eq.s32.totalorder %s20, 0
      %p229 = por %p227, %p228
      %p230 = scmp.ne.s32.totalorder %s222, %s224
      %p231 = scmp.eq.s32.totalorder %s25, 1
      %p232 = por %p230, %p231
      %p233 = scmp.ne.s32.totalorder %s224, %s225
      %p234 = scmp.eq.s32.totalorder %s25, 0
      %p235 = por %p233, %p234
      %p236 = scmp.ne.s32.totalorder %s224, %s225
      %p237 = scmp.eq.s32.totalorder %s26, 1
      %p238 = por %p236, %p237
      %p240 = scmp.ne.s32.totalorder %s225, %s239
      %p241 = scmp.eq.s32.totalorder %s26, 0
      %p242 = por %p240, %p241
      %s244 = sadd.s32 %s243, 1
      %p247 = scmp.eq.s32.totalorder %s20, 1
      %p248 = scmp.ne.s32.totalorder %s243, %s245
      %p249 = scmp.eq.s32.totalorder %s20, 0
      %p250 = por %p248, %p249
      %p251 = scmp.ne.s32.totalorder %s243, %s245
      %p252 = scmp.eq.s32.totalorder %s25, 1
      %p253 = por %p251, %p252
      %p254 = scmp.ne.s32.totalorder %s245, %s246
      %p255 = scmp.eq.s32.totalorder %s25, 0
      %p256 = por %p254, %p255
      %p257 = scmp.ne.s32.totalorder %s245, %s246
      %p258 = scmp.eq.s32.totalorder %s26, 1
      %p259 = por %p257, %p258
      %p261 = scmp.ne.s32.totalorder %s246, %s260
      %p262 = scmp.eq.s32.totalorder %s26, 0
      %p263 = por %p261, %p262
      %s264 = ssub.s32 %s20, %s27
      %p265 = scmp.eq.s32.totalorder %s264, 0
      %s267 = sadd.s32 %s266, 1
      %s268 = scalar_select %p265, %s266, %s267
      %p271 = pneg %p265
      %p272 = scmp.eq.s32.totalorder %s20, 1
      %p273 = por %p271, %p272
      %p274 = scmp.ne.s32.totalorder %s266, %s269
      %p275 = scmp.eq.s32.totalorder %s20, 0
      %p276 = por %p274, %p275
      %p277 = scmp.ne.s32.totalorder %s266, %s269
      %p278 = scmp.eq.s32.totalorder %s25, 1
      %p279 = por %p277, %p278
      %p280 = scmp.ne.s32.totalorder %s269, %s270
      %p281 = scmp.eq.s32.totalorder %s25, 0
      %p282 = por %p280, %p281
      %p283 = scmp.ne.s32.totalorder %s269, %s270
      %p284 = scmp.eq.s32.totalorder %s26, 1
      %p285 = por %p283, %p284
      %p287 = scmp.ne.s32.totalorder %s270, %s286
      %p288 = scmp.eq.s32.totalorder %s26, 0
      %p289 = por %p287, %p288
      %p290 = scmp.le.s32.totalorder 1, %s20
      %p291 = scmp.lt.s32.totalorder %s20, 3
      %p292 = pnand %p290, %p291
      %p293 = pneg %p292
      // Predicated region
      $region9: #{_lambda_.1} parent=5 // pred_check
        _
      $region10: #{_lambda_.1} parent=5 // pred_check_branch
        %295 = sbr.rel (%p292) target = $region12
      $region11: #{_lambda_.1} parent=5 // pred_region
        %s296 = ssub.s32 %s20, 1
        // Predicated region
        $region13: #{_lambda_.1} parent=11 // pred_check
          %p297 = pneg %p67
        $region14: #{_lambda_.1} parent=11 // pred_check_branch
          %299 = sbr.rel (%p297) target = $region16
        $region15: #{_lambda_.1} parent=11 // pred_region
          _
        $region16: #{_lambda_.1} parent=11 // pred_fallthru
          _
        // Predicated region
        $region17: #{_lambda_.1} parent=11 // pred_check
          %p300 = pneg %p88
        $region18: #{_lambda_.1} parent=11 // pred_check_branch
          %302 = sbr.rel (%p300) target = $region20
        $region19: #{_lambda_.1} parent=11 // pred_region
          _
        $region20: #{_lambda_.1} parent=11 // pred_fallthru
          _
        // Predicated region
        $region21: #{_lambda_.1} parent=11 // pred_check
          %p303 = pneg %p109
        $region22: #{_lambda_.1} parent=11 // pred_check_branch
          %305 = sbr.rel (%p303) target = $region24
        $region23: #{_lambda_.1} parent=11 // pred_region
          _
        $region24: #{_lambda_.1} parent=11 // pred_fallthru
          _
        // Predicated region
        $region25: #{_lambda_.1} parent=11 // pred_check
          %p306 = pneg %p130
        $region26: #{_lambda_.1} parent=11 // pred_check_branch
          %308 = sbr.rel (%p306) target = $region28
        $region27: #{_lambda_.1} parent=11 // pred_region
          _
        $region28: #{_lambda_.1} parent=11 // pred_fallthru
          _
        // Predicated region
        $region29: #{_lambda_.1} parent=11 // pred_check
          %p309 = pneg %p151
        $region30: #{_lambda_.1} parent=11 // pred_check_branch
          %311 = sbr.rel (%p309) target = $region32
        $region31: #{_lambda_.1} parent=11 // pred_region
          _
        $region32: #{_lambda_.1} parent=11 // pred_fallthru
          _
        // Predicated region
        $region33: #{_lambda_.1} parent=11 // pred_check
          %p312 = pneg %p172
        $region34: #{_lambda_.1} parent=11 // pred_check_branch
          %314 = sbr.rel (%p312) target = $region36
        $region35: #{_lambda_.1} parent=11 // pred_region
          _
        $region36: #{_lambda_.1} parent=11 // pred_fallthru
          _
        // Predicated region
        $region37: #{_lambda_.1} parent=11 // pred_check
          %p315 = pneg %p193
        $region38: #{_lambda_.1} parent=11 // pred_check_branch
          %317 = sbr.rel (%p315) target = $region40
        $region39: #{_lambda_.1} parent=11 // pred_region
          _
        $region40: #{_lambda_.1} parent=11 // pred_fallthru
          _
        // Predicated region
        $region41: #{_lambda_.1} parent=11 // pred_check
          %p318 = pneg %p214
        $region42: #{_lambda_.1} parent=11 // pred_check_branch
          %320 = sbr.rel (%p318) target = $region44
        $region43: #{_lambda_.1} parent=11 // pred_region
          _
        $region44: #{_lambda_.1} parent=11 // pred_fallthru
          _
        // Predicated region
        $region45: #{_lambda_.1} parent=11 // pred_check
          %p321 = pneg %p235
        $region46: #{_lambda_.1} parent=11 // pred_check_branch
          %323 = sbr.rel (%p321) target = $region48
        $region47: #{_lambda_.1} parent=11 // pred_region
          _
        $region48: #{_lambda_.1} parent=11 // pred_fallthru
          _
        // Predicated region
        $region49: #{_lambda_.1} parent=11 // pred_check
          %p324 = pneg %p256
        $region50: #{_lambda_.1} parent=11 // pred_check_branch
          %326 = sbr.rel (%p324) target = $region52
        $region51: #{_lambda_.1} parent=11 // pred_region
          _
        $region52: #{_lambda_.1} parent=11 // pred_fallthru
          _
      $region12: #{_lambda_.1} parent=5 // pred_fallthru
        _
      %p327 = scmp.lt.s32.totalorder %s20, 2
      // Predicated region
      $region53: #{_lambda_.1} parent=5 // pred_check
        %p328 = pneg %p327
      $region54: #{_lambda_.1} parent=5 // pred_check_branch
        %330 = sbr.rel (%p328) target = $region56
      $region55: #{_lambda_.1} parent=5 // pred_region
        // Predicated region
        $region57: #{_lambda_.1} parent=55 // pred_check
          %p331 = pneg %p40
        $region58: #{_lambda_.1} parent=55 // pred_check_branch
          %333 = sbr.rel (%p331) target = $region60
        $region59: #{_lambda_.1} parent=55 // pred_region
          %s334 = smul.u32 2, %s20
          %p335 = scmp.lt.s32.totalorder %s334, 3
          %s336 = scalar_select %p335, %s334, 3
          %s337 = smul.addr %s336, 8
          %s338 = smul.addr %s337, 8
          %s339 = scalar_lea.vmem %s0, %s338
          %s340 = smul.u32 2, %s20
        $region60: #{_lambda_.1} parent=55 // pred_fallthru
          _
      $region56: #{_lambda_.1} parent=5 // pred_fallthru
        _
      %p341 = scmp.le.s32.totalorder 1, %s20
      %p342 = scmp.lt.s32.totalorder %s20, 3
      %p343 = pnand %p341, %p342
      %p344 = pneg %p343
      // Predicated region
      $region61: #{_lambda_.1} parent=5 // pred_check
        _
      $region62: #{_lambda_.1} parent=5 // pred_check_branch
        %346 = sbr.rel (%p343) target = $region64
      $region63: #{_lambda_.1} parent=5 // pred_region
        %s347 = ssub.s32 %s20, 1
        %s348 = smul.u32 2, %s25
        %p349 = scmp.lt.s32.totalorder %s348, 3
        %s350 = scalar_select %p349, %s348, 3
        %s351 = smul.addr %s350, 8
        %s352 = smul.addr %s351, 8
        %s353 = scalar_lea.vmem %s0, %s352
        %p354 = pneg %p46
        %p355 = pneg %p43
        %p356 = pneg %p67
        %p357 = pneg %p64
        %p358 = pneg %p88
        %p359 = pneg %p85
        %p360 = pneg %p109
        %p361 = pneg %p106
        %p362 = pneg %p130
        %p363 = pneg %p127
        %p364 = pneg %p151
        %p365 = pneg %p148
        %p366 = pneg %p172
        %p367 = pneg %p169
        %p368 = pneg %p193
        %p369 = pneg %p190
        %p370 = pneg %p214
        %p371 = pneg %p211
        %p372 = pneg %p235
        %p373 = pneg %p232
        %p374 = pneg %p256
        %p375 = pneg %p253
        %p376 = pneg %p282
        %p377 = pneg %p279
        %s378 = sand.u32 %s269, 1
        %s379 = scalar_lea.sflag [#allocation3], %s378
        %s380 = sand.u32 %s269, 1
        %s381 = smul.addr %s380, 2
        %s382 = scalar_lea.vmem [#allocation2], %s381
        %s383 = smul.u32 2, %s25
        %p384 = scmp.lt.s32.totalorder %s383, 3
        %s385 = scalar_select %p384, %s383, 3
        %s386 = smul.addr %s385, 8
        %s387 = smul.addr %s386, 8
        %s388 = scalar_lea.vmem %s0, %s387
        %s389 = smul.u32 2, %s25
        %v391 = vld [vmem:[%s388] sm:$0xff]
        %v392 = vld [vmem:[%s388 + $0x8] sm:$0xff]
        %v393 = vld [vmem:[%s388 + $0x10] sm:$0xff]
        %v394 = vld [vmem:[%s388 + $0x18] sm:$0xff]
        %v395 = vld [vmem:[%s388 + $0x20] sm:$0xff]
        %v396 = vld [vmem:[%s388 + $0x28] sm:$0xff]
        %v397 = vld [vmem:[%s388 + $0x30] sm:$0xff]
        %v398 = vld [vmem:[%s388 + $0x38] sm:$0xff]
        %v399 = vld [vmem:[%s388 + $0x40] sm:$0xff]
        %v400 = vld [vmem:[%s388 + $0x48] sm:$0xff]
        %v401 = vld [vmem:[%s388 + $0x50] sm:$0xff]
        %v402 = vld [vmem:[%s388 + $0x58] sm:$0xff]
        %v403 = vld [vmem:[%s388 + $0x60] sm:$0xff]
        %v404 = vld [vmem:[%s388 + $0x68] sm:$0xff]
        %v405 = vld [vmem:[%s388 + $0x70] sm:$0xff]
        %v406 = vld [vmem:[%s388 + $0x78] sm:$0xff]
        %v407 = vmul.f32 %v391, 8.0
        %v408 = vmul.f32 %v392, 8.0
        %v409 = vmul.f32 %v393, 8.0
        %v410 = vmul.f32 %v394, 8.0
        %v411 = vmul.f32 %v395, 8.0
        %v412 = vmul.f32 %v396, 8.0
        %v413 = vmul.f32 %v397, 8.0
        %v414 = vmul.f32 %v398, 8.0
        %v415 = vmul.f32 %v399, 8.0
        %v416 = vmul.f32 %v400, 8.0
        %v417 = vmul.f32 %v401, 8.0
        %v418 = vmul.f32 %v402, 8.0
        %v419 = vmul.f32 %v403, 8.0
        %v420 = vmul.f32 %v404, 8.0
        %v421 = vmul.f32 %v405, 8.0
        %v422 = vmul.f32 %v406, 8.0
        %v423 = vround.ne.pseudo %v407
        %v424 = vround.ne.pseudo %v408
        %v425 = vround.ne.pseudo %v409
        %v426 = vround.ne.pseudo %v410
        %v427 = vround.ne.pseudo %v411
        %v428 = vround.ne.pseudo %v412
        %v429 = vround.ne.pseudo %v413
        %v430 = vround.ne.pseudo %v414
        %v431 = vround.ne.pseudo %v415
        %v432 = vround.ne.pseudo %v416
        %v433 = vround.ne.pseudo %v417
        %v434 = vround.ne.pseudo %v418
        %v435 = vround.ne.pseudo %v419
        %v436 = vround.ne.pseudo %v420
        %v437 = vround.ne.pseudo %v421
        %v438 = vround.ne.pseudo %v422
        %v439 = vmax.f32 %v423, -127.0
        %v440 = vmax.f32 %v424, -127.0
        %v441 = vmax.f32 %v425, -127.0
        %v442 = vmax.f32 %v426, -127.0
        %v443 = vmax.f32 %v427, -127.0
        %v444 = vmax.f32 %v428, -127.0
        %v445 = vmax.f32 %v429, -127.0
        %v446 = vmax.f32 %v430, -127.0
        %v447 = vmax.f32 %v431, -127.0
        %v448 = vmax.f32 %v432, -127.0
        %v449 = vmax.f32 %v433, -127.0
        %v450 = vmax.f32 %v434, -127.0
        %v451 = vmax.f32 %v435, -127.0
        %v452 = vmax.f32 %v436, -127.0
        %v453 = vmax.f32 %v437, -127.0
        %v454 = vmax.f32 %v438, -127.0
        %v455 = vmin.f32 %v439, 127.0
        %v456 = vmin.f32 %v440, 127.0
        %v457 = vmin.f32 %v441, 127.0
        %v458 = vmin.f32 %v442, 127.0
        %v459 = vmin.f32 %v443, 127.0
        %v460 = vmin.f32 %v444, 127.0
        %v461 = vmin.f32 %v445, 127.0
        %v462 = vmin.f32 %v446, 127.0
        %v463 = vmin.f32 %v447, 127.0
        %v464 = vmin.f32 %v448, 127.0
        %v465 = vmin.f32 %v449, 127.0
        %v466 = vmin.f32 %v450, 127.0
        %v467 = vmin.f32 %v451, 127.0
        %v468 = vmin.f32 %v452, 127.0
        %v469 = vmin.f32 %v453, 127.0
        %v470 = vmin.f32 %v454, 127.0
        %v471 = vmul.f32 %v455, 0.125
        %v472 = vmul.f32 %v456, 0.125
        %v473 = vmul.f32 %v457, 0.125
        %v474 = vmul.f32 %v458, 0.125
        %v475 = vmul.f32 %v459, 0.125
        %v476 = vmul.f32 %v460, 0.125
        %v477 = vmul.f32 %v461, 0.125
        %v478 = vmul.f32 %v462, 0.125
        %v479 = vmul.f32 %v463, 0.125
        %v480 = vmul.f32 %v464, 0.125
        %v481 = vmul.f32 %v465, 0.125
        %v482 = vmul.f32 %v466, 0.125
        %v483 = vmul.f32 %v467, 0.125
        %v484 = vmul.f32 %v468, 0.125
        %v485 = vmul.f32 %v469, 0.125
        %v486 = vmul.f32 %v470, 0.125
        %v487 = vpack.c.bf16 %v473, %v471
        %v488 = vpack.c.bf16 %v474, %v472
        %v489 = vpack.c.bf16 %v477, %v475
        %v490 = vpack.c.bf16 %v478, %v476
        %v491 = vpack.c.bf16 %v481, %v479
        %v492 = vpack.c.bf16 %v482, %v480
        %v493 = vpack.c.bf16 %v485, %v483
        %v494 = vpack.c.bf16 %v486, %v484
        %v495 = vld [vmem:[%s1] sm:$0xff]
        %v496 = vld [vmem:[%s1 + $0x8] sm:$0xff]
        %v497 = vld [vmem:[%s1 + $0x10] sm:$0xff]
        %v498 = vld [vmem:[%s1 + $0x18] sm:$0xff]
        %v499 = vld [vmem:[%s1 + $0x20] sm:$0xff]
        %v500 = vld [vmem:[%s1 + $0x28] sm:$0xff]
        %v501 = vld [vmem:[%s1 + $0x30] sm:$0xff]
        %v502 = vld [vmem:[%s1 + $0x38] sm:$0xff]
        %v503 = vld [vmem:[%s1 + $0x40] sm:$0xff]
        %v504 = vld [vmem:[%s1 + $0x48] sm:$0xff]
        %v505 = vld [vmem:[%s1 + $0x50] sm:$0xff]
        %v506 = vld [vmem:[%s1 + $0x58] sm:$0xff]
        %v507 = vld [vmem:[%s1 + $0x60] sm:$0xff]
        %v508 = vld [vmem:[%s1 + $0x68] sm:$0xff]
        %v509 = vld [vmem:[%s1 + $0x70] sm:$0xff]
        %v510 = vld [vmem:[%s1 + $0x78] sm:$0xff]
        %v511 = vld [vmem:[%s1 + $0x80] sm:$0xff]
        %v512 = vld [vmem:[%s1 + $0x88] sm:$0xff]
        %v513 = vld [vmem:[%s1 + $0x90] sm:$0xff]
        %v514 = vld [vmem:[%s1 + $0x98] sm:$0xff]
        %v515 = vld [vmem:[%s1 + $0xa0] sm:$0xff]
        %v516 = vld [vmem:[%s1 + $0xa8] sm:$0xff]
        %v517 = vld [vmem:[%s1 + $0xb0] sm:$0xff]
        %v518 = vld [vmem:[%s1 + $0xb8] sm:$0xff]
        %v519 = vld [vmem:[%s1 + $0xc0] sm:$0xff]
        %v520 = vld [vmem:[%s1 + $0xc8] sm:$0xff]
        %v521 = vld [vmem:[%s1 + $0xd0] sm:$0xff]
        %v522 = vld [vmem:[%s1 + $0xd8] sm:$0xff]
        %v523 = vld [vmem:[%s1 + $0xe0] sm:$0xff]
        %v524 = vld [vmem:[%s1 + $0xe8] sm:$0xff]
        %v525 = vld [vmem:[%s1 + $0xf0] sm:$0xff]
        %v526 = vld [vmem:[%s1 + $0xf8] sm:$0xff]
        %v559 = vunpack.c.l.b16 %v495
        %v560 = vunpack.c.h.b16 %v495
        %v561 = vunpack.c.l.b16 %v496
        %v562 = vunpack.c.h.b16 %v496
        %v563 = vunpack.c.l.b16 %v497
        %v564 = vunpack.c.h.b16 %v497
        %v565 = vunpack.c.l.b16 %v498
        %v566 = vunpack.c.h.b16 %v498
        %v567 = vunpack.c.l.b16 %v499
        %v568 = vunpack.c.h.b16 %v499
        %v569 = vunpack.c.l.b16 %v500
        %v570 = vunpack.c.h.b16 %v500
        %v571 = vunpack.c.l.b16 %v501
        %v572 = vunpack.c.h.b16 %v501
        %v573 = vunpack.c.l.b16 %v502
        %v574 = vunpack.c.h.b16 %v502
        %v575 = vunpack.c.l.b16 %v503
        %v576 = vunpack.c.h.b16 %v503
        %v577 = vunpack.c.l.b16 %v504
        %v578 = vunpack.c.h.b16 %v504
        %v579 = vunpack.c.l.b16 %v505
        %v580 = vunpack.c.h.b16 %v505
        %v581 = vunpack.c.l.b16 %v506
        %v582 = vunpack.c.h.b16 %v506
        %v583 = vunpack.c.l.b16 %v507
        %v584 = vunpack.c.h.b16 %v507
        %v585 = vunpack.c.l.b16 %v508
        %v586 = vunpack.c.h.b16 %v508
        %v587 = vunpack.c.l.b16 %v509
        %v588 = vunpack.c.h.b16 %v509
        %v589 = vunpack.c.l.b16 %v510
        %v590 = vunpack.c.h.b16 %v510
        %v591 = vunpack.c.l.b16 %v511
        %v592 = vunpack.c.h.b16 %v511
        %v593 = vunpack.c.l.b16 %v512
        %v594 = vunpack.c.h.b16 %v512
        %v595 = vunpack.c.l.b16 %v513
        %v596 = vunpack.c.h.b16 %v513
        %v597 = vunpack.c.l.b16 %v514
        %v598 = vunpack.c.h.b16 %v514
        %v599 = vunpack.c.l.b16 %v515
        %v600 = vunpack.c.h.b16 %v515
        %v601 = vunpack.c.l.b16 %v516
        %v602 = vunpack.c.h.b16 %v516
        %v603 = vunpack.c.l.b16 %v517
        %v604 = vunpack.c.h.b16 %v517
        %v605 = vunpack.c.l.b16 %v518
        %v606 = vunpack.c.h.b16 %v518
        %v607 = vunpack.c.l.b16 %v519
        %v608 = vunpack.c.h.b16 %v519
        %v609 = vunpack.c.l.b16 %v520
        %v610 = vunpack.c.h.b16 %v520
        %v611 = vunpack.c.l.b16 %v521
        %v612 = vunpack.c.h.b16 %v521
        %v613 = vunpack.c.l.b16 %v522
        %v614 = vunpack.c.h.b16 %v522
        %v615 = vunpack.c.l.b16 %v523
        %v616 = vunpack.c.h.b16 %v523
        %v617 = vunpack.c.l.b16 %v524
        %v618 = vunpack.c.h.b16 %v524
        %v619 = vunpack.c.l.b16 %v525
        %v620 = vunpack.c.h.b16 %v525
        %v621 = vunpack.c.l.b16 %v526
        %v622 = vunpack.c.h.b16 %v526
        %v623 = vpack.c.b16 %v561, %v559
        %v624 = vpack.c.b16 %v562, %v560
        %v625 = vpack.c.b16 %v565, %v563
        %v626 = vpack.c.b16 %v566, %v564
        %v627 = vpack.c.b16 %v569, %v567
        %v628 = vpack.c.b16 %v570, %v568
        %v629 = vpack.c.b16 %v573, %v571
        %v630 = vpack.c.b16 %v574, %v572
        %v631 = vpack.c.b16 %v577, %v575
        %v632 = vpack.c.b16 %v578, %v576
        %v633 = vpack.c.b16 %v581, %v579
        %v634 = vpack.c.b16 %v582, %v580
        %v635 = vpack.c.b16 %v585, %v583
        %v636 = vpack.c.b16 %v586, %v584
        %v637 = vpack.c.b16 %v589, %v587
        %v638 = vpack.c.b16 %v590, %v588
        %v639 = vpack.c.b16 %v593, %v591
        %v640 = vpack.c.b16 %v594, %v592
        %v641 = vpack.c.b16 %v597, %v595
        %v642 = vpack.c.b16 %v598, %v596
        %v643 = vpack.c.b16 %v601, %v599
        %v644 = vpack.c.b16 %v602, %v600
        %v645 = vpack.c.b16 %v605, %v603
        %v646 = vpack.c.b16 %v606, %v604
        %v647 = vpack.c.b16 %v609, %v607
        %v648 = vpack.c.b16 %v610, %v608
        %v649 = vpack.c.b16 %v613, %v611
        %v650 = vpack.c.b16 %v614, %v612
        %v651 = vpack.c.b16 %v617, %v615
        %v652 = vpack.c.b16 %v618, %v616
        %v653 = vpack.c.b16 %v621, %v619
        %v654 = vpack.c.b16 %v622, %v620
        %687 = vmatprep.subr.bf16.mxu0 %v638
        %688 = vmatpush1.bf16.msra.mxu0 %v637
        %689 = vmatprep.subr.bf16.mxu0 %v636
        %690 = vmatpush1.bf16.msra.mxu0 %v635
        %691 = vmatprep.subr.bf16.mxu0 %v634
        %692 = vmatpush1.bf16.msra.mxu0 %v633
        %693 = vmatprep.subr.bf16.mxu0 %v632
        %694 = vmatpush1.bf16.msra.mxu0 %v631
        %695 = vmatprep.subr.bf16.mxu0 %v630
        %696 = vmatpush1.bf16.msra.mxu0 %v629
        %697 = vmatprep.subr.bf16.mxu0 %v628
        %698 = vmatpush1.bf16.msra.mxu0 %v627
        %699 = vmatprep.subr.bf16.mxu0 %v626
        %700 = vmatpush1.bf16.msra.mxu0 %v625
        %701 = vmatprep.subr.bf16.mxu0 %v624
        %702 = vmatpush1.bf16.msra.mxu0 %v623
        %703 = vmatprep.subr.bf16.mxu0 %v654
        %704 = vmatpush2.bf16.msra.mxu0 %v653
        %705 = vmatprep.subr.bf16.mxu0 %v652
        %706 = vmatpush2.bf16.msra.mxu0 %v651
        %707 = vmatprep.subr.bf16.mxu0 %v650
        %708 = vmatpush2.bf16.msra.mxu0 %v649
        %709 = vmatprep.subr.bf16.mxu0 %v648
        %710 = vmatpush2.bf16.msra.mxu0 %v647
        %711 = vmatprep.subr.bf16.mxu0 %v646
        %712 = vmatpush2.bf16.msra.mxu0 %v645
        %713 = vmatprep.subr.bf16.mxu0 %v644
        %714 = vmatpush2.bf16.msra.mxu0 %v643
        %715 = vmatprep.subr.bf16.mxu0 %v642
        %716 = vmatpush2.bf16.msra.mxu0 %v641
        %717 = vmatprep.subr.bf16.mxu0 %v640
        %718 = vmatpush2.bf16.msra.mxu0 %v639
        %719 = vmatprep.mubr.bf16.mxu0 %v488
        %720 = vmatmul.mubr.bf16.gmra.mxu0 %v487
        %v721 = vpop.f32.mrf.mxu0
        %v722 = vadd.f32 0.0, %v721
        %v723 = vpop.f32.mrf.mxu0
        %v724 = vadd.f32 0.0, %v723
        %v725 = vpop.f32.mrf.mxu0
        %v726 = vadd.f32 0.0, %v725
        %v727 = vpop.f32.mrf.mxu0
        %v728 = vadd.f32 0.0, %v727
        %729 = vmatprep.mubr.bf16.mxu0 %v490
        %730 = vmatmul.mubr.bf16.gmra.mxu0 %v489
        %v731 = vpop.f32.mrf.mxu0
        %v732 = vadd.f32 0.0, %v731
        %v733 = vpop.f32.mrf.mxu0
        %v734 = vadd.f32 0.0, %v733
        %v735 = vpop.f32.mrf.mxu0
        %v736 = vadd.f32 0.0, %v735
        %v737 = vpop.f32.mrf.mxu0
        %v738 = vadd.f32 0.0, %v737
        %739 = vmatprep.mubr.bf16.mxu0 %v492
        %740 = vmatmul.mubr.bf16.gmra.mxu0 %v491
        %v741 = vpop.f32.mrf.mxu0
        %v742 = vadd.f32 0.0, %v741
        %v743 = vpop.f32.mrf.mxu0
        %v744 = vadd.f32 0.0, %v743
        %v745 = vpop.f32.mrf.mxu0
        %v746 = vadd.f32 0.0, %v745
        %v747 = vpop.f32.mrf.mxu0
        %v748 = vadd.f32 0.0, %v747
        %749 = vmatprep.mubr.bf16.mxu0 %v494
        %750 = vmatmul.mubr.bf16.gmra.mxu0 %v493
        %v751 = vpop.f32.mrf.mxu0
        %v752 = vadd.f32 0.0, %v751
        %v753 = vpop.f32.mrf.mxu0
        %v754 = vadd.f32 0.0, %v753
        %v755 = vpop.f32.mrf.mxu0
        %v756 = vadd.f32 0.0, %v755
        %v757 = vpop.f32.mrf.mxu0
        %v758 = vadd.f32 0.0, %v757
        %759 = vdwg.mxu0
        %s760 = scalar_lea.vmem %s1, 256
        %v761 = vld [vmem:[%s760] sm:$0xff]
        %v762 = vld [vmem:[%s760 + $0x8] sm:$0xff]
        %v763 = vld [vmem:[%s760 + $0x10] sm:$0xff]
        %v764 = vld [vmem:[%s760 + $0x18] sm:$0xff]
        %v765 = vld [vmem:[%s760 + $0x20] sm:$0xff]
        %v766 = vld [vmem:[%s760 + $0x28] sm:$0xff]
        %v767 = vld [vmem:[%s760 + $0x30] sm:$0xff]
        %v768 = vld [vmem:[%s760 + $0x38] sm:$0xff]
        %v769 = vld [vmem:[%s760 + $0x40] sm:$0xff]
        %v770 = vld [vmem:[%s760 + $0x48] sm:$0xff]
        %v771 = vld [vmem:[%s760 + $0x50] sm:$0xff]
        %v772 = vld [vmem:[%s760 + $0x58] sm:$0xff]
        %v773 = vld [vmem:[%s760 + $0x60] sm:$0xff]
        %v774 = vld [vmem:[%s760 + $0x68] sm:$0xff]
        %v775 = vld [vmem:[%s760 + $0x70] sm:$0xff]
        %v776 = vld [vmem:[%s760 + $0x78] sm:$0xff]
        %v777 = vld [vmem:[%s760 + $0x80] sm:$0xff]
        %v778 = vld [vmem:[%s760 + $0x88] sm:$0xff]
        %v779 = vld [vmem:[%s760 + $0x90] sm:$0xff]
        %v780 = vld [vmem:[%s760 + $0x98] sm:$0xff]
        %v781 = vld [vmem:[%s760 + $0xa0] sm:$0xff]
        %v782 = vld [vmem:[%s760 + $0xa8] sm:$0xff]
        %v783 = vld [vmem:[%s760 + $0xb0] sm:$0xff]
        %v784 = vld [vmem:[%s760 + $0xb8] sm:$0xff]
        %v785 = vld [vmem:[%s760 + $0xc0] sm:$0xff]
        %v786 = vld [vmem:[%s760 + $0xc8] sm:$0xff]
        %v787 = vld [vmem:[%s760 + $0xd0] sm:$0xff]
        %v788 = vld [vmem:[%s760 + $0xd8] sm:$0xff]
        %v789 = vld [vmem:[%s760 + $0xe0] sm:$0xff]
        %v790 = vld [vmem:[%s760 + $0xe8] sm:$0xff]
        %v791 = vld [vmem:[%s760 + $0xf0] sm:$0xff]
        %v792 = vld [vmem:[%s760 + $0xf8] sm:$0xff]
        %v825 = vunpack.c.l.b16 %v761
        %v826 = vunpack.c.h.b16 %v761
        %v827 = vunpack.c.l.b16 %v762
        %v828 = vunpack.c.h.b16 %v762
        %v829 = vunpack.c.l.b16 %v763
        %v830 = vunpack.c.h.b16 %v763
        %v831 = vunpack.c.l.b16 %v764
        %v832 = vunpack.c.h.b16 %v764
        %v833 = vunpack.c.l.b16 %v765
        %v834 = vunpack.c.h.b16 %v765
        %v835 = vunpack.c.l.b16 %v766
        %v836 = vunpack.c.h.b16 %v766
        %v837 = vunpack.c.l.b16 %v767
        %v838 = vunpack.c.h.b16 %v767
        %v839 = vunpack.c.l.b16 %v768
        %v840 = vunpack.c.h.b16 %v768
        %v841 = vunpack.c.l.b16 %v769
        %v842 = vunpack.c.h.b16 %v769
        %v843 = vunpack.c.l.b16 %v770
        %v844 = vunpack.c.h.b16 %v770
        %v845 = vunpack.c.l.b16 %v771
        %v846 = vunpack.c.h.b16 %v771
        %v847 = vunpack.c.l.b16 %v772
        %v848 = vunpack.c.h.b16 %v772
        %v849 = vunpack.c.l.b16 %v773
        %v850 = vunpack.c.h.b16 %v773
        %v851 = vunpack.c.l.b16 %v774
        %v852 = vunpack.c.h.b16 %v774
        %v853 = vunpack.c.l.b16 %v775
        %v854 = vunpack.c.h.b16 %v775
        %v855 = vunpack.c.l.b16 %v776
        %v856 = vunpack.c.h.b16 %v776
        %v857 = vunpack.c.l.b16 %v777
        %v858 = vunpack.c.h.b16 %v777
        %v859 = vunpack.c.l.b16 %v778
        %v860 = vunpack.c.h.b16 %v778
        %v861 = vunpack.c.l.b16 %v779
        %v862 = vunpack.c.h.b16 %v779
        %v863 = vunpack.c.l.b16 %v780
        %v864 = vunpack.c.h.b16 %v780
        %v865 = vunpack.c.l.b16 %v781
        %v866 = vunpack.c.h.b16 %v781
        %v867 = vunpack.c.l.b16 %v782
        %v868 = vunpack.c.h.b16 %v782
        %v869 = vunpack.c.l.b16 %v783
        %v870 = vunpack.c.h.b16 %v783
        %v871 = vunpack.c.l.b16 %v784
        %v872 = vunpack.c.h.b16 %v784
        %v873 = vunpack.c.l.b16 %v785
        %v874 = vunpack.c.h.b16 %v785
        %v875 = vunpack.c.l.b16 %v786
        %v876 = vunpack.c.h.b16 %v786
        %v877 = vunpack.c.l.b16 %v787
        %v878 = vunpack.c.h.b16 %v787
        %v879 = vunpack.c.l.b16 %v788
        %v880 = vunpack.c.h.b16 %v788
        %v881 = vunpack.c.l.b16 %v789
        %v882 = vunpack.c.h.b16 %v789
        %v883 = vunpack.c.l.b16 %v790
        %v884 = vunpack.c.h.b16 %v790
        %v885 = vunpack.c.l.b16 %v791
        %v886 = vunpack.c.h.b16 %v791
        %v887 = vunpack.c.l.b16 %v792
        %v888 = vunpack.c.h.b16 %v792
        %v889 = vpack.c.b16 %v827, %v825
        %v890 = vpack.c.b16 %v828, %v826
        %v891 = vpack.c.b16 %v831, %v829
        %v892 = vpack.c.b16 %v832, %v830
        %v893 = vpack.c.b16 %v835, %v833
        %v894 = vpack.c.b16 %v836, %v834
        %v895 = vpack.c.b16 %v839, %v837
        %v896 = vpack.c.b16 %v840, %v838
        %v897 = vpack.c.b16 %v843, %v841
        %v898 = vpack.c.b16 %v844, %v842
        %v899 = vpack.c.b16 %v847, %v845
        %v900 = vpack.c.b16 %v848, %v846
        %v901 = vpack.c.b16 %v851, %v849
        %v902 = vpack.c.b16 %v852, %v850
        %v903 = vpack.c.b16 %v855, %v853
        %v904 = vpack.c.b16 %v856, %v854
        %v905 = vpack.c.b16 %v859, %v857
        %v906 = vpack.c.b16 %v860, %v858
        %v907 = vpack.c.b16 %v863, %v861
        %v908 = vpack.c.b16 %v864, %v862
        %v909 = vpack.c.b16 %v867, %v865
        %v910 = vpack.c.b16 %v868, %v866
        %v911 = vpack.c.b16 %v871, %v869
        %v912 = vpack.c.b16 %v872, %v870
        %v913 = vpack.c.b16 %v875, %v873
        %v914 = vpack.c.b16 %v876, %v874
        %v915 = vpack.c.b16 %v879, %v877
        %v916 = vpack.c.b16 %v880, %v878
        %v917 = vpack.c.b16 %v883, %v881
        %v918 = vpack.c.b16 %v884, %v882
        %v919 = vpack.c.b16 %v887, %v885
        %v920 = vpack.c.b16 %v888, %v886
        %953 = vmatprep.subr.bf16.mxu0 %v904
        %954 = vmatpush1.bf16.msra.mxu0 %v903
        %955 = vmatprep.subr.bf16.mxu0 %v902
        %956 = vmatpush1.bf16.msra.mxu0 %v901
        %957 = vmatprep.subr.bf16.mxu0 %v900
        %958 = vmatpush1.bf16.msra.mxu0 %v899
        %959 = vmatprep.subr.bf16.mxu0 %v898
        %960 = vmatpush1.bf16.msra.mxu0 %v897
        %961 = vmatprep.subr.bf16.mxu0 %v896
        %962 = vmatpush1.bf16.msra.mxu0 %v895
        %963 = vmatprep.subr.bf16.mxu0 %v894
        %964 = vmatpush1.bf16.msra.mxu0 %v893
        %965 = vmatprep.subr.bf16.mxu0 %v892
        %966 = vmatpush1.bf16.msra.mxu0 %v891
        %967 = vmatprep.subr.bf16.mxu0 %v890
        %968 = vmatpush1.bf16.msra.mxu0 %v889
        %969 = vmatprep.subr.bf16.mxu0 %v920
        %970 = vmatpush2.bf16.msra.mxu0 %v919
        %971 = vmatprep.subr.bf16.mxu0 %v918
        %972 = vmatpush2.bf16.msra.mxu0 %v917
        %973 = vmatprep.subr.bf16.mxu0 %v916
        %974 = vmatpush2.bf16.msra.mxu0 %v915
        %975 = vmatprep.subr.bf16.mxu0 %v914
        %976 = vmatpush2.bf16.msra.mxu0 %v913
        %977 = vmatprep.subr.bf16.mxu0 %v912
        %978 = vmatpush2.bf16.msra.mxu0 %v911
        %979 = vmatprep.subr.bf16.mxu0 %v910
        %980 = vmatpush2.bf16.msra.mxu0 %v909
        %981 = vmatprep.subr.bf16.mxu0 %v908
        %982 = vmatpush2.bf16.msra.mxu0 %v907
        %983 = vmatprep.subr.bf16.mxu0 %v906
        %984 = vmatpush2.bf16.msra.mxu0 %v905
        %985 = vmatprep.mubr.bf16.mxu0 %v488
        %986 = vmatmul.mubr.bf16.gmra.mxu0 %v487
        %v987 = vpop.f32.mrf.mxu0
        %v988 = vadd.f32 0.0, %v987
        %v989 = vpop.f32.mrf.mxu0
        %v990 = vadd.f32 0.0, %v989
        %v991 = vpop.f32.mrf.mxu0
        %v992 = vadd.f32 0.0, %v991
        %v993 = vpop.f32.mrf.mxu0
        %v994 = vadd.f32 0.0, %v993
        %995 = vmatprep.mubr.bf16.mxu0 %v490
        %996 = vmatmul.mubr.bf16.gmra.mxu0 %v489
        %v997 = vpop.f32.mrf.mxu0
        %v998 = vadd.f32 0.0, %v997
        %v999 = vpop.f32.mrf.mxu0
        %v1000 = vadd.f32 0.0, %v999
        %v1001 = vpop.f32.mrf.mxu0
        %v1002 = vadd.f32 0.0, %v1001
        %v1003 = vpop.f32.mrf.mxu0
        %v1004 = vadd.f32 0.0, %v1003
        %1005 = vmatprep.mubr.bf16.mxu0 %v492
        %1006 = vmatmul.mubr.bf16.gmra.mxu0 %v491
        %v1007 = vpop.f32.mrf.mxu0
        %v1008 = vadd.f32 0.0, %v1007
        %v1009 = vpop.f32.mrf.mxu0
        %v1010 = vadd.f32 0.0, %v1009
        %v1011 = vpop.f32.mrf.mxu0
        %v1012 = vadd.f32 0.0, %v1011
        %v1013 = vpop.f32.mrf.mxu0
        %v1014 = vadd.f32 0.0, %v1013
        %1015 = vmatprep.mubr.bf16.mxu0 %v494
        %1016 = vmatmul.mubr.bf16.gmra.mxu0 %v493
        %v1017 = vpop.f32.mrf.mxu0
        %v1018 = vadd.f32 0.0, %v1017
        %v1019 = vpop.f32.mrf.mxu0
        %v1020 = vadd.f32 0.0, %v1019
        %v1021 = vpop.f32.mrf.mxu0
        %v1022 = vadd.f32 0.0, %v1021
        %v1023 = vpop.f32.mrf.mxu0
        %v1024 = vadd.f32 0.0, %v1023
        %1025 = vdwg.mxu0
        %vm1042 = vcmask 1046528
        %v1043 = vrot.slane %v988, 1
        %v1044 = vrot.slane %v992, 1
        %v1045 = vsel %vm1042, %v1043, %v1044
        %v1046 = vrot.slane %v990, 1
        %v1047 = vrot.slane %v994, 1
        %v1048 = vsel %vm1042, %v1046, %v1047
        %v1049 = vrot.slane %v998, 1
        %v1050 = vsel %vm1042, %v1044, %v1049
        %v1051 = vrot.slane %v1000, 1
        %v1052 = vsel %vm1042, %v1047, %v1051
        %v1053 = vrot.slane %v1002, 1
        %v1054 = vsel %vm1042, %v1049, %v1053
        %v1055 = vrot.slane %v1004, 1
        %v1056 = vsel %vm1042, %v1051, %v1055
        %v1057 = vrot.slane %v1008, 1
        %v1058 = vrot.slane %v1012, 1
        %v1059 = vsel %vm1042, %v1057, %v1058
        %v1060 = vrot.slane %v1010, 1
        %v1061 = vrot.slane %v1014, 1
        %v1062 = vsel %vm1042, %v1060, %v1061
        %v1063 = vrot.slane %v1018, 1
        %v1064 = vsel %vm1042, %v1058, %v1063
        %v1065 = vrot.slane %v1020, 1
        %v1066 = vsel %vm1042, %v1061, %v1065
        %v1067 = vrot.slane %v1022, 1
        %v1068 = vsel %vm1042, %v1063, %v1067
        %v1069 = vrot.slane %v1024, 1
        %v1070 = vsel %vm1042, %v1065, %v1069
        %v1087 = vadd.f32 %v722, %v1045
        %v1088 = vadd.f32 %v724, %v1048
        %v1089 = vadd.f32 %v726, %v1050
        %v1090 = vadd.f32 %v728, %v1052
        %v1091 = vadd.f32 %v732, %v1054
        %v1092 = vadd.f32 %v734, %v1056
        %v1093 = vadd.f32 %v736, %v1053
        %v1094 = vadd.f32 %v738, %v1055
        %v1095 = vadd.f32 %v742, %v1059
        %v1096 = vadd.f32 %v744, %v1062
        %v1097 = vadd.f32 %v746, %v1064
        %v1098 = vadd.f32 %v748, %v1066
        %v1099 = vadd.f32 %v752, %v1068
        %v1100 = vadd.f32 %v754, %v1070
        %v1101 = vadd.f32 %v756, %v1067
        %v1102 = vadd.f32 %v758, %v1069
        %s1103 = scalar_lea.vmem %s1, 512
        %v1104 = vld [vmem:[%s1103] sm:$0xff]
        %v1105 = vld [vmem:[%s1103 + $0x8] sm:$0xff]
        %v1106 = vld [vmem:[%s1103 + $0x10] sm:$0xff]
        %v1107 = vld [vmem:[%s1103 + $0x18] sm:$0xff]
        %v1108 = vld [vmem:[%s1103 + $0x20] sm:$0xff]
        %v1109 = vld [vmem:[%s1103 + $0x28] sm:$0xff]
        %v1110 = vld [vmem:[%s1103 + $0x30] sm:$0xff]
        %v1111 = vld [vmem:[%s1103 + $0x38] sm:$0xff]
        %v1112 = vld [vmem:[%s1103 + $0x40] sm:$0xff]
        %v1113 = vld [vmem:[%s1103 + $0x48] sm:$0xff]
        %v1114 = vld [vmem:[%s1103 + $0x50] sm:$0xff]
        %v1115 = vld [vmem:[%s1103 + $0x58] sm:$0xff]
        %v1116 = vld [vmem:[%s1103 + $0x60] sm:$0xff]
        %v1117 = vld [vmem:[%s1103 + $0x68] sm:$0xff]
        %v1118 = vld [vmem:[%s1103 + $0x70] sm:$0xff]
        %v1119 = vld [vmem:[%s1103 + $0x78] sm:$0xff]
        %v1120 = vld [vmem:[%s1103 + $0x80] sm:$0xff]
        %v1121 = vld [vmem:[%s1103 + $0x88] sm:$0xff]
        %v1122 = vld [vmem:[%s1103 + $0x90] sm:$0xff]
        %v1123 = vld [vmem:[%s1103 + $0x98] sm:$0xff]
        %v1124 = vld [vmem:[%s1103 + $0xa0] sm:$0xff]
        %v1125 = vld [vmem:[%s1103 + $0xa8] sm:$0xff]
        %v1126 = vld [vmem:[%s1103 + $0xb0] sm:$0xff]
        %v1127 = vld [vmem:[%s1103 + $0xb8] sm:$0xff]
        %v1128 = vld [vmem:[%s1103 + $0xc0] sm:$0xff]
        %v1129 = vld [vmem:[%s1103 + $0xc8] sm:$0xff]
        %v1130 = vld [vmem:[%s1103 + $0xd0] sm:$0xff]
        %v1131 = vld [vmem:[%s1103 + $0xd8] sm:$0xff]
        %v1132 = vld [vmem:[%s1103 + $0xe0] sm:$0xff]
        %v1133 = vld [vmem:[%s1103 + $0xe8] sm:$0xff]
        %v1134 = vld [vmem:[%s1103 + $0xf0] sm:$0xff]
        %v1135 = vld [vmem:[%s1103 + $0xf8] sm:$0xff]
        %v1168 = vunpack.c.l.b16 %v1104
        %v1169 = vunpack.c.h.b16 %v1104
        %v1170 = vunpack.c.l.b16 %v1105
        %v1171 = vunpack.c.h.b16 %v1105
        %v1172 = vunpack.c.l.b16 %v1106
        %v1173 = vunpack.c.h.b16 %v1106
        %v1174 = vunpack.c.l.b16 %v1107
        %v1175 = vunpack.c.h.b16 %v1107
        %v1176 = vunpack.c.l.b16 %v1108
        %v1177 = vunpack.c.h.b16 %v1108
        %v1178 = vunpack.c.l.b16 %v1109
        %v1179 = vunpack.c.h.b16 %v1109
        %v1180 = vunpack.c.l.b16 %v1110
        %v1181 = vunpack.c.h.b16 %v1110
        %v1182 = vunpack.c.l.b16 %v1111
        %v1183 = vunpack.c.h.b16 %v1111
        %v1184 = vunpack.c.l.b16 %v1112
        %v1185 = vunpack.c.h.b16 %v1112
        %v1186 = vunpack.c.l.b16 %v1113
        %v1187 = vunpack.c.h.b16 %v1113
        %v1188 = vunpack.c.l.b16 %v1114
        %v1189 = vunpack.c.h.b16 %v1114
        %v1190 = vunpack.c.l.b16 %v1115
        %v1191 = vunpack.c.h.b16 %v1115
        %v1192 = vunpack.c.l.b16 %v1116
        %v1193 = vunpack.c.h.b16 %v1116
        %v1194 = vunpack.c.l.b16 %v1117
        %v1195 = vunpack.c.h.b16 %v1117
        %v1196 = vunpack.c.l.b16 %v1118
        %v1197 = vunpack.c.h.b16 %v1118
        %v1198 = vunpack.c.l.b16 %v1119
        %v1199 = vunpack.c.h.b16 %v1119
        %v1200 = vunpack.c.l.b16 %v1120
        %v1201 = vunpack.c.h.b16 %v1120
        %v1202 = vunpack.c.l.b16 %v1121
        %v1203 = vunpack.c.h.b16 %v1121
        %v1204 = vunpack.c.l.b16 %v1122
        %v1205 = vunpack.c.h.b16 %v1122
        %v1206 = vunpack.c.l.b16 %v1123
        %v1207 = vunpack.c.h.b16 %v1123
        %v1208 = vunpack.c.l.b16 %v1124
        %v1209 = vunpack.c.h.b16 %v1124
        %v1210 = vunpack.c.l.b16 %v1125
        %v1211 = vunpack.c.h.b16 %v1125
        %v1212 = vunpack.c.l.b16 %v1126
        %v1213 = vunpack.c.h.b16 %v1126
        %v1214 = vunpack.c.l.b16 %v1127
        %v1215 = vunpack.c.h.b16 %v1127
        %v1216 = vunpack.c.l.b16 %v1128
        %v1217 = vunpack.c.h.b16 %v1128
        %v1218 = vunpack.c.l.b16 %v1129
        %v1219 = vunpack.c.h.b16 %v1129
        %v1220 = vunpack.c.l.b16 %v1130
        %v1221 = vunpack.c.h.b16 %v1130
        %v1222 = vunpack.c.l.b16 %v1131
        %v1223 = vunpack.c.h.b16 %v1131
        %v1224 = vunpack.c.l.b16 %v1132
        %v1225 = vunpack.c.h.b16 %v1132
        %v1226 = vunpack.c.l.b16 %v1133
        %v1227 = vunpack.c.h.b16 %v1133
        %v1228 = vunpack.c.l.b16 %v1134
        %v1229 = vunpack.c.h.b16 %v1134
        %v1230 = vunpack.c.l.b16 %v1135
        %v1231 = vunpack.c.h.b16 %v1135
        %v1232 = vpack.c.b16 %v1170, %v1168
        %v1233 = vpack.c.b16 %v1171, %v1169
        %v1234 = vpack.c.b16 %v1174, %v1172
        %v1235 = vpack.c.b16 %v1175, %v1173
        %v1236 = vpack.c.b16 %v1178, %v1176
        %v1237 = vpack.c.b16 %v1179, %v1177
        %v1238 = vpack.c.b16 %v1182, %v1180
        %v1239 = vpack.c.b16 %v1183, %v1181
        %v1240 = vpack.c.b16 %v1186, %v1184
        %v1241 = vpack.c.b16 %v1187, %v1185
        %v1242 = vpack.c.b16 %v1190, %v1188
        %v1243 = vpack.c.b16 %v1191, %v1189
        %v1244 = vpack.c.b16 %v1194, %v1192
        %v1245 = vpack.c.b16 %v1195, %v1193
        %v1246 = vpack.c.b16 %v1198, %v1196
        %v1247 = vpack.c.b16 %v1199, %v1197
        %v1248 = vpack.c.b16 %v1202, %v1200
        %v1249 = vpack.c.b16 %v1203, %v1201
        %v1250 = vpack.c.b16 %v1206, %v1204
        %v1251 = vpack.c.b16 %v1207, %v1205
        %v1252 = vpack.c.b16 %v1210, %v1208
        %v1253 = vpack.c.b16 %v1211, %v1209
        %v1254 = vpack.c.b16 %v1214, %v1212
        %v1255 = vpack.c.b16 %v1215, %v1213
        %v1256 = vpack.c.b16 %v1218, %v1216
        %v1257 = vpack.c.b16 %v1219, %v1217
        %v1258 = vpack.c.b16 %v1222, %v1220
        %v1259 = vpack.c.b16 %v1223, %v1221
        %v1260 = vpack.c.b16 %v1226, %v1224
        %v1261 = vpack.c.b16 %v1227, %v1225
        %v1262 = vpack.c.b16 %v1230, %v1228
        %v1263 = vpack.c.b16 %v1231, %v1229
        %1296 = vmatprep.subr.bf16.mxu0 %v1247
        %1297 = vmatpush1.bf16.msra.mxu0 %v1246
        %1298 = vmatprep.subr.bf16.mxu0 %v1245
        %1299 = vmatpush1.bf16.msra.mxu0 %v1244
        %1300 = vmatprep.subr.bf16.mxu0 %v1243
        %1301 = vmatpush1.bf16.msra.mxu0 %v1242
        %1302 = vmatprep.subr.bf16.mxu0 %v1241
        %1303 = vmatpush1.bf16.msra.mxu0 %v1240
        %1304 = vmatprep.subr.bf16.mxu0 %v1239
        %1305 = vmatpush1.bf16.msra.mxu0 %v1238
        %1306 = vmatprep.subr.bf16.mxu0 %v1237
        %1307 = vmatpush1.bf16.msra.mxu0 %v1236
        %1308 = vmatprep.subr.bf16.mxu0 %v1235
        %1309 = vmatpush1.bf16.msra.mxu0 %v1234
        %1310 = vmatprep.subr.bf16.mxu0 %v1233
        %1311 = vmatpush1.bf16.msra.mxu0 %v1232
        %1312 = vmatprep.subr.bf16.mxu0 %v1263
        %1313 = vmatpush2.bf16.msra.mxu0 %v1262
        %1314 = vmatprep.subr.bf16.mxu0 %v1261
        %1315 = vmatpush2.bf16.msra.mxu0 %v1260
        %1316 = vmatprep.subr.bf16.mxu0 %v1259
        %1317 = vmatpush2.bf16.msra.mxu0 %v1258
        %1318 = vmatprep.subr.bf16.mxu0 %v1257
        %1319 = vmatpush2.bf16.msra.mxu0 %v1256
        %1320 = vmatprep.subr.bf16.mxu0 %v1255
        %1321 = vmatpush2.bf16.msra.mxu0 %v1254
        %1322 = vmatprep.subr.bf16.mxu0 %v1253
        %1323 = vmatpush2.bf16.msra.mxu0 %v1252
        %1324 = vmatprep.subr.bf16.mxu0 %v1251
        %1325 = vmatpush2.bf16.msra.mxu0 %v1250
        %1326 = vmatprep.subr.bf16.mxu0 %v1249
        %1327 = vmatpush2.bf16.msra.mxu0 %v1248
        %1328 = vmatprep.mubr.bf16.mxu0 %v488
        %1329 = vmatmul.mubr.bf16.gmra.mxu0 %v487
        %v1330 = vpop.f32.mrf.mxu0
        %v1331 = vadd.f32 0.0, %v1330
        %v1332 = vpop.f32.mrf.mxu0
        %v1333 = vadd.f32 0.0, %v1332
        %v1334 = vpop.f32.mrf.mxu0
        %v1335 = vadd.f32 0.0, %v1334
        %v1336 = vpop.f32.mrf.mxu0
        %v1337 = vadd.f32 0.0, %v1336
        %1338 = vmatprep.mubr.bf16.mxu0 %v490
        %1339 = vmatmul.mubr.bf16.gmra.mxu0 %v489
        %v1340 = vpop.f32.mrf.mxu0
        %v1341 = vadd.f32 0.0, %v1340
        %v1342 = vpop.f32.mrf.mxu0
        %v1343 = vadd.f32 0.0, %v1342
        %v1344 = vpop.f32.mrf.mxu0
        %v1345 = vadd.f32 0.0, %v1344
        %v1346 = vpop.f32.mrf.mxu0
        %v1347 = vadd.f32 0.0, %v1346
        %1348 = vmatprep.mubr.bf16.mxu0 %v492
        %1349 = vmatmul.mubr.bf16.gmra.mxu0 %v491
        %v1350 = vpop.f32.mrf.mxu0
        %v1351 = vadd.f32 0.0, %v1350
        %v1352 = vpop.f32.mrf.mxu0
        %v1353 = vadd.f32 0.0, %v1352
        %v1354 = vpop.f32.mrf.mxu0
        %v1355 = vadd.f32 0.0, %v1354
        %v1356 = vpop.f32.mrf.mxu0
        %v1357 = vadd.f32 0.0, %v1356
        %1358 = vmatprep.mubr.bf16.mxu0 %v494
        %1359 = vmatmul.mubr.bf16.gmra.mxu0 %v493
        %v1360 = vpop.f32.mrf.mxu0
        %v1361 = vadd.f32 0.0, %v1360
        %v1362 = vpop.f32.mrf.mxu0
        %v1363 = vadd.f32 0.0, %v1362
        %v1364 = vpop.f32.mrf.mxu0
        %v1365 = vadd.f32 0.0, %v1364
        %v1366 = vpop.f32.mrf.mxu0
        %v1367 = vadd.f32 0.0, %v1366
        %1368 = vdwg.mxu0
        %vm1385 = vcmask 1045504
        %v1386 = vrot.slane %v1331, 2
        %v1387 = vrot.slane %v1335, 2
        %v1388 = vsel %vm1385, %v1386, %v1387
        %v1389 = vrot.slane %v1333, 2
        %v1390 = vrot.slane %v1337, 2
        %v1391 = vsel %vm1385, %v1389, %v1390
        %v1392 = vrot.slane %v1341, 2
        %v1393 = vsel %vm1385, %v1387, %v1392
        %v1394 = vrot.slane %v1343, 2
        %v1395 = vsel %vm1385, %v1390, %v1394
        %v1396 = vrot.slane %v1345, 2
        %v1397 = vsel %vm1385, %v1392, %v1396
        %v1398 = vrot.slane %v1347, 2
        %v1399 = vsel %vm1385, %v1394, %v1398
        %v1400 = vrot.slane %v1351, 2
        %v1401 = vrot.slane %v1355, 2
        %v1402 = vsel %vm1385, %v1400, %v1401
        %v1403 = vrot.slane %v1353, 2
        %v1404 = vrot.slane %v1357, 2
        %v1405 = vsel %vm1385, %v1403, %v1404
        %v1406 = vrot.slane %v1361, 2
        %v1407 = vsel %vm1385, %v1401, %v1406
        %v1408 = vrot.slane %v1363, 2
        %v1409 = vsel %vm1385, %v1404, %v1408
        %v1410 = vrot.slane %v1365, 2
        %v1411 = vsel %vm1385, %v1406, %v1410
        %v1412 = vrot.slane %v1367, 2
        %v1413 = vsel %vm1385, %v1408, %v1412
        %v1430 = vadd.f32 %v1087, %v1388
        %v1431 = vadd.f32 %v1088, %v1391
        %v1432 = vadd.f32 %v1089, %v1393
        %v1433 = vadd.f32 %v1090, %v1395
        %v1434 = vadd.f32 %v1091, %v1397
        %v1435 = vadd.f32 %v1092, %v1399
        %v1436 = vadd.f32 %v1093, %v1396
        %v1437 = vadd.f32 %v1094, %v1398
        %v1438 = vadd.f32 %v1095, %v1402
        %v1439 = vadd.f32 %v1096, %v1405
        %v1440 = vadd.f32 %v1097, %v1407
        %v1441 = vadd.f32 %v1098, %v1409
        %v1442 = vadd.f32 %v1099, %v1411
        %v1443 = vadd.f32 %v1100, %v1413
        %v1444 = vadd.f32 %v1101, %v1410
        %v1445 = vadd.f32 %v1102, %v1412
        %s1446 = scalar_lea.vmem %s1, 768
        %v1447 = vld [vmem:[%s1446] sm:$0xff]
        %v1448 = vld [vmem:[%s1446 + $0x8] sm:$0xff]
        %v1449 = vld [vmem:[%s1446 + $0x10] sm:$0xff]
        %v1450 = vld [vmem:[%s1446 + $0x18] sm:$0xff]
        %v1451 = vld [vmem:[%s1446 + $0x20] sm:$0xff]
        %v1452 = vld [vmem:[%s1446 + $0x28] sm:$0xff]
        %v1453 = vld [vmem:[%s1446 + $0x30] sm:$0xff]
        %v1454 = vld [vmem:[%s1446 + $0x38] sm:$0xff]
        %v1455 = vld [vmem:[%s1446 + $0x40] sm:$0xff]
        %v1456 = vld [vmem:[%s1446 + $0x48] sm:$0xff]
        %v1457 = vld [vmem:[%s1446 + $0x50] sm:$0xff]
        %v1458 = vld [vmem:[%s1446 + $0x58] sm:$0xff]
        %v1459 = vld [vmem:[%s1446 + $0x60] sm:$0xff]
        %v1460 = vld [vmem:[%s1446 + $0x68] sm:$0xff]
        %v1461 = vld [vmem:[%s1446 + $0x70] sm:$0xff]
        %v1462 = vld [vmem:[%s1446 + $0x78] sm:$0xff]
        %v1463 = vld [vmem:[%s1446 + $0x80] sm:$0xff]
        %v1464 = vld [vmem:[%s1446 + $0x88] sm:$0xff]
        %v1465 = vld [vmem:[%s1446 + $0x90] sm:$0xff]
        %v1466 = vld [vmem:[%s1446 + $0x98] sm:$0xff]
        %v1467 = vld [vmem:[%s1446 + $0xa0] sm:$0xff]
        %v1468 = vld [vmem:[%s1446 + $0xa8] sm:$0xff]
        %v1469 = vld [vmem:[%s1446 + $0xb0] sm:$0xff]
        %v1470 = vld [vmem:[%s1446 + $0xb8] sm:$0xff]
        %v1471 = vld [vmem:[%s1446 + $0xc0] sm:$0xff]
        %v1472 = vld [vmem:[%s1446 + $0xc8] sm:$0xff]
        %v1473 = vld [vmem:[%s1446 + $0xd0] sm:$0xff]
        %v1474 = vld [vmem:[%s1446 + $0xd8] sm:$0xff]
        %v1475 = vld [vmem:[%s1446 + $0xe0] sm:$0xff]
        %v1476 = vld [vmem:[%s1446 + $0xe8] sm:$0xff]
        %v1477 = vld [vmem:[%s1446 + $0xf0] sm:$0xff]
        %v1478 = vld [vmem:[%s1446 + $0xf8] sm:$0xff]
        %v1511 = vunpack.c.l.b16 %v1447
        %v1512 = vunpack.c.h.b16 %v1447
        %v1513 = vunpack.c.l.b16 %v1448
        %v1514 = vunpack.c.h.b16 %v1448
        %v1515 = vunpack.c.l.b16 %v1449
        %v1516 = vunpack.c.h.b16 %v1449
        %v1517 = vunpack.c.l.b16 %v1450
        %v1518 = vunpack.c.h.b16 %v1450
        %v1519 = vunpack.c.l.b16 %v1451
        %v1520 = vunpack.c.h.b16 %v1451
        %v1521 = vunpack.c.l.b16 %v1452
        %v1522 = vunpack.c.h.b16 %v1452
        %v1523 = vunpack.c.l.b16 %v1453
        %v1524 = vunpack.c.h.b16 %v1453
        %v1525 = vunpack.c.l.b16 %v1454
        %v1526 = vunpack.c.h.b16 %v1454
        %v1527 = vunpack.c.l.b16 %v1455
        %v1528 = vunpack.c.h.b16 %v1455
        %v1529 = vunpack.c.l.b16 %v1456
        %v1530 = vunpack.c.h.b16 %v1456
        %v1531 = vunpack.c.l.b16 %v1457
        %v1532 = vunpack.c.h.b16 %v1457
        %v1533 = vunpack.c.l.b16 %v1458
        %v1534 = vunpack.c.h.b16 %v1458
        %v1535 = vunpack.c.l.b16 %v1459
        %v1536 = vunpack.c.h.b16 %v1459
        %v1537 = vunpack.c.l.b16 %v1460
        %v1538 = vunpack.c.h.b16 %v1460
        %v1539 = vunpack.c.l.b16 %v1461
        %v1540 = vunpack.c.h.b16 %v1461
        %v1541 = vunpack.c.l.b16 %v1462
        %v1542 = vunpack.c.h.b16 %v1462
        %v1543 = vunpack.c.l.b16 %v1463
        %v1544 = vunpack.c.h.b16 %v1463
        %v1545 = vunpack.c.l.b16 %v1464
        %v1546 = vunpack.c.h.b16 %v1464
        %v1547 = vunpack.c.l.b16 %v1465
        %v1548 = vunpack.c.h.b16 %v1465
        %v1549 = vunpack.c.l.b16 %v1466
        %v1550 = vunpack.c.h.b16 %v1466
        %v1551 = vunpack.c.l.b16 %v1467
        %v1552 = vunpack.c.h.b16 %v1467
        %v1553 = vunpack.c.l.b16 %v1468
        %v1554 = vunpack.c.h.b16 %v1468
        %v1555 = vunpack.c.l.b16 %v1469
        %v1556 = vunpack.c.h.b16 %v1469
        %v1557 = vunpack.c.l.b16 %v1470
        %v1558 = vunpack.c.h.b16 %v1470
        %v1559 = vunpack.c.l.b16 %v1471
        %v1560 = vunpack.c.h.b16 %v1471
        %v1561 = vunpack.c.l.b16 %v1472
        %v1562 = vunpack.c.h.b16 %v1472
        %v1563 = vunpack.c.l.b16 %v1473
        %v1564 = vunpack.c.h.b16 %v1473
        %v1565 = vunpack.c.l.b16 %v1474
        %v1566 = vunpack.c.h.b16 %v1474
        %v1567 = vunpack.c.l.b16 %v1475
        %v1568 = vunpack.c.h.b16 %v1475
        %v1569 = vunpack.c.l.b16 %v1476
        %v1570 = vunpack.c.h.b16 %v1476
        %v1571 = vunpack.c.l.b16 %v1477
        %v1572 = vunpack.c.h.b16 %v1477
        %v1573 = vunpack.c.l.b16 %v1478
        %v1574 = vunpack.c.h.b16 %v1478
        %v1575 = vpack.c.b16 %v1513, %v1511
        %v1576 = vpack.c.b16 %v1514, %v1512
        %v1577 = vpack.c.b16 %v1517, %v1515
        %v1578 = vpack.c.b16 %v1518, %v1516
        %v1579 = vpack.c.b16 %v1521, %v1519
        %v1580 = vpack.c.b16 %v1522, %v1520
        %v1581 = vpack.c.b16 %v1525, %v1523
        %v1582 = vpack.c.b16 %v1526, %v1524
        %v1583 = vpack.c.b16 %v1529, %v1527
        %v1584 = vpack.c.b16 %v1530, %v1528
        %v1585 = vpack.c.b16 %v1533, %v1531
        %v1586 = vpack.c.b16 %v1534, %v1532
        %v1587 = vpack.c.b16 %v1537, %v1535
        %v1588 = vpack.c.b16 %v1538, %v1536
        %v1589 = vpack.c.b16 %v1541, %v1539
        %v1590 = vpack.c.b16 %v1542, %v1540
        %v1591 = vpack.c.b16 %v1545, %v1543
        %v1592 = vpack.c.b16 %v1546, %v1544
        %v1593 = vpack.c.b16 %v1549, %v1547
        %v1594 = vpack.c.b16 %v1550, %v1548
        %v1595 = vpack.c.b16 %v1553, %v1551
        %v1596 = vpack.c.b16 %v1554, %v1552
        %v1597 = vpack.c.b16 %v1557, %v1555
        %v1598 = vpack.c.b16 %v1558, %v1556
        %v1599 = vpack.c.b16 %v1561, %v1559
        %v1600 = vpack.c.b16 %v1562, %v1560
        %v1601 = vpack.c.b16 %v1565, %v1563
        %v1602 = vpack.c.b16 %v1566, %v1564
        %v1603 = vpack.c.b16 %v1569, %v1567
        %v1604 = vpack.c.b16 %v1570, %v1568
        %v1605 = vpack.c.b16 %v1573, %v1571
        %v1606 = vpack.c.b16 %v1574, %v1572
        %1639 = vmatprep.subr.bf16.mxu0 %v1590
        %1640 = vmatpush1.bf16.msra.mxu0 %v1589
        %1641 = vmatprep.subr.bf16.mxu0 %v1588
        %1642 = vmatpush1.bf16.msra.mxu0 %v1587
        %1643 = vmatprep.subr.bf16.mxu0 %v1586
        %1644 = vmatpush1.bf16.msra.mxu0 %v1585
        %1645 = vmatprep.subr.bf16.mxu0 %v1584
        %1646 = vmatpush1.bf16.msra.mxu0 %v1583
        %1647 = vmatprep.subr.bf16.mxu0 %v1582
        %1648 = vmatpush1.bf16.msra.mxu0 %v1581
        %1649 = vmatprep.subr.bf16.mxu0 %v1580
        %1650 = vmatpush1.bf16.msra.mxu0 %v1579
        %1651 = vmatprep.subr.bf16.mxu0 %v1578
        %1652 = vmatpush1.bf16.msra.mxu0 %v1577
        %1653 = vmatprep.subr.bf16.mxu0 %v1576
        %1654 = vmatpush1.bf16.msra.mxu0 %v1575
        %1655 = vmatprep.subr.bf16.mxu0 %v1606
        %1656 = vmatpush2.bf16.msra.mxu0 %v1605
        %1657 = vmatprep.subr.bf16.mxu0 %v1604
        %1658 = vmatpush2.bf16.msra.mxu0 %v1603
        %1659 = vmatprep.subr.bf16.mxu0 %v1602
        %1660 = vmatpush2.bf16.msra.mxu0 %v1601
        %1661 = vmatprep.subr.bf16.mxu0 %v1600
        %1662 = vmatpush2.bf16.msra.mxu0 %v1599
        %1663 = vmatprep.subr.bf16.mxu0 %v1598
        %1664 = vmatpush2.bf16.msra.mxu0 %v1597
        %1665 = vmatprep.subr.bf16.mxu0 %v1596
        %1666 = vmatpush2.bf16.msra.mxu0 %v1595
        %1667 = vmatprep.subr.bf16.mxu0 %v1594
        %1668 = vmatpush2.bf16.msra.mxu0 %v1593
        %1669 = vmatprep.subr.bf16.mxu0 %v1592
        %1670 = vmatpush2.bf16.msra.mxu0 %v1591
        %1671 = vmatprep.mubr.bf16.mxu0 %v488
        %1672 = vmatmul.mubr.bf16.gmra.mxu0 %v487
        %v1673 = vpop.f32.mrf.mxu0
        %v1674 = vadd.f32 0.0, %v1673
        %v1675 = vpop.f32.mrf.mxu0
        %v1676 = vadd.f32 0.0, %v1675
        %v1677 = vpop.f32.mrf.mxu0
        %v1678 = vadd.f32 0.0, %v1677
        %v1679 = vpop.f32.mrf.mxu0
        %v1680 = vadd.f32 0.0, %v1679
        %1681 = vmatprep.mubr.bf16.mxu0 %v490
        %1682 = vmatmul.mubr.bf16.gmra.mxu0 %v489
        %v1683 = vpop.f32.mrf.mxu0
        %v1684 = vadd.f32 0.0, %v1683
        %v1685 = vpop.f32.mrf.mxu0
        %v1686 = vadd.f32 0.0, %v1685
        %v1687 = vpop.f32.mrf.mxu0
        %v1688 = vadd.f32 0.0, %v1687
        %v1689 = vpop.f32.mrf.mxu0
        %v1690 = vadd.f32 0.0, %v1689
        %1691 = vmatprep.mubr.bf16.mxu0 %v492
        %1692 = vmatmul.mubr.bf16.gmra.mxu0 %v491
        %v1693 = vpop.f32.mrf.mxu0
        %v1694 = vadd.f32 0.0, %v1693
        %v1695 = vpop.f32.mrf.mxu0
        %v1696 = vadd.f32 0.0, %v1695
        %v1697 = vpop.f32.mrf.mxu0
        %v1698 = vadd.f32 0.0, %v1697
        %v1699 = vpop.f32.mrf.mxu0
        %v1700 = vadd.f32 0.0, %v1699
        %1701 = vmatprep.mubr.bf16.mxu0 %v494
        %1702 = vmatmul.mubr.bf16.gmra.mxu0 %v493
        %v1703 = vpop.f32.mrf.mxu0
        %v1704 = vadd.f32 0.0, %v1703
        %v1705 = vpop.f32.mrf.mxu0
        %v1706 = vadd.f32 0.0, %v1705
        %v1707 = vpop.f32.mrf.mxu0
        %v1708 = vadd.f32 0.0, %v1707
        %v1709 = vpop.f32.mrf.mxu0
        %v1710 = vadd.f32 0.0, %v1709
        %1711 = vdwg.mxu0
        %vm1728 = vcmask 1044480
        %v1729 = vrot.slane %v1674, 3
        %v1730 = vrot.slane %v1678, 3
        %v1731 = vsel %vm1728, %v1729, %v1730
        %v1732 = vrot.slane %v1676, 3
        %v1733 = vrot.slane %v1680, 3
        %v1734 = vsel %vm1728, %v1732, %v1733
        %v1735 = vrot.slane %v1684, 3
        %v1736 = vsel %vm1728, %v1730, %v1735
        %v1737 = vrot.slane %v1686, 3
        %v1738 = vsel %vm1728, %v1733, %v1737
        %v1739 = vrot.slane %v1688, 3
        %v1740 = vsel %vm1728, %v1735, %v1739
        %v1741 = vrot.slane %v1690, 3
        %v1742 = vsel %vm1728, %v1737, %v1741
        %v1743 = vrot.slane %v1694, 3
        %v1744 = vrot.slane %v1698, 3
        %v1745 = vsel %vm1728, %v1743, %v1744
        %v1746 = vrot.slane %v1696, 3
        %v1747 = vrot.slane %v1700, 3
        %v1748 = vsel %vm1728, %v1746, %v1747
        %v1749 = vrot.slane %v1704, 3
        %v1750 = vsel %vm1728, %v1744, %v1749
        %v1751 = vrot.slane %v1706, 3
        %v1752 = vsel %vm1728, %v1747, %v1751
        %v1753 = vrot.slane %v1708, 3
        %v1754 = vsel %vm1728, %v1749, %v1753
        %v1755 = vrot.slane %v1710, 3
        %v1756 = vsel %vm1728, %v1751, %v1755
        %v1773 = vadd.f32 %v1430, %v1731
        %v1774 = vadd.f32 %v1431, %v1734
        %v1775 = vadd.f32 %v1432, %v1736
        %v1776 = vadd.f32 %v1433, %v1738
        %v1777 = vadd.f32 %v1434, %v1740
        %v1778 = vadd.f32 %v1435, %v1742
        %v1779 = vadd.f32 %v1436, %v1739
        %v1780 = vadd.f32 %v1437, %v1741
        %v1781 = vadd.f32 %v1438, %v1745
        %v1782 = vadd.f32 %v1439, %v1748
        %v1783 = vadd.f32 %v1440, %v1750
        %v1784 = vadd.f32 %v1441, %v1752
        %v1785 = vadd.f32 %v1442, %v1754
        %v1786 = vadd.f32 %v1443, %v1756
        %v1787 = vadd.f32 %v1444, %v1753
        %v1788 = vadd.f32 %v1445, %v1755
        %s1789 = scalar_lea.vmem %s1, 1024
        %v1790 = vld [vmem:[%s1789] sm:$0xff]
        %v1791 = vld [vmem:[%s1789 + $0x8] sm:$0xff]
        %v1792 = vld [vmem:[%s1789 + $0x10] sm:$0xff]
        %v1793 = vld [vmem:[%s1789 + $0x18] sm:$0xff]
        %v1794 = vld [vmem:[%s1789 + $0x20] sm:$0xff]
        %v1795 = vld [vmem:[%s1789 + $0x28] sm:$0xff]
        %v1796 = vld [vmem:[%s1789 + $0x30] sm:$0xff]
        %v1797 = vld [vmem:[%s1789 + $0x38] sm:$0xff]
        %v1798 = vld [vmem:[%s1789 + $0x40] sm:$0xff]
        %v1799 = vld [vmem:[%s1789 + $0x48] sm:$0xff]
        %v1800 = vld [vmem:[%s1789 + $0x50] sm:$0xff]
        %v1801 = vld [vmem:[%s1789 + $0x58] sm:$0xff]
        %v1802 = vld [vmem:[%s1789 + $0x60] sm:$0xff]
        %v1803 = vld [vmem:[%s1789 + $0x68] sm:$0xff]
        %v1804 = vld [vmem:[%s1789 + $0x70] sm:$0xff]
        %v1805 = vld [vmem:[%s1789 + $0x78] sm:$0xff]
        %v1806 = vld [vmem:[%s1789 + $0x80] sm:$0xff]
        %v1807 = vld [vmem:[%s1789 + $0x88] sm:$0xff]
        %v1808 = vld [vmem:[%s1789 + $0x90] sm:$0xff]
        %v1809 = vld [vmem:[%s1789 + $0x98] sm:$0xff]
        %v1810 = vld [vmem:[%s1789 + $0xa0] sm:$0xff]
        %v1811 = vld [vmem:[%s1789 + $0xa8] sm:$0xff]
        %v1812 = vld [vmem:[%s1789 + $0xb0] sm:$0xff]
        %v1813 = vld [vmem:[%s1789 + $0xb8] sm:$0xff]
        %v1814 = vld [vmem:[%s1789 + $0xc0] sm:$0xff]
        %v1815 = vld [vmem:[%s1789 + $0xc8] sm:$0xff]
        %v1816 = vld [vmem:[%s1789 + $0xd0] sm:$0xff]
        %v1817 = vld [vmem:[%s1789 + $0xd8] sm:$0xff]
        %v1818 = vld [vmem:[%s1789 + $0xe0] sm:$0xff]
        %v1819 = vld [vmem:[%s1789 + $0xe8] sm:$0xff]
        %v1820 = vld [vmem:[%s1789 + $0xf0] sm:$0xff]
        %v1821 = vld [vmem:[%s1789 + $0xf8] sm:$0xff]
        %v1854 = vunpack.c.l.b16 %v1790
        %v1855 = vunpack.c.h.b16 %v1790
        %v1856 = vunpack.c.l.b16 %v1791
        %v1857 = vunpack.c.h.b16 %v1791
        %v1858 = vunpack.c.l.b16 %v1792
        %v1859 = vunpack.c.h.b16 %v1792
        %v1860 = vunpack.c.l.b16 %v1793
        %v1861 = vunpack.c.h.b16 %v1793
        %v1862 = vunpack.c.l.b16 %v1794
        %v1863 = vunpack.c.h.b16 %v1794
        %v1864 = vunpack.c.l.b16 %v1795
        %v1865 = vunpack.c.h.b16 %v1795
        %v1866 = vunpack.c.l.b16 %v1796
        %v1867 = vunpack.c.h.b16 %v1796
        %v1868 = vunpack.c.l.b16 %v1797
        %v1869 = vunpack.c.h.b16 %v1797
        %v1870 = vunpack.c.l.b16 %v1798
        %v1871 = vunpack.c.h.b16 %v1798
        %v1872 = vunpack.c.l.b16 %v1799
        %v1873 = vunpack.c.h.b16 %v1799
        %v1874 = vunpack.c.l.b16 %v1800
        %v1875 = vunpack.c.h.b16 %v1800
        %v1876 = vunpack.c.l.b16 %v1801
        %v1877 = vunpack.c.h.b16 %v1801
        %v1878 = vunpack.c.l.b16 %v1802
        %v1879 = vunpack.c.h.b16 %v1802
        %v1880 = vunpack.c.l.b16 %v1803
        %v1881 = vunpack.c.h.b16 %v1803
        %v1882 = vunpack.c.l.b16 %v1804
        %v1883 = vunpack.c.h.b16 %v1804
        %v1884 = vunpack.c.l.b16 %v1805
        %v1885 = vunpack.c.h.b16 %v1805
        %v1886 = vunpack.c.l.b16 %v1806
        %v1887 = vunpack.c.h.b16 %v1806
        %v1888 = vunpack.c.l.b16 %v1807
        %v1889 = vunpack.c.h.b16 %v1807
        %v1890 = vunpack.c.l.b16 %v1808
        %v1891 = vunpack.c.h.b16 %v1808
        %v1892 = vunpack.c.l.b16 %v1809
        %v1893 = vunpack.c.h.b16 %v1809
        %v1894 = vunpack.c.l.b16 %v1810
        %v1895 = vunpack.c.h.b16 %v1810
        %v1896 = vunpack.c.l.b16 %v1811
        %v1897 = vunpack.c.h.b16 %v1811
        %v1898 = vunpack.c.l.b16 %v1812
        %v1899 = vunpack.c.h.b16 %v1812
        %v1900 = vunpack.c.l.b16 %v1813
        %v1901 = vunpack.c.h.b16 %v1813
        %v1902 = vunpack.c.l.b16 %v1814
        %v1903 = vunpack.c.h.b16 %v1814
        %v1904 = vunpack.c.l.b16 %v1815
        %v1905 = vunpack.c.h.b16 %v1815
        %v1906 = vunpack.c.l.b16 %v1816
        %v1907 = vunpack.c.h.b16 %v1816
        %v1908 = vunpack.c.l.b16 %v1817
        %v1909 = vunpack.c.h.b16 %v1817
        %v1910 = vunpack.c.l.b16 %v1818
        %v1911 = vunpack.c.h.b16 %v1818
        %v1912 = vunpack.c.l.b16 %v1819
        %v1913 = vunpack.c.h.b16 %v1819
        %v1914 = vunpack.c.l.b16 %v1820
        %v1915 = vunpack.c.h.b16 %v1820
        %v1916 = vunpack.c.l.b16 %v1821
        %v1917 = vunpack.c.h.b16 %v1821
        %v1918 = vpack.c.b16 %v1856, %v1854
        %v1919 = vpack.c.b16 %v1857, %v1855
        %v1920 = vpack.c.b16 %v1860, %v1858
        %v1921 = vpack.c.b16 %v1861, %v1859
        %v1922 = vpack.c.b16 %v1864, %v1862
        %v1923 = vpack.c.b16 %v1865, %v1863
        %v1924 = vpack.c.b16 %v1868, %v1866
        %v1925 = vpack.c.b16 %v1869, %v1867
        %v1926 = vpack.c.b16 %v1872, %v1870
        %v1927 = vpack.c.b16 %v1873, %v1871
        %v1928 = vpack.c.b16 %v1876, %v1874
        %v1929 = vpack.c.b16 %v1877, %v1875
        %v1930 = vpack.c.b16 %v1880, %v1878
        %v1931 = vpack.c.b16 %v1881, %v1879
        %v1932 = vpack.c.b16 %v1884, %v1882
        %v1933 = vpack.c.b16 %v1885, %v1883
        %v1934 = vpack.c.b16 %v1888, %v1886
        %v1935 = vpack.c.b16 %v1889, %v1887
        %v1936 = vpack.c.b16 %v1892, %v1890
        %v1937 = vpack.c.b16 %v1893, %v1891
        %v1938 = vpack.c.b16 %v1896, %v1894
        %v1939 = vpack.c.b16 %v1897, %v1895
        %v1940 = vpack.c.b16 %v1900, %v1898
        %v1941 = vpack.c.b16 %v1901, %v1899
        %v1942 = vpack.c.b16 %v1904, %v1902
        %v1943 = vpack.c.b16 %v1905, %v1903
        %v1944 = vpack.c.b16 %v1908, %v1906
        %v1945 = vpack.c.b16 %v1909, %v1907
        %v1946 = vpack.c.b16 %v1912, %v1910
        %v1947 = vpack.c.b16 %v1913, %v1911
        %v1948 = vpack.c.b16 %v1916, %v1914
        %v1949 = vpack.c.b16 %v1917, %v1915
        %1982 = vmatprep.subr.bf16.mxu0 %v1933
        %1983 = vmatpush1.bf16.msra.mxu0 %v1932
        %1984 = vmatprep.subr.bf16.mxu0 %v1931
        %1985 = vmatpush1.bf16.msra.mxu0 %v1930
        %1986 = vmatprep.subr.bf16.mxu0 %v1929
        %1987 = vmatpush1.bf16.msra.mxu0 %v1928
        %1988 = vmatprep.subr.bf16.mxu0 %v1927
        %1989 = vmatpush1.bf16.msra.mxu0 %v1926
        %1990 = vmatprep.subr.bf16.mxu0 %v1925
        %1991 = vmatpush1.bf16.msra.mxu0 %v1924
        %1992 = vmatprep.subr.bf16.mxu0 %v1923
        %1993 = vmatpush1.bf16.msra.mxu0 %v1922
        %1994 = vmatprep.subr.bf16.mxu0 %v1921
        %1995 = vmatpush1.bf16.msra.mxu0 %v1920
        %1996 = vmatprep.subr.bf16.mxu0 %v1919
        %1997 = vmatpush1.bf16.msra.mxu0 %v1918
        %1998 = vmatprep.subr.bf16.mxu0 %v1949
        %1999 = vmatpush2.bf16.msra.mxu0 %v1948
        %2000 = vmatprep.subr.bf16.mxu0 %v1947
        %2001 = vmatpush2.bf16.msra.mxu0 %v1946
        %2002 = vmatprep.subr.bf16.mxu0 %v1945
        %2003 = vmatpush2.bf16.msra.mxu0 %v1944
        %2004 = vmatprep.subr.bf16.mxu0 %v1943
        %2005 = vmatpush2.bf16.msra.mxu0 %v1942
        %2006 = vmatprep.subr.bf16.mxu0 %v1941
        %2007 = vmatpush2.bf16.msra.mxu0 %v1940
        %2008 = vmatprep.subr.bf16.mxu0 %v1939
        %2009 = vmatpush2.bf16.msra.mxu0 %v1938
        %2010 = vmatprep.subr.bf16.mxu0 %v1937
        %2011 = vmatpush2.bf16.msra.mxu0 %v1936
        %2012 = vmatprep.subr.bf16.mxu0 %v1935
        %2013 = vmatpush2.bf16.msra.mxu0 %v1934
        %2014 = vmatprep.mubr.bf16.mxu0 %v488
        %2015 = vmatmul.mubr.bf16.gmra.mxu0 %v487
        %v2016 = vpop.f32.mrf.mxu0
        %v2017 = vadd.f32 0.0, %v2016
        %v2018 = vpop.f32.mrf.mxu0
        %v2019 = vadd.f32 0.0, %v2018
        %v2020 = vpop.f32.mrf.mxu0
        %v2021 = vadd.f32 0.0, %v2020
        %v2022 = vpop.f32.mrf.mxu0
        %v2023 = vadd.f32 0.0, %v2022
        %2024 = vmatprep.mubr.bf16.mxu0 %v490
        %2025 = vmatmul.mubr.bf16.gmra.mxu0 %v489
        %v2026 = vpop.f32.mrf.mxu0
        %v2027 = vadd.f32 0.0, %v2026
        %v2028 = vpop.f32.mrf.mxu0
        %v2029 = vadd.f32 0.0, %v2028
        %v2030 = vpop.f32.mrf.mxu0
        %v2031 = vadd.f32 0.0, %v2030
        %v2032 = vpop.f32.mrf.mxu0
        %v2033 = vadd.f32 0.0, %v2032
        %2034 = vmatprep.mubr.bf16.mxu0 %v492
        %2035 = vmatmul.mubr.bf16.gmra.mxu0 %v491
        %v2036 = vpop.f32.mrf.mxu0
        %v2037 = vadd.f32 0.0, %v2036
        %v2038 = vpop.f32.mrf.mxu0
        %v2039 = vadd.f32 0.0, %v2038
        %v2040 = vpop.f32.mrf.mxu0
        %v2041 = vadd.f32 0.0, %v2040
        %v2042 = vpop.f32.mrf.mxu0
        %v2043 = vadd.f32 0.0, %v2042
        %2044 = vmatprep.mubr.bf16.mxu0 %v494
        %2045 = vmatmul.mubr.bf16.gmra.mxu0 %v493
        %v2046 = vpop.f32.mrf.mxu0
        %v2047 = vadd.f32 0.0, %v2046
        %v2048 = vpop.f32.mrf.mxu0
        %v2049 = vadd.f32 0.0, %v2048
        %v2050 = vpop.f32.mrf.mxu0
        %v2051 = vadd.f32 0.0, %v2050
        %v2052 = vpop.f32.mrf.mxu0
        %v2053 = vadd.f32 0.0, %v2052
        %2054 = vdwg.mxu0
        %vm2071 = vcmask 1043456
        %v2072 = vrot.slane %v2017, 4
        %v2073 = vrot.slane %v2021, 4
        %v2074 = vsel %vm2071, %v2072, %v2073
        %v2075 = vrot.slane %v2019, 4
        %v2076 = vrot.slane %v2023, 4
        %v2077 = vsel %vm2071, %v2075, %v2076
        %v2078 = vrot.slane %v2027, 4
        %v2079 = vsel %vm2071, %v2073, %v2078
        %v2080 = vrot.slane %v2029, 4
        %v2081 = vsel %vm2071, %v2076, %v2080
        %v2082 = vrot.slane %v2031, 4
        %v2083 = vsel %vm2071, %v2078, %v2082
        %v2084 = vrot.slane %v2033, 4
        %v2085 = vsel %vm2071, %v2080, %v2084
        %v2086 = vrot.slane %v2037, 4
        %v2087 = vrot.slane %v2041, 4
        %v2088 = vsel %vm2071, %v2086, %v2087
        %v2089 = vrot.slane %v2039, 4
        %v2090 = vrot.slane %v2043, 4
        %v2091 = vsel %vm2071, %v2089, %v2090
        %v2092 = vrot.slane %v2047, 4
        %v2093 = vsel %vm2071, %v2087, %v2092
        %v2094 = vrot.slane %v2049, 4
        %v2095 = vsel %vm2071, %v2090, %v2094
        %v2096 = vrot.slane %v2051, 4
        %v2097 = vsel %vm2071, %v2092, %v2096
        %v2098 = vrot.slane %v2053, 4
        %v2099 = vsel %vm2071, %v2094, %v2098
        %v2116 = vadd.f32 %v1773, %v2074
        %v2117 = vadd.f32 %v1774, %v2077
        %v2118 = vadd.f32 %v1775, %v2079
        %v2119 = vadd.f32 %v1776, %v2081
        %v2120 = vadd.f32 %v1777, %v2083
        %v2121 = vadd.f32 %v1778, %v2085
        %v2122 = vadd.f32 %v1779, %v2082
        %v2123 = vadd.f32 %v1780, %v2084
        %v2124 = vadd.f32 %v1781, %v2088
        %v2125 = vadd.f32 %v1782, %v2091
        %v2126 = vadd.f32 %v1783, %v2093
        %v2127 = vadd.f32 %v1784, %v2095
        %v2128 = vadd.f32 %v1785, %v2097
        %v2129 = vadd.f32 %v1786, %v2099
        %v2130 = vadd.f32 %v1787, %v2096
        %v2131 = vadd.f32 %v1788, %v2098
        %v2132 = vld [vmem:[%s2] sm:$0x3]
        %v2134 = vlaneseq
        %v2135 = vshrl.u32 %v2134, 7
        %v2136 = vsub.s32 0, %v2135
        %v2137 = vrot.slane %v2132, %v2136
        %v2138 = vlaneseq
        %v2139 = vshrl.u32 %v2138, 7
        %v2140 = vsub.s32 1, %v2139
        %v2141 = vrot.slane %v2132, %v2140
        %v2144 = vadd.f32 %v2116, %v2137
        %v2145 = vadd.f32 %v2117, %v2141
        %v2146 = vadd.f32 %v2118, %v2137
        %v2147 = vadd.f32 %v2119, %v2141
        %v2148 = vadd.f32 %v2120, %v2137
        %v2149 = vadd.f32 %v2121, %v2141
        %v2150 = vadd.f32 %v2122, %v2137
        %v2151 = vadd.f32 %v2123, %v2141
        %v2152 = vadd.f32 %v2124, %v2137
        %v2153 = vadd.f32 %v2125, %v2141
        %v2154 = vadd.f32 %v2126, %v2137
        %v2155 = vadd.f32 %v2127, %v2141
        %v2156 = vadd.f32 %v2128, %v2137
        %v2157 = vadd.f32 %v2129, %v2141
        %v2158 = vadd.f32 %v2130, %v2137
        %v2159 = vadd.f32 %v2131, %v2141
        %v2160 = vmax.f32 %v2144, 0.0
        %v2161 = vmax.f32 %v2145, 0.0
        %v2162 = vmax.f32 %v2146, 0.0
        %v2163 = vmax.f32 %v2147, 0.0
        %v2164 = vmax.f32 %v2148, 0.0
        %v2165 = vmax.f32 %v2149, 0.0
        %v2166 = vmax.f32 %v2150, 0.0
        %v2167 = vmax.f32 %v2151, 0.0
        %v2168 = vmax.f32 %v2152, 0.0
        %v2169 = vmax.f32 %v2153, 0.0
        %v2170 = vmax.f32 %v2154, 0.0
        %v2171 = vmax.f32 %v2155, 0.0
        %v2172 = vmax.f32 %v2156, 0.0
        %v2173 = vmax.f32 %v2157, 0.0
        %v2174 = vmax.f32 %v2158, 0.0
        %v2175 = vmax.f32 %v2159, 0.0
        %v2176 = vmul.f32 %v2160, 8.0
        %v2177 = vmul.f32 %v2161, 8.0
        %v2178 = vmul.f32 %v2162, 8.0
        %v2179 = vmul.f32 %v2163, 8.0
        %v2180 = vmul.f32 %v2164, 8.0
        %v2181 = vmul.f32 %v2165, 8.0
        %v2182 = vmul.f32 %v2166, 8.0
        %v2183 = vmul.f32 %v2167, 8.0
        %v2184 = vmul.f32 %v2168, 8.0
        %v2185 = vmul.f32 %v2169, 8.0
        %v2186 = vmul.f32 %v2170, 8.0
        %v2187 = vmul.f32 %v2171, 8.0
        %v2188 = vmul.f32 %v2172, 8.0
        %v2189 = vmul.f32 %v2173, 8.0
        %v2190 = vmul.f32 %v2174, 8.0
        %v2191 = vmul.f32 %v2175, 8.0
        %v2192 = vround.ne.pseudo %v2176
        %v2193 = vround.ne.pseudo %v2177
        %v2194 = vround.ne.pseudo %v2178
        %v2195 = vround.ne.pseudo %v2179
        %v2196 = vround.ne.pseudo %v2180
        %v2197 = vround.ne.pseudo %v2181
        %v2198 = vround.ne.pseudo %v2182
        %v2199 = vround.ne.pseudo %v2183
        %v2200 = vround.ne.pseudo %v2184
        %v2201 = vround.ne.pseudo %v2185
        %v2202 = vround.ne.pseudo %v2186
        %v2203 = vround.ne.pseudo %v2187
        %v2204 = vround.ne.pseudo %v2188
        %v2205 = vround.ne.pseudo %v2189
        %v2206 = vround.ne.pseudo %v2190
        %v2207 = vround.ne.pseudo %v2191
        %v2208 = vmax.f32 %v2192, -127.0
        %v2209 = vmax.f32 %v2193, -127.0
        %v2210 = vmax.f32 %v2194, -127.0
        %v2211 = vmax.f32 %v2195, -127.0
        %v2212 = vmax.f32 %v2196, -127.0
        %v2213 = vmax.f32 %v2197, -127.0
        %v2214 = vmax.f32 %v2198, -127.0
        %v2215 = vmax.f32 %v2199, -127.0
        %v2216 = vmax.f32 %v2200, -127.0
        %v2217 = vmax.f32 %v2201, -127.0
        %v2218 = vmax.f32 %v2202, -127.0
        %v2219 = vmax.f32 %v2203, -127.0
        %v2220 = vmax.f32 %v2204, -127.0
        %v2221 = vmax.f32 %v2205, -127.0
        %v2222 = vmax.f32 %v2206, -127.0
        %v2223 = vmax.f32 %v2207, -127.0
        %v2224 = vmin.f32 %v2208, 127.0
        %v2225 = vmin.f32 %v2209, 127.0
        %v2226 = vmin.f32 %v2210, 127.0
        %v2227 = vmin.f32 %v2211, 127.0
        %v2228 = vmin.f32 %v2212, 127.0
        %v2229 = vmin.f32 %v2213, 127.0
        %v2230 = vmin.f32 %v2214, 127.0
        %v2231 = vmin.f32 %v2215, 127.0
        %v2232 = vmin.f32 %v2216, 127.0
        %v2233 = vmin.f32 %v2217, 127.0
        %v2234 = vmin.f32 %v2218, 127.0
        %v2235 = vmin.f32 %v2219, 127.0
        %v2236 = vmin.f32 %v2220, 127.0
        %v2237 = vmin.f32 %v2221, 127.0
        %v2238 = vmin.f32 %v2222, 127.0
        %v2239 = vmin.f32 %v2223, 127.0
        %v2240 = vmul.f32 %v2224, 0.125
        %v2241 = vmul.f32 %v2225, 0.125
        %v2242 = vmul.f32 %v2226, 0.125
        %v2243 = vmul.f32 %v2227, 0.125
        %v2244 = vmul.f32 %v2228, 0.125
        %v2245 = vmul.f32 %v2229, 0.125
        %v2246 = vmul.f32 %v2230, 0.125
        %v2247 = vmul.f32 %v2231, 0.125
        %v2248 = vmul.f32 %v2232, 0.125
        %v2249 = vmul.f32 %v2233, 0.125
        %v2250 = vmul.f32 %v2234, 0.125
        %v2251 = vmul.f32 %v2235, 0.125
        %v2252 = vmul.f32 %v2236, 0.125
        %v2253 = vmul.f32 %v2237, 0.125
        %v2254 = vmul.f32 %v2238, 0.125
        %v2255 = vmul.f32 %v2239, 0.125
        %2272 = vrot.lane.b32.xlu0 %v2240, 120
        %v2273 = vpop.permute.xlu0 %2272
        %2274 = vrot.lane.b32.xlu0 %v2241, 120
        %v2275 = vpop.permute.xlu0 %2274
        %2276 = vrot.lane.b32.xlu0 %v2242, 120
        %v2277 = vpop.permute.xlu0 %2276
        %2278 = vrot.lane.b32.xlu0 %v2243, 120
        %v2279 = vpop.permute.xlu0 %2278
        %2280 = vrot.lane.b32.xlu0 %v2244, 120
        %v2281 = vpop.permute.xlu0 %2280
        %2282 = vrot.lane.b32.xlu0 %v2245, 120
        %v2283 = vpop.permute.xlu0 %2282
        %2284 = vrot.lane.b32.xlu0 %v2246, 120
        %v2285 = vpop.permute.xlu0 %2284
        %2286 = vrot.lane.b32.xlu0 %v2247, 120
        %v2287 = vpop.permute.xlu0 %2286
        %2288 = vrot.lane.b32.xlu0 %v2248, 120
        %v2289 = vpop.permute.xlu0 %2288
        %2290 = vrot.lane.b32.xlu0 %v2249, 120
        %v2291 = vpop.permute.xlu0 %2290
        %2292 = vrot.lane.b32.xlu0 %v2250, 120
        %v2293 = vpop.permute.xlu0 %2292
        %2294 = vrot.lane.b32.xlu0 %v2251, 120
        %v2295 = vpop.permute.xlu0 %2294
        %2296 = vrot.lane.b32.xlu0 %v2252, 120
        %v2297 = vpop.permute.xlu0 %2296
        %2298 = vrot.lane.b32.xlu0 %v2253, 120
        %v2299 = vpop.permute.xlu0 %2298
        %2300 = vrot.lane.b32.xlu0 %v2254, 120
        %v2301 = vpop.permute.xlu0 %2300
        %2302 = vrot.lane.b32.xlu0 %v2255, 120
        %v2303 = vpop.permute.xlu0 %2302
        %vm2304 = vcmask 982016
        %v2305 = vsel %vm2304, %v2273, %v2275
        %v2306 = vsel %vm2304, %v2277, %v2279
        %v2307 = vsel %vm2304, %v2281, %v2283
        %v2308 = vsel %vm2304, %v2285, %v2287
        %v2309 = vsel %vm2304, %v2289, %v2291
        %v2310 = vsel %vm2304, %v2293, %v2295
        %v2311 = vsel %vm2304, %v2297, %v2299
        %v2312 = vsel %vm2304, %v2301, %v2303
        %v2329 = vsel %vm2304, %v2275, 0.0
        %v2330 = vsel %vm2304, %v2279, 0.0
        %v2331 = vsel %vm2304, %v2283, 0.0
        %v2332 = vsel %vm2304, %v2287, 0.0
        %v2333 = vsel %vm2304, %v2291, 0.0
        %v2334 = vsel %vm2304, %v2295, 0.0
        %v2335 = vsel %vm2304, %v2299, 0.0
        %v2336 = vsel %vm2304, %v2303, 0.0
        %v2337 = vmax.f32 %v2240, %v2305
        %v2338 = vmax.f32 %v2241, %v2329
        %v2339 = vmax.f32 %v2242, %v2306
        %v2340 = vmax.f32 %v2243, %v2330
        %v2341 = vmax.f32 %v2244, %v2307
        %v2342 = vmax.f32 %v2245, %v2331
        %v2343 = vmax.f32 %v2246, %v2308
        %v2344 = vmax.f32 %v2247, %v2332
        %v2345 = vmax.f32 %v2248, %v2309
        %v2346 = vmax.f32 %v2249, %v2333
        %v2347 = vmax.f32 %v2250, %v2310
        %v2348 = vmax.f32 %v2251, %v2334
        %v2349 = vmax.f32 %v2252, %v2311
        %v2350 = vmax.f32 %v2253, %v2335
        %v2351 = vmax.f32 %v2254, %v2312
        %v2352 = vmax.f32 %v2255, %v2336
        %v2369 = vrot.slane %v2337, 1
        %v2370 = vrot.slane %v2339, 1
        %v2371 = vsel %vm1042, %v2369, %v2370
        %v2372 = vrot.slane %v2338, 1
        %v2373 = vrot.slane %v2340, 1
        %v2374 = vsel %vm1042, %v2372, %v2373
        %v2375 = vrot.slane %v2341, 1
        %v2376 = vsel %vm1042, %v2370, %v2375
        %v2377 = vrot.slane %v2342, 1
        %v2378 = vsel %vm1042, %v2373, %v2377
        %v2379 = vrot.slane %v2343, 1
        %v2380 = vsel %vm1042, %v2375, %v2379
        %v2381 = vrot.slane %v2344, 1
        %v2382 = vsel %vm1042, %v2377, %v2381
        %v2383 = vrot.slane %v2345, 1
        %v2384 = vrot.slane %v2347, 1
        %v2385 = vsel %vm1042, %v2383, %v2384
        %v2386 = vrot.slane %v2346, 1
        %v2387 = vrot.slane %v2348, 1
        %v2388 = vsel %vm1042, %v2386, %v2387
        %v2389 = vrot.slane %v2349, 1
        %v2390 = vsel %vm1042, %v2384, %v2389
        %v2391 = vrot.slane %v2350, 1
        %v2392 = vsel %vm1042, %v2387, %v2391
        %v2393 = vrot.slane %v2351, 1
        %v2394 = vsel %vm1042, %v2389, %v2393
        %v2395 = vrot.slane %v2352, 1
        %v2396 = vsel %vm1042, %v2391, %v2395
        %v2413 = vmax.f32 %v2337, %v2371
        %v2414 = vmax.f32 %v2338, %v2374
        %v2415 = vmax.f32 %v2339, %v2376
        %v2416 = vmax.f32 %v2340, %v2378
        %v2417 = vmax.f32 %v2341, %v2380
        %v2418 = vmax.f32 %v2342, %v2382
        %v2419 = vmax.f32 %v2343, %v2379
        %v2420 = vmax.f32 %v2344, %v2381
        %v2421 = vmax.f32 %v2345, %v2385
        %v2422 = vmax.f32 %v2346, %v2388
        %v2423 = vmax.f32 %v2347, %v2390
        %v2424 = vmax.f32 %v2348, %v2392
        %v2425 = vmax.f32 %v2349, %v2394
        %v2426 = vmax.f32 %v2350, %v2396
        %v2427 = vmax.f32 %v2351, %v2393
        %v2428 = vmax.f32 %v2352, %v2395
        %vm2429 = vcmask 1042432
        %v2430 = vsel %vm2429, %v2419, 0.0
        %v2431 = vsel %vm2429, %v2420, 0.0
        %v2432 = vsel %vm2429, %v2427, 0.0
        %v2433 = vsel %vm2429, %v2428, 0.0
        %v2434 = vpack.c.bf16 %v2415, %v2413
        %v2435 = vpack.c.bf16 %v2416, %v2414
        %v2436 = vpack.c.bf16 %v2430, %v2417
        %v2437 = vpack.c.bf16 %v2431, %v2418
        %v2438 = vpack.c.bf16 %v2423, %v2421
        %v2439 = vpack.c.bf16 %v2424, %v2422
        %v2440 = vpack.c.bf16 %v2432, %v2425
        %v2441 = vpack.c.bf16 %v2433, %v2426
        %v2442 = vld [vmem:[%s3] sm:$0xff]
        %v2443 = vld [vmem:[%s3 + $0x8] sm:$0xff]
        %v2444 = vld [vmem:[%s3 + $0x10] sm:$0xff]
        %v2445 = vld [vmem:[%s3 + $0x18] sm:$0xff]
        %v2446 = vld [vmem:[%s3 + $0x20] sm:$0xff]
        %v2447 = vld [vmem:[%s3 + $0x28] sm:$0xff]
        %v2448 = vld [vmem:[%s3 + $0x30] sm:$0xff]
        %v2449 = vld [vmem:[%s3 + $0x38] sm:$0xff]
        %v2450 = vld [vmem:[%s3 + $0x40] sm:$0xff]
        %v2451 = vld [vmem:[%s3 + $0x48] sm:$0xff]
        %v2452 = vld [vmem:[%s3 + $0x50] sm:$0xff]
        %v2453 = vld [vmem:[%s3 + $0x58] sm:$0xff]
        %v2454 = vld [vmem:[%s3 + $0x60] sm:$0xff]
        %v2455 = vld [vmem:[%s3 + $0x68] sm:$0xff]
        %v2456 = vld [vmem:[%s3 + $0x70] sm:$0xff]
        %v2457 = vld [vmem:[%s3 + $0x78] sm:$0xff]
        %v2458 = vld [vmem:[%s3 + $0x80] sm:$0xff]
        %v2459 = vld [vmem:[%s3 + $0x88] sm:$0xff]
        %v2460 = vld [vmem:[%s3 + $0x90] sm:$0xff]
        %v2461 = vld [vmem:[%s3 + $0x98] sm:$0xff]
        %v2462 = vld [vmem:[%s3 + $0xa0] sm:$0xff]
        %v2463 = vld [vmem:[%s3 + $0xa8] sm:$0xff]
        %v2464 = vld [vmem:[%s3 + $0xb0] sm:$0xff]
        %v2465 = vld [vmem:[%s3 + $0xb8] sm:$0xff]
        %v2466 = vld [vmem:[%s3 + $0xc0] sm:$0xff]
        %v2467 = vld [vmem:[%s3 + $0xc8] sm:$0xff]
        %v2468 = vld [vmem:[%s3 + $0xd0] sm:$0xff]
        %v2469 = vld [vmem:[%s3 + $0xd8] sm:$0xff]
        %v2470 = vld [vmem:[%s3 + $0xe0] sm:$0xff]
        %v2471 = vld [vmem:[%s3 + $0xe8] sm:$0xff]
        %v2472 = vld [vmem:[%s3 + $0xf0] sm:$0xff]
        %v2473 = vld [vmem:[%s3 + $0xf8] sm:$0xff]
        %v2506 = vunpack.c.l.b16 %v2442
        %v2507 = vunpack.c.h.b16 %v2442
        %v2508 = vunpack.c.l.b16 %v2443
        %v2509 = vunpack.c.h.b16 %v2443
        %v2510 = vunpack.c.l.b16 %v2444
        %v2511 = vunpack.c.h.b16 %v2444
        %v2512 = vunpack.c.l.b16 %v2445
        %v2513 = vunpack.c.h.b16 %v2445
        %v2514 = vunpack.c.l.b16 %v2446
        %v2515 = vunpack.c.h.b16 %v2446
        %v2516 = vunpack.c.l.b16 %v2447
        %v2517 = vunpack.c.h.b16 %v2447
        %v2518 = vunpack.c.l.b16 %v2448
        %v2519 = vunpack.c.h.b16 %v2448
        %v2520 = vunpack.c.l.b16 %v2449
        %v2521 = vunpack.c.h.b16 %v2449
        %v2522 = vunpack.c.l.b16 %v2450
        %v2523 = vunpack.c.h.b16 %v2450
        %v2524 = vunpack.c.l.b16 %v2451
        %v2525 = vunpack.c.h.b16 %v2451
        %v2526 = vunpack.c.l.b16 %v2452
        %v2527 = vunpack.c.h.b16 %v2452
        %v2528 = vunpack.c.l.b16 %v2453
        %v2529 = vunpack.c.h.b16 %v2453
        %v2530 = vunpack.c.l.b16 %v2454
        %v2531 = vunpack.c.h.b16 %v2454
        %v2532 = vunpack.c.l.b16 %v2455
        %v2533 = vunpack.c.h.b16 %v2455
        %v2534 = vunpack.c.l.b16 %v2456
        %v2535 = vunpack.c.h.b16 %v2456
        %v2536 = vunpack.c.l.b16 %v2457
        %v2537 = vunpack.c.h.b16 %v2457
        %v2538 = vunpack.c.l.b16 %v2458
        %v2539 = vunpack.c.h.b16 %v2458
        %v2540 = vunpack.c.l.b16 %v2459
        %v2541 = vunpack.c.h.b16 %v2459
        %v2542 = vunpack.c.l.b16 %v2460
        %v2543 = vunpack.c.h.b16 %v2460
        %v2544 = vunpack.c.l.b16 %v2461
        %v2545 = vunpack.c.h.b16 %v2461
        %v2546 = vunpack.c.l.b16 %v2462
        %v2547 = vunpack.c.h.b16 %v2462
        %v2548 = vunpack.c.l.b16 %v2463
        %v2549 = vunpack.c.h.b16 %v2463
        %v2550 = vunpack.c.l.b16 %v2464
        %v2551 = vunpack.c.h.b16 %v2464
        %v2552 = vunpack.c.l.b16 %v2465
        %v2553 = vunpack.c.h.b16 %v2465
        %v2554 = vunpack.c.l.b16 %v2466
        %v2555 = vunpack.c.h.b16 %v2466
        %v2556 = vunpack.c.l.b16 %v2467
        %v2557 = vunpack.c.h.b16 %v2467
        %v2558 = vunpack.c.l.b16 %v2468
        %v2559 = vunpack.c.h.b16 %v2468
        %v2560 = vunpack.c.l.b16 %v2469
        %v2561 = vunpack.c.h.b16 %v2469
        %v2562 = vunpack.c.l.b16 %v2470
        %v2563 = vunpack.c.h.b16 %v2470
        %v2564 = vunpack.c.l.b16 %v2471
        %v2565 = vunpack.c.h.b16 %v2471
        %v2566 = vunpack.c.l.b16 %v2472
        %v2567 = vunpack.c.h.b16 %v2472
        %v2568 = vunpack.c.l.b16 %v2473
        %v2569 = vunpack.c.h.b16 %v2473
        %v2570 = vpack.c.b16 %v2508, %v2506
        %v2571 = vpack.c.b16 %v2509, %v2507
        %v2572 = vpack.c.b16 %v2512, %v2510
        %v2573 = vpack.c.b16 %v2513, %v2511
        %v2574 = vpack.c.b16 %v2516, %v2514
        %v2575 = vpack.c.b16 %v2517, %v2515
        %v2576 = vpack.c.b16 %v2520, %v2518
        %v2577 = vpack.c.b16 %v2521, %v2519
        %v2578 = vpack.c.b16 %v2524, %v2522
        %v2579 = vpack.c.b16 %v2525, %v2523
        %v2580 = vpack.c.b16 %v2528, %v2526
        %v2581 = vpack.c.b16 %v2529, %v2527
        %v2582 = vpack.c.b16 %v2532, %v2530
        %v2583 = vpack.c.b16 %v2533, %v2531
        %v2584 = vpack.c.b16 %v2536, %v2534
        %v2585 = vpack.c.b16 %v2537, %v2535
        %v2586 = vpack.c.b16 %v2540, %v2538
        %v2587 = vpack.c.b16 %v2541, %v2539
        %v2588 = vpack.c.b16 %v2544, %v2542
        %v2589 = vpack.c.b16 %v2545, %v2543
        %v2590 = vpack.c.b16 %v2548, %v2546
        %v2591 = vpack.c.b16 %v2549, %v2547
        %v2592 = vpack.c.b16 %v2552, %v2550
        %v2593 = vpack.c.b16 %v2553, %v2551
        %v2594 = vpack.c.b16 %v2556, %v2554
        %v2595 = vpack.c.b16 %v2557, %v2555
        %v2596 = vpack.c.b16 %v2560, %v2558
        %v2597 = vpack.c.b16 %v2561, %v2559
        %v2598 = vpack.c.b16 %v2564, %v2562
        %v2599 = vpack.c.b16 %v2565, %v2563
        %v2600 = vpack.c.b16 %v2568, %v2566
        %v2601 = vpack.c.b16 %v2569, %v2567
        %2634 = vmatprep.subr.bf16.mxu0 %v2585
        %2635 = vmatpush1.bf16.msra.mxu0 %v2584
        %2636 = vmatprep.subr.bf16.mxu0 %v2583
        %2637 = vmatpush1.bf16.msra.mxu0 %v2582
        %2638 = vmatprep.subr.bf16.mxu0 %v2581
        %2639 = vmatpush1.bf16.msra.mxu0 %v2580
        %2640 = vmatprep.subr.bf16.mxu0 %v2579
        %2641 = vmatpush1.bf16.msra.mxu0 %v2578
        %2642 = vmatprep.subr.bf16.mxu0 %v2577
        %2643 = vmatpush1.bf16.msra.mxu0 %v2576
        %2644 = vmatprep.subr.bf16.mxu0 %v2575
        %2645 = vmatpush1.bf16.msra.mxu0 %v2574
        %2646 = vmatprep.subr.bf16.mxu0 %v2573
        %2647 = vmatpush1.bf16.msra.mxu0 %v2572
        %2648 = vmatprep.subr.bf16.mxu0 %v2571
        %2649 = vmatpush1.bf16.msra.mxu0 %v2570
        %2650 = vmatprep.subr.bf16.mxu0 %v2601
        %2651 = vmatpush2.bf16.msra.mxu0 %v2600
        %2652 = vmatprep.subr.bf16.mxu0 %v2599
        %2653 = vmatpush2.bf16.msra.mxu0 %v2598
        %2654 = vmatprep.subr.bf16.mxu0 %v2597
        %2655 = vmatpush2.bf16.msra.mxu0 %v2596
        %2656 = vmatprep.subr.bf16.mxu0 %v2595
        %2657 = vmatpush2.bf16.msra.mxu0 %v2594
        %2658 = vmatprep.subr.bf16.mxu0 %v2593
        %2659 = vmatpush2.bf16.msra.mxu0 %v2592
        %2660 = vmatprep.subr.bf16.mxu0 %v2591
        %2661 = vmatpush2.bf16.msra.mxu0 %v2590
        %2662 = vmatprep.subr.bf16.mxu0 %v2589
        %2663 = vmatpush2.bf16.msra.mxu0 %v2588
        %2664 = vmatprep.subr.bf16.mxu0 %v2587
        %2665 = vmatpush2.bf16.msra.mxu0 %v2586
        %2666 = vmatprep.mubr.bf16.mxu0 %v2435
        %2667 = vmatmul.mubr.bf16.gmra.mxu0 %v2434
        %v2668 = vpop.f32.mrf.mxu0
        %v2669 = vadd.f32 0.0, %v2668
        %v2670 = vpop.f32.mrf.mxu0
        %v2671 = vadd.f32 0.0, %v2670
        %v2672 = vpop.f32.mrf.mxu0
        %v2673 = vadd.f32 0.0, %v2672
        %v2674 = vpop.f32.mrf.mxu0
        %v2675 = vadd.f32 0.0, %v2674
        %2676 = vmatprep.mubr.bf16.mxu0 %v2437
        %2677 = vmatmul.mubr.bf16.gmra.mxu0 %v2436
        %v2678 = vpop.f32.mrf.mxu0
        %v2679 = vadd.f32 0.0, %v2678
        %v2680 = vpop.f32.mrf.mxu0
        %v2681 = vadd.f32 0.0, %v2680
        %v2682 = vpop.f32.mrf.mxu0
        %v2683 = vpop.f32.mrf.mxu0
        %2684 = vmatprep.mubr.bf16.mxu0 %v2439
        %2685 = vmatmul.mubr.bf16.gmra.mxu0 %v2438
        %v2686 = vpop.f32.mrf.mxu0
        %v2687 = vadd.f32 0.0, %v2686
        %v2688 = vpop.f32.mrf.mxu0
        %v2689 = vadd.f32 0.0, %v2688
        %v2690 = vpop.f32.mrf.mxu0
        %v2691 = vadd.f32 0.0, %v2690
        %v2692 = vpop.f32.mrf.mxu0
        %v2693 = vadd.f32 0.0, %v2692
        %2694 = vmatprep.mubr.bf16.mxu0 %v2441
        %2695 = vmatmul.mubr.bf16.gmra.mxu0 %v2440
        %v2696 = vpop.f32.mrf.mxu0
        %v2697 = vadd.f32 0.0, %v2696
        %v2698 = vpop.f32.mrf.mxu0
        %v2699 = vadd.f32 0.0, %v2698
        %v2700 = vpop.f32.mrf.mxu0
        %v2701 = vpop.f32.mrf.mxu0
        %2702 = vdwg.mxu0
        %s2703 = scalar_lea.vmem %s3, 256
        %v2704 = vld [vmem:[%s2703] sm:$0xff]
        %v2705 = vld [vmem:[%s2703 + $0x8] sm:$0xff]
        %v2706 = vld [vmem:[%s2703 + $0x10] sm:$0xff]
        %v2707 = vld [vmem:[%s2703 + $0x18] sm:$0xff]
        %v2708 = vld [vmem:[%s2703 + $0x20] sm:$0xff]
        %v2709 = vld [vmem:[%s2703 + $0x28] sm:$0xff]
        %v2710 = vld [vmem:[%s2703 + $0x30] sm:$0xff]
        %v2711 = vld [vmem:[%s2703 + $0x38] sm:$0xff]
        %v2712 = vld [vmem:[%s2703 + $0x40] sm:$0xff]
        %v2713 = vld [vmem:[%s2703 + $0x48] sm:$0xff]
        %v2714 = vld [vmem:[%s2703 + $0x50] sm:$0xff]
        %v2715 = vld [vmem:[%s2703 + $0x58] sm:$0xff]
        %v2716 = vld [vmem:[%s2703 + $0x60] sm:$0xff]
        %v2717 = vld [vmem:[%s2703 + $0x68] sm:$0xff]
        %v2718 = vld [vmem:[%s2703 + $0x70] sm:$0xff]
        %v2719 = vld [vmem:[%s2703 + $0x78] sm:$0xff]
        %v2720 = vld [vmem:[%s2703 + $0x80] sm:$0xff]
        %v2721 = vld [vmem:[%s2703 + $0x88] sm:$0xff]
        %v2722 = vld [vmem:[%s2703 + $0x90] sm:$0xff]
        %v2723 = vld [vmem:[%s2703 + $0x98] sm:$0xff]
        %v2724 = vld [vmem:[%s2703 + $0xa0] sm:$0xff]
        %v2725 = vld [vmem:[%s2703 + $0xa8] sm:$0xff]
        %v2726 = vld [vmem:[%s2703 + $0xb0] sm:$0xff]
        %v2727 = vld [vmem:[%s2703 + $0xb8] sm:$0xff]
        %v2728 = vld [vmem:[%s2703 + $0xc0] sm:$0xff]
        %v2729 = vld [vmem:[%s2703 + $0xc8] sm:$0xff]
        %v2730 = vld [vmem:[%s2703 + $0xd0] sm:$0xff]
        %v2731 = vld [vmem:[%s2703 + $0xd8] sm:$0xff]
        %v2732 = vld [vmem:[%s2703 + $0xe0] sm:$0xff]
        %v2733 = vld [vmem:[%s2703 + $0xe8] sm:$0xff]
        %v2734 = vld [vmem:[%s2703 + $0xf0] sm:$0xff]
        %v2735 = vld [vmem:[%s2703 + $0xf8] sm:$0xff]
        %v2768 = vunpack.c.l.b16 %v2704
        %v2769 = vunpack.c.h.b16 %v2704
        %v2770 = vunpack.c.l.b16 %v2705
        %v2771 = vunpack.c.h.b16 %v2705
        %v2772 = vunpack.c.l.b16 %v2706
        %v2773 = vunpack.c.h.b16 %v2706
        %v2774 = vunpack.c.l.b16 %v2707
        %v2775 = vunpack.c.h.b16 %v2707
        %v2776 = vunpack.c.l.b16 %v2708
        %v2777 = vunpack.c.h.b16 %v2708
        %v2778 = vunpack.c.l.b16 %v2709
        %v2779 = vunpack.c.h.b16 %v2709
        %v2780 = vunpack.c.l.b16 %v2710
        %v2781 = vunpack.c.h.b16 %v2710
        %v2782 = vunpack.c.l.b16 %v2711
        %v2783 = vunpack.c.h.b16 %v2711
        %v2784 = vunpack.c.l.b16 %v2712
        %v2785 = vunpack.c.h.b16 %v2712
        %v2786 = vunpack.c.l.b16 %v2713
        %v2787 = vunpack.c.h.b16 %v2713
        %v2788 = vunpack.c.l.b16 %v2714
        %v2789 = vunpack.c.h.b16 %v2714
        %v2790 = vunpack.c.l.b16 %v2715
        %v2791 = vunpack.c.h.b16 %v2715
        %v2792 = vunpack.c.l.b16 %v2716
        %v2793 = vunpack.c.h.b16 %v2716
        %v2794 = vunpack.c.l.b16 %v2717
        %v2795 = vunpack.c.h.b16 %v2717
        %v2796 = vunpack.c.l.b16 %v2718
        %v2797 = vunpack.c.h.b16 %v2718
        %v2798 = vunpack.c.l.b16 %v2719
        %v2799 = vunpack.c.h.b16 %v2719
        %v2800 = vunpack.c.l.b16 %v2720
        %v2801 = vunpack.c.h.b16 %v2720
        %v2802 = vunpack.c.l.b16 %v2721
        %v2803 = vunpack.c.h.b16 %v2721
        %v2804 = vunpack.c.l.b16 %v2722
        %v2805 = vunpack.c.h.b16 %v2722
        %v2806 = vunpack.c.l.b16 %v2723
        %v2807 = vunpack.c.h.b16 %v2723
        %v2808 = vunpack.c.l.b16 %v2724
        %v2809 = vunpack.c.h.b16 %v2724
        %v2810 = vunpack.c.l.b16 %v2725
        %v2811 = vunpack.c.h.b16 %v2725
        %v2812 = vunpack.c.l.b16 %v2726
        %v2813 = vunpack.c.h.b16 %v2726
        %v2814 = vunpack.c.l.b16 %v2727
        %v2815 = vunpack.c.h.b16 %v2727
        %v2816 = vunpack.c.l.b16 %v2728
        %v2817 = vunpack.c.h.b16 %v2728
        %v2818 = vunpack.c.l.b16 %v2729
        %v2819 = vunpack.c.h.b16 %v2729
        %v2820 = vunpack.c.l.b16 %v2730
        %v2821 = vunpack.c.h.b16 %v2730
        %v2822 = vunpack.c.l.b16 %v2731
        %v2823 = vunpack.c.h.b16 %v2731
        %v2824 = vunpack.c.l.b16 %v2732
        %v2825 = vunpack.c.h.b16 %v2732
        %v2826 = vunpack.c.l.b16 %v2733
        %v2827 = vunpack.c.h.b16 %v2733
        %v2828 = vunpack.c.l.b16 %v2734
        %v2829 = vunpack.c.h.b16 %v2734
        %v2830 = vunpack.c.l.b16 %v2735
        %v2831 = vunpack.c.h.b16 %v2735
        %v2832 = vpack.c.b16 %v2770, %v2768
        %v2833 = vpack.c.b16 %v2771, %v2769
        %v2834 = vpack.c.b16 %v2774, %v2772
        %v2835 = vpack.c.b16 %v2775, %v2773
        %v2836 = vpack.c.b16 %v2778, %v2776
        %v2837 = vpack.c.b16 %v2779, %v2777
        %v2838 = vpack.c.b16 %v2782, %v2780
        %v2839 = vpack.c.b16 %v2783, %v2781
        %v2840 = vpack.c.b16 %v2786, %v2784
        %v2841 = vpack.c.b16 %v2787, %v2785
        %v2842 = vpack.c.b16 %v2790, %v2788
        %v2843 = vpack.c.b16 %v2791, %v2789
        %v2844 = vpack.c.b16 %v2794, %v2792
        %v2845 = vpack.c.b16 %v2795, %v2793
        %v2846 = vpack.c.b16 %v2798, %v2796
        %v2847 = vpack.c.b16 %v2799, %v2797
        %v2848 = vpack.c.b16 %v2802, %v2800
        %v2849 = vpack.c.b16 %v2803, %v2801
        %v2850 = vpack.c.b16 %v2806, %v2804
        %v2851 = vpack.c.b16 %v2807, %v2805
        %v2852 = vpack.c.b16 %v2810, %v2808
        %v2853 = vpack.c.b16 %v2811, %v2809
        %v2854 = vpack.c.b16 %v2814, %v2812
        %v2855 = vpack.c.b16 %v2815, %v2813
        %v2856 = vpack.c.b16 %v2818, %v2816
        %v2857 = vpack.c.b16 %v2819, %v2817
        %v2858 = vpack.c.b16 %v2822, %v2820
        %v2859 = vpack.c.b16 %v2823, %v2821
        %v2860 = vpack.c.b16 %v2826, %v2824
        %v2861 = vpack.c.b16 %v2827, %v2825
        %v2862 = vpack.c.b16 %v2830, %v2828
        %v2863 = vpack.c.b16 %v2831, %v2829
        %2896 = vmatprep.subr.bf16.mxu0 %v2847
        %2897 = vmatpush1.bf16.msra.mxu0 %v2846
        %2898 = vmatprep.subr.bf16.mxu0 %v2845
        %2899 = vmatpush1.bf16.msra.mxu0 %v2844
        %2900 = vmatprep.subr.bf16.mxu0 %v2843
        %2901 = vmatpush1.bf16.msra.mxu0 %v2842
        %2902 = vmatprep.subr.bf16.mxu0 %v2841
        %2903 = vmatpush1.bf16.msra.mxu0 %v2840
        %2904 = vmatprep.subr.bf16.mxu0 %v2839
        %2905 = vmatpush1.bf16.msra.mxu0 %v2838
        %2906 = vmatprep.subr.bf16.mxu0 %v2837
        %2907 = vmatpush1.bf16.msra.mxu0 %v2836
        %2908 = vmatprep.subr.bf16.mxu0 %v2835
        %2909 = vmatpush1.bf16.msra.mxu0 %v2834
        %2910 = vmatprep.subr.bf16.mxu0 %v2833
        %2911 = vmatpush1.bf16.msra.mxu0 %v2832
        %2912 = vmatprep.subr.bf16.mxu0 %v2863
        %2913 = vmatpush2.bf16.msra.mxu0 %v2862
        %2914 = vmatprep.subr.bf16.mxu0 %v2861
        %2915 = vmatpush2.bf16.msra.mxu0 %v2860
        %2916 = vmatprep.subr.bf16.mxu0 %v2859
        %2917 = vmatpush2.bf16.msra.mxu0 %v2858
        %2918 = vmatprep.subr.bf16.mxu0 %v2857
        %2919 = vmatpush2.bf16.msra.mxu0 %v2856
        %2920 = vmatprep.subr.bf16.mxu0 %v2855
        %2921 = vmatpush2.bf16.msra.mxu0 %v2854
        %2922 = vmatprep.subr.bf16.mxu0 %v2853
        %2923 = vmatpush2.bf16.msra.mxu0 %v2852
        %2924 = vmatprep.subr.bf16.mxu0 %v2851
        %2925 = vmatpush2.bf16.msra.mxu0 %v2850
        %2926 = vmatprep.subr.bf16.mxu0 %v2849
        %2927 = vmatpush2.bf16.msra.mxu0 %v2848
        %2928 = vmatprep.mubr.bf16.mxu0 %v2435
        %2929 = vmatmul.mubr.bf16.gmra.mxu0 %v2434
        %v2930 = vpop.f32.mrf.mxu0
        %v2931 = vadd.f32 0.0, %v2930
        %v2932 = vpop.f32.mrf.mxu0
        %v2933 = vadd.f32 0.0, %v2932
        %v2934 = vpop.f32.mrf.mxu0
        %v2935 = vadd.f32 0.0, %v2934
        %v2936 = vpop.f32.mrf.mxu0
        %v2937 = vadd.f32 0.0, %v2936
        %2938 = vmatprep.mubr.bf16.mxu0 %v2437
        %2939 = vmatmul.mubr.bf16.gmra.mxu0 %v2436
        %v2940 = vpop.f32.mrf.mxu0
        %v2941 = vadd.f32 0.0, %v2940
        %v2942 = vpop.f32.mrf.mxu0
        %v2943 = vadd.f32 0.0, %v2942
        %v2944 = vpop.f32.mrf.mxu0
        %v2945 = vpop.f32.mrf.mxu0
        %2946 = vmatprep.mubr.bf16.mxu0 %v2439
        %2947 = vmatmul.mubr.bf16.gmra.mxu0 %v2438
        %v2948 = vpop.f32.mrf.mxu0
        %v2949 = vadd.f32 0.0, %v2948
        %v2950 = vpop.f32.mrf.mxu0
        %v2951 = vadd.f32 0.0, %v2950
        %v2952 = vpop.f32.mrf.mxu0
        %v2953 = vadd.f32 0.0, %v2952
        %v2954 = vpop.f32.mrf.mxu0
        %v2955 = vadd.f32 0.0, %v2954
        %2956 = vmatprep.mubr.bf16.mxu0 %v2441
        %2957 = vmatmul.mubr.bf16.gmra.mxu0 %v2440
        %v2958 = vpop.f32.mrf.mxu0
        %v2959 = vadd.f32 0.0, %v2958
        %v2960 = vpop.f32.mrf.mxu0
        %v2961 = vadd.f32 0.0, %v2960
        %v2962 = vpop.f32.mrf.mxu0
        %v2963 = vpop.f32.mrf.mxu0
        %2964 = vdwg.mxu0
        %v2977 = vrot.slane %v2931, 2
        %v2978 = vrot.slane %v2935, 2
        %v2979 = vsel %vm1385, %v2977, %v2978
        %v2980 = vrot.slane %v2933, 2
        %v2981 = vrot.slane %v2937, 2
        %v2982 = vsel %vm1385, %v2980, %v2981
        %v2983 = vrot.slane %v2941, 2
        %v2984 = vsel %vm1385, %v2978, %v2983
        %v2985 = vrot.slane %v2943, 2
        %v2986 = vsel %vm1385, %v2981, %v2985
        %v2987 = vrot.slane %v2949, 2
        %v2988 = vrot.slane %v2953, 2
        %v2989 = vsel %vm1385, %v2987, %v2988
        %v2990 = vrot.slane %v2951, 2
        %v2991 = vrot.slane %v2955, 2
        %v2992 = vsel %vm1385, %v2990, %v2991
        %v2993 = vrot.slane %v2959, 2
        %v2994 = vsel %vm1385, %v2988, %v2993
        %v2995 = vrot.slane %v2961, 2
        %v2996 = vsel %vm1385, %v2991, %v2995
        %v3009 = vadd.f32 %v2669, %v2979
        %v3010 = vadd.f32 %v2671, %v2982
        %v3011 = vadd.f32 %v2673, %v2984
        %v3012 = vadd.f32 %v2675, %v2986
        %v3013 = vadd.f32 %v2679, %v2983
        %v3014 = vadd.f32 %v2681, %v2985
        %v3015 = vadd.f32 %v2687, %v2989
        %v3016 = vadd.f32 %v2689, %v2992
        %v3017 = vadd.f32 %v2691, %v2994
        %v3018 = vadd.f32 %v2693, %v2996
        %v3019 = vadd.f32 %v2697, %v2993
        %v3020 = vadd.f32 %v2699, %v2995
        %s3021 = scalar_lea.vmem %s3, 512
        %v3022 = vld [vmem:[%s3021] sm:$0xff]
        %v3023 = vld [vmem:[%s3021 + $0x8] sm:$0xff]
        %v3024 = vld [vmem:[%s3021 + $0x10] sm:$0xff]
        %v3025 = vld [vmem:[%s3021 + $0x18] sm:$0xff]
        %v3026 = vld [vmem:[%s3021 + $0x20] sm:$0xff]
        %v3027 = vld [vmem:[%s3021 + $0x28] sm:$0xff]
        %v3028 = vld [vmem:[%s3021 + $0x30] sm:$0xff]
        %v3029 = vld [vmem:[%s3021 + $0x38] sm:$0xff]
        %v3030 = vld [vmem:[%s3021 + $0x40] sm:$0xff]
        %v3031 = vld [vmem:[%s3021 + $0x48] sm:$0xff]
        %v3032 = vld [vmem:[%s3021 + $0x50] sm:$0xff]
        %v3033 = vld [vmem:[%s3021 + $0x58] sm:$0xff]
        %v3034 = vld [vmem:[%s3021 + $0x60] sm:$0xff]
        %v3035 = vld [vmem:[%s3021 + $0x68] sm:$0xff]
        %v3036 = vld [vmem:[%s3021 + $0x70] sm:$0xff]
        %v3037 = vld [vmem:[%s3021 + $0x78] sm:$0xff]
        %v3038 = vld [vmem:[%s3021 + $0x80] sm:$0xff]
        %v3039 = vld [vmem:[%s3021 + $0x88] sm:$0xff]
        %v3040 = vld [vmem:[%s3021 + $0x90] sm:$0xff]
        %v3041 = vld [vmem:[%s3021 + $0x98] sm:$0xff]
        %v3042 = vld [vmem:[%s3021 + $0xa0] sm:$0xff]
        %v3043 = vld [vmem:[%s3021 + $0xa8] sm:$0xff]
        %v3044 = vld [vmem:[%s3021 + $0xb0] sm:$0xff]
        %v3045 = vld [vmem:[%s3021 + $0xb8] sm:$0xff]
        %v3046 = vld [vmem:[%s3021 + $0xc0] sm:$0xff]
        %v3047 = vld [vmem:[%s3021 + $0xc8] sm:$0xff]
        %v3048 = vld [vmem:[%s3021 + $0xd0] sm:$0xff]
        %v3049 = vld [vmem:[%s3021 + $0xd8] sm:$0xff]
        %v3050 = vld [vmem:[%s3021 + $0xe0] sm:$0xff]
        %v3051 = vld [vmem:[%s3021 + $0xe8] sm:$0xff]
        %v3052 = vld [vmem:[%s3021 + $0xf0] sm:$0xff]
        %v3053 = vld [vmem:[%s3021 + $0xf8] sm:$0xff]
        %v3086 = vunpack.c.l.b16 %v3022
        %v3087 = vunpack.c.h.b16 %v3022
        %v3088 = vunpack.c.l.b16 %v3023
        %v3089 = vunpack.c.h.b16 %v3023
        %v3090 = vunpack.c.l.b16 %v3024
        %v3091 = vunpack.c.h.b16 %v3024
        %v3092 = vunpack.c.l.b16 %v3025
        %v3093 = vunpack.c.h.b16 %v3025
        %v3094 = vunpack.c.l.b16 %v3026
        %v3095 = vunpack.c.h.b16 %v3026
        %v3096 = vunpack.c.l.b16 %v3027
        %v3097 = vunpack.c.h.b16 %v3027
        %v3098 = vunpack.c.l.b16 %v3028
        %v3099 = vunpack.c.h.b16 %v3028
        %v3100 = vunpack.c.l.b16 %v3029
        %v3101 = vunpack.c.h.b16 %v3029
        %v3102 = vunpack.c.l.b16 %v3030
        %v3103 = vunpack.c.h.b16 %v3030
        %v3104 = vunpack.c.l.b16 %v3031
        %v3105 = vunpack.c.h.b16 %v3031
        %v3106 = vunpack.c.l.b16 %v3032
        %v3107 = vunpack.c.h.b16 %v3032
        %v3108 = vunpack.c.l.b16 %v3033
        %v3109 = vunpack.c.h.b16 %v3033
        %v3110 = vunpack.c.l.b16 %v3034
        %v3111 = vunpack.c.h.b16 %v3034
        %v3112 = vunpack.c.l.b16 %v3035
        %v3113 = vunpack.c.h.b16 %v3035
        %v3114 = vunpack.c.l.b16 %v3036
        %v3115 = vunpack.c.h.b16 %v3036
        %v3116 = vunpack.c.l.b16 %v3037
        %v3117 = vunpack.c.h.b16 %v3037
        %v3118 = vunpack.c.l.b16 %v3038
        %v3119 = vunpack.c.h.b16 %v3038
        %v3120 = vunpack.c.l.b16 %v3039
        %v3121 = vunpack.c.h.b16 %v3039
        %v3122 = vunpack.c.l.b16 %v3040
        %v3123 = vunpack.c.h.b16 %v3040
        %v3124 = vunpack.c.l.b16 %v3041
        %v3125 = vunpack.c.h.b16 %v3041
        %v3126 = vunpack.c.l.b16 %v3042
        %v3127 = vunpack.c.h.b16 %v3042
        %v3128 = vunpack.c.l.b16 %v3043
        %v3129 = vunpack.c.h.b16 %v3043
        %v3130 = vunpack.c.l.b16 %v3044
        %v3131 = vunpack.c.h.b16 %v3044
        %v3132 = vunpack.c.l.b16 %v3045
        %v3133 = vunpack.c.h.b16 %v3045
        %v3134 = vunpack.c.l.b16 %v3046
        %v3135 = vunpack.c.h.b16 %v3046
        %v3136 = vunpack.c.l.b16 %v3047
        %v3137 = vunpack.c.h.b16 %v3047
        %v3138 = vunpack.c.l.b16 %v3048
        %v3139 = vunpack.c.h.b16 %v3048
        %v3140 = vunpack.c.l.b16 %v3049
        %v3141 = vunpack.c.h.b16 %v3049
        %v3142 = vunpack.c.l.b16 %v3050
        %v3143 = vunpack.c.h.b16 %v3050
        %v3144 = vunpack.c.l.b16 %v3051
        %v3145 = vunpack.c.h.b16 %v3051
        %v3146 = vunpack.c.l.b16 %v3052
        %v3147 = vunpack.c.h.b16 %v3052
        %v3148 = vunpack.c.l.b16 %v3053
        %v3149 = vunpack.c.h.b16 %v3053
        %v3150 = vpack.c.b16 %v3088, %v3086
        %v3151 = vpack.c.b16 %v3089, %v3087
        %v3152 = vpack.c.b16 %v3092, %v3090
        %v3153 = vpack.c.b16 %v3093, %v3091
        %v3154 = vpack.c.b16 %v3096, %v3094
        %v3155 = vpack.c.b16 %v3097, %v3095
        %v3156 = vpack.c.b16 %v3100, %v3098
        %v3157 = vpack.c.b16 %v3101, %v3099
        %v3158 = vpack.c.b16 %v3104, %v3102
        %v3159 = vpack.c.b16 %v3105, %v3103
        %v3160 = vpack.c.b16 %v3108, %v3106
        %v3161 = vpack.c.b16 %v3109, %v3107
        %v3162 = vpack.c.b16 %v3112, %v3110
        %v3163 = vpack.c.b16 %v3113, %v3111
        %v3164 = vpack.c.b16 %v3116, %v3114
        %v3165 = vpack.c.b16 %v3117, %v3115
        %v3166 = vpack.c.b16 %v3120, %v3118
        %v3167 = vpack.c.b16 %v3121, %v3119
        %v3168 = vpack.c.b16 %v3124, %v3122
        %v3169 = vpack.c.b16 %v3125, %v3123
        %v3170 = vpack.c.b16 %v3128, %v3126
        %v3171 = vpack.c.b16 %v3129, %v3127
        %v3172 = vpack.c.b16 %v3132, %v3130
        %v3173 = vpack.c.b16 %v3133, %v3131
        %v3174 = vpack.c.b16 %v3136, %v3134
        %v3175 = vpack.c.b16 %v3137, %v3135
        %v3176 = vpack.c.b16 %v3140, %v3138
        %v3177 = vpack.c.b16 %v3141, %v3139
        %v3178 = vpack.c.b16 %v3144, %v3142
        %v3179 = vpack.c.b16 %v3145, %v3143
        %v3180 = vpack.c.b16 %v3148, %v3146
        %v3181 = vpack.c.b16 %v3149, %v3147
        %3214 = vmatprep.subr.bf16.mxu0 %v3165
        %3215 = vmatpush1.bf16.msra.mxu0 %v3164
        %3216 = vmatprep.subr.bf16.mxu0 %v3163
        %3217 = vmatpush1.bf16.msra.mxu0 %v3162
        %3218 = vmatprep.subr.bf16.mxu0 %v3161
        %3219 = vmatpush1.bf16.msra.mxu0 %v3160
        %3220 = vmatprep.subr.bf16.mxu0 %v3159
        %3221 = vmatpush1.bf16.msra.mxu0 %v3158
        %3222 = vmatprep.subr.bf16.mxu0 %v3157
        %3223 = vmatpush1.bf16.msra.mxu0 %v3156
        %3224 = vmatprep.subr.bf16.mxu0 %v3155
        %3225 = vmatpush1.bf16.msra.mxu0 %v3154
        %3226 = vmatprep.subr.bf16.mxu0 %v3153
        %3227 = vmatpush1.bf16.msra.mxu0 %v3152
        %3228 = vmatprep.subr.bf16.mxu0 %v3151
        %3229 = vmatpush1.bf16.msra.mxu0 %v3150
        %3230 = vmatprep.subr.bf16.mxu0 %v3181
        %3231 = vmatpush2.bf16.msra.mxu0 %v3180
        %3232 = vmatprep.subr.bf16.mxu0 %v3179
        %3233 = vmatpush2.bf16.msra.mxu0 %v3178
        %3234 = vmatprep.subr.bf16.mxu0 %v3177
        %3235 = vmatpush2.bf16.msra.mxu0 %v3176
        %3236 = vmatprep.subr.bf16.mxu0 %v3175
        %3237 = vmatpush2.bf16.msra.mxu0 %v3174
        %3238 = vmatprep.subr.bf16.mxu0 %v3173
        %3239 = vmatpush2.bf16.msra.mxu0 %v3172
        %3240 = vmatprep.subr.bf16.mxu0 %v3171
        %3241 = vmatpush2.bf16.msra.mxu0 %v3170
        %3242 = vmatprep.subr.bf16.mxu0 %v3169
        %3243 = vmatpush2.bf16.msra.mxu0 %v3168
        %3244 = vmatprep.subr.bf16.mxu0 %v3167
        %3245 = vmatpush2.bf16.msra.mxu0 %v3166
        %3246 = vmatprep.mubr.bf16.mxu0 %v2435
        %3247 = vmatmul.mubr.bf16.gmra.mxu0 %v2434
        %v3248 = vpop.f32.mrf.mxu0
        %v3249 = vadd.f32 0.0, %v3248
        %v3250 = vpop.f32.mrf.mxu0
        %v3251 = vadd.f32 0.0, %v3250
        %v3252 = vpop.f32.mrf.mxu0
        %v3253 = vadd.f32 0.0, %v3252
        %v3254 = vpop.f32.mrf.mxu0
        %v3255 = vadd.f32 0.0, %v3254
        %3256 = vmatprep.mubr.bf16.mxu0 %v2437
        %3257 = vmatmul.mubr.bf16.gmra.mxu0 %v2436
        %v3258 = vpop.f32.mrf.mxu0
        %v3259 = vadd.f32 0.0, %v3258
        %v3260 = vpop.f32.mrf.mxu0
        %v3261 = vadd.f32 0.0, %v3260
        %v3262 = vpop.f32.mrf.mxu0
        %v3263 = vpop.f32.mrf.mxu0
        %3264 = vmatprep.mubr.bf16.mxu0 %v2439
        %3265 = vmatmul.mubr.bf16.gmra.mxu0 %v2438
        %v3266 = vpop.f32.mrf.mxu0
        %v3267 = vadd.f32 0.0, %v3266
        %v3268 = vpop.f32.mrf.mxu0
        %v3269 = vadd.f32 0.0, %v3268
        %v3270 = vpop.f32.mrf.mxu0
        %v3271 = vadd.f32 0.0, %v3270
        %v3272 = vpop.f32.mrf.mxu0
        %v3273 = vadd.f32 0.0, %v3272
        %3274 = vmatprep.mubr.bf16.mxu0 %v2441
        %3275 = vmatmul.mubr.bf16.gmra.mxu0 %v2440
        %v3276 = vpop.f32.mrf.mxu0
        %v3277 = vadd.f32 0.0, %v3276
        %v3278 = vpop.f32.mrf.mxu0
        %v3279 = vadd.f32 0.0, %v3278
        %v3280 = vpop.f32.mrf.mxu0
        %v3281 = vpop.f32.mrf.mxu0
        %3282 = vdwg.mxu0
        %v3295 = vrot.slane %v3249, 4
        %v3296 = vrot.slane %v3253, 4
        %v3297 = vsel %vm2071, %v3295, %v3296
        %v3298 = vrot.slane %v3251, 4
        %v3299 = vrot.slane %v3255, 4
        %v3300 = vsel %vm2071, %v3298, %v3299
        %v3301 = vrot.slane %v3259, 4
        %v3302 = vsel %vm2071, %v3296, %v3301
        %v3303 = vrot.slane %v3261, 4
        %v3304 = vsel %vm2071, %v3299, %v3303
        %v3305 = vrot.slane %v3267, 4
        %v3306 = vrot.slane %v3271, 4
        %v3307 = vsel %vm2071, %v3305, %v3306
        %v3308 = vrot.slane %v3269, 4
        %v3309 = vrot.slane %v3273, 4
        %v3310 = vsel %vm2071, %v3308, %v3309
        %v3311 = vrot.slane %v3277, 4
        %v3312 = vsel %vm2071, %v3306, %v3311
        %v3313 = vrot.slane %v3279, 4
        %v3314 = vsel %vm2071, %v3309, %v3313
        %v3327 = vadd.f32 %v3009, %v3297
        %v3328 = vadd.f32 %v3010, %v3300
        %v3329 = vadd.f32 %v3011, %v3302
        %v3330 = vadd.f32 %v3012, %v3304
        %v3331 = vadd.f32 %v3013, %v3301
        %v3332 = vadd.f32 %v3014, %v3303
        %v3333 = vadd.f32 %v3015, %v3307
        %v3334 = vadd.f32 %v3016, %v3310
        %v3335 = vadd.f32 %v3017, %v3312
        %v3336 = vadd.f32 %v3018, %v3314
        %v3337 = vadd.f32 %v3019, %v3311
        %v3338 = vadd.f32 %v3020, %v3313
        %s3339 = scalar_lea.vmem %s3, 768
        %v3340 = vld [vmem:[%s3339] sm:$0xff]
        %v3341 = vld [vmem:[%s3339 + $0x8] sm:$0xff]
        %v3342 = vld [vmem:[%s3339 + $0x10] sm:$0xff]
        %v3343 = vld [vmem:[%s3339 + $0x18] sm:$0xff]
        %v3344 = vld [vmem:[%s3339 + $0x20] sm:$0xff]
        %v3345 = vld [vmem:[%s3339 + $0x28] sm:$0xff]
        %v3346 = vld [vmem:[%s3339 + $0x30] sm:$0xff]
        %v3347 = vld [vmem:[%s3339 + $0x38] sm:$0xff]
        %v3348 = vld [vmem:[%s3339 + $0x40] sm:$0xff]
        %v3349 = vld [vmem:[%s3339 + $0x48] sm:$0xff]
        %v3350 = vld [vmem:[%s3339 + $0x50] sm:$0xff]
        %v3351 = vld [vmem:[%s3339 + $0x58] sm:$0xff]
        %v3352 = vld [vmem:[%s3339 + $0x60] sm:$0xff]
        %v3353 = vld [vmem:[%s3339 + $0x68] sm:$0xff]
        %v3354 = vld [vmem:[%s3339 + $0x70] sm:$0xff]
        %v3355 = vld [vmem:[%s3339 + $0x78] sm:$0xff]
        %v3356 = vld [vmem:[%s3339 + $0x80] sm:$0xff]
        %v3357 = vld [vmem:[%s3339 + $0x88] sm:$0xff]
        %v3358 = vld [vmem:[%s3339 + $0x90] sm:$0xff]
        %v3359 = vld [vmem:[%s3339 + $0x98] sm:$0xff]
        %v3360 = vld [vmem:[%s3339 + $0xa0] sm:$0xff]
        %v3361 = vld [vmem:[%s3339 + $0xa8] sm:$0xff]
        %v3362 = vld [vmem:[%s3339 + $0xb0] sm:$0xff]
        %v3363 = vld [vmem:[%s3339 + $0xb8] sm:$0xff]
        %v3364 = vld [vmem:[%s3339 + $0xc0] sm:$0xff]
        %v3365 = vld [vmem:[%s3339 + $0xc8] sm:$0xff]
        %v3366 = vld [vmem:[%s3339 + $0xd0] sm:$0xff]
        %v3367 = vld [vmem:[%s3339 + $0xd8] sm:$0xff]
        %v3368 = vld [vmem:[%s3339 + $0xe0] sm:$0xff]
        %v3369 = vld [vmem:[%s3339 + $0xe8] sm:$0xff]
        %v3370 = vld [vmem:[%s3339 + $0xf0] sm:$0xff]
        %v3371 = vld [vmem:[%s3339 + $0xf8] sm:$0xff]
        %v3404 = vunpack.c.l.b16 %v3340
        %v3405 = vunpack.c.h.b16 %v3340
        %v3406 = vunpack.c.l.b16 %v3341
        %v3407 = vunpack.c.h.b16 %v3341
        %v3408 = vunpack.c.l.b16 %v3342
        %v3409 = vunpack.c.h.b16 %v3342
        %v3410 = vunpack.c.l.b16 %v3343
        %v3411 = vunpack.c.h.b16 %v3343
        %v3412 = vunpack.c.l.b16 %v3344
        %v3413 = vunpack.c.h.b16 %v3344
        %v3414 = vunpack.c.l.b16 %v3345
        %v3415 = vunpack.c.h.b16 %v3345
        %v3416 = vunpack.c.l.b16 %v3346
        %v3417 = vunpack.c.h.b16 %v3346
        %v3418 = vunpack.c.l.b16 %v3347
        %v3419 = vunpack.c.h.b16 %v3347
        %v3420 = vunpack.c.l.b16 %v3348
        %v3421 = vunpack.c.h.b16 %v3348
        %v3422 = vunpack.c.l.b16 %v3349
        %v3423 = vunpack.c.h.b16 %v3349
        %v3424 = vunpack.c.l.b16 %v3350
        %v3425 = vunpack.c.h.b16 %v3350
        %v3426 = vunpack.c.l.b16 %v3351
        %v3427 = vunpack.c.h.b16 %v3351
        %v3428 = vunpack.c.l.b16 %v3352
        %v3429 = vunpack.c.h.b16 %v3352
        %v3430 = vunpack.c.l.b16 %v3353
        %v3431 = vunpack.c.h.b16 %v3353
        %v3432 = vunpack.c.l.b16 %v3354
        %v3433 = vunpack.c.h.b16 %v3354
        %v3434 = vunpack.c.l.b16 %v3355
        %v3435 = vunpack.c.h.b16 %v3355
        %v3436 = vunpack.c.l.b16 %v3356
        %v3437 = vunpack.c.h.b16 %v3356
        %v3438 = vunpack.c.l.b16 %v3357
        %v3439 = vunpack.c.h.b16 %v3357
        %v3440 = vunpack.c.l.b16 %v3358
        %v3441 = vunpack.c.h.b16 %v3358
        %v3442 = vunpack.c.l.b16 %v3359
        %v3443 = vunpack.c.h.b16 %v3359
        %v3444 = vunpack.c.l.b16 %v3360
        %v3445 = vunpack.c.h.b16 %v3360
        %v3446 = vunpack.c.l.b16 %v3361
        %v3447 = vunpack.c.h.b16 %v3361
        %v3448 = vunpack.c.l.b16 %v3362
        %v3449 = vunpack.c.h.b16 %v3362
        %v3450 = vunpack.c.l.b16 %v3363
        %v3451 = vunpack.c.h.b16 %v3363
        %v3452 = vunpack.c.l.b16 %v3364
        %v3453 = vunpack.c.h.b16 %v3364
        %v3454 = vunpack.c.l.b16 %v3365
        %v3455 = vunpack.c.h.b16 %v3365
        %v3456 = vunpack.c.l.b16 %v3366
        %v3457 = vunpack.c.h.b16 %v3366
        %v3458 = vunpack.c.l.b16 %v3367
        %v3459 = vunpack.c.h.b16 %v3367
        %v3460 = vunpack.c.l.b16 %v3368
        %v3461 = vunpack.c.h.b16 %v3368
        %v3462 = vunpack.c.l.b16 %v3369
        %v3463 = vunpack.c.h.b16 %v3369
        %v3464 = vunpack.c.l.b16 %v3370
        %v3465 = vunpack.c.h.b16 %v3370
        %v3466 = vunpack.c.l.b16 %v3371
        %v3467 = vunpack.c.h.b16 %v3371
        %v3468 = vpack.c.b16 %v3406, %v3404
        %v3469 = vpack.c.b16 %v3407, %v3405
        %v3470 = vpack.c.b16 %v3410, %v3408
        %v3471 = vpack.c.b16 %v3411, %v3409
        %v3472 = vpack.c.b16 %v3414, %v3412
        %v3473 = vpack.c.b16 %v3415, %v3413
        %v3474 = vpack.c.b16 %v3418, %v3416
        %v3475 = vpack.c.b16 %v3419, %v3417
        %v3476 = vpack.c.b16 %v3422, %v3420
        %v3477 = vpack.c.b16 %v3423, %v3421
        %v3478 = vpack.c.b16 %v3426, %v3424
        %v3479 = vpack.c.b16 %v3427, %v3425
        %v3480 = vpack.c.b16 %v3430, %v3428
        %v3481 = vpack.c.b16 %v3431, %v3429
        %v3482 = vpack.c.b16 %v3434, %v3432
        %v3483 = vpack.c.b16 %v3435, %v3433
        %v3484 = vpack.c.b16 %v3438, %v3436
        %v3485 = vpack.c.b16 %v3439, %v3437
        %v3486 = vpack.c.b16 %v3442, %v3440
        %v3487 = vpack.c.b16 %v3443, %v3441
        %v3488 = vpack.c.b16 %v3446, %v3444
        %v3489 = vpack.c.b16 %v3447, %v3445
        %v3490 = vpack.c.b16 %v3450, %v3448
        %v3491 = vpack.c.b16 %v3451, %v3449
        %v3492 = vpack.c.b16 %v3454, %v3452
        %v3493 = vpack.c.b16 %v3455, %v3453
        %v3494 = vpack.c.b16 %v3458, %v3456
        %v3495 = vpack.c.b16 %v3459, %v3457
        %v3496 = vpack.c.b16 %v3462, %v3460
        %v3497 = vpack.c.b16 %v3463, %v3461
        %v3498 = vpack.c.b16 %v3466, %v3464
        %v3499 = vpack.c.b16 %v3467, %v3465
        %3532 = vmatprep.subr.bf16.mxu0 %v3483
        %3533 = vmatpush1.bf16.msra.mxu0 %v3482
        %3534 = vmatprep.subr.bf16.mxu0 %v3481
        %3535 = vmatpush1.bf16.msra.mxu0 %v3480
        %3536 = vmatprep.subr.bf16.mxu0 %v3479
        %3537 = vmatpush1.bf16.msra.mxu0 %v3478
        %3538 = vmatprep.subr.bf16.mxu0 %v3477
        %3539 = vmatpush1.bf16.msra.mxu0 %v3476
        %3540 = vmatprep.subr.bf16.mxu0 %v3475
        %3541 = vmatpush1.bf16.msra.mxu0 %v3474
        %3542 = vmatprep.subr.bf16.mxu0 %v3473
        %3543 = vmatpush1.bf16.msra.mxu0 %v3472
        %3544 = vmatprep.subr.bf16.mxu0 %v3471
        %3545 = vmatpush1.bf16.msra.mxu0 %v3470
        %3546 = vmatprep.subr.bf16.mxu0 %v3469
        %3547 = vmatpush1.bf16.msra.mxu0 %v3468
        %3548 = vmatprep.subr.bf16.mxu0 %v3499
        %3549 = vmatpush2.bf16.msra.mxu0 %v3498
        %3550 = vmatprep.subr.bf16.mxu0 %v3497
        %3551 = vmatpush2.bf16.msra.mxu0 %v3496
        %3552 = vmatprep.subr.bf16.mxu0 %v3495
        %3553 = vmatpush2.bf16.msra.mxu0 %v3494
        %3554 = vmatprep.subr.bf16.mxu0 %v3493
        %3555 = vmatpush2.bf16.msra.mxu0 %v3492
        %3556 = vmatprep.subr.bf16.mxu0 %v3491
        %3557 = vmatpush2.bf16.msra.mxu0 %v3490
        %3558 = vmatprep.subr.bf16.mxu0 %v3489
        %3559 = vmatpush2.bf16.msra.mxu0 %v3488
        %3560 = vmatprep.subr.bf16.mxu0 %v3487
        %3561 = vmatpush2.bf16.msra.mxu0 %v3486
        %3562 = vmatprep.subr.bf16.mxu0 %v3485
        %3563 = vmatpush2.bf16.msra.mxu0 %v3484
        %3564 = vmatprep.mubr.bf16.mxu0 %v2435
        %3565 = vmatmul.mubr.bf16.gmra.mxu0 %v2434
        %v3566 = vpop.f32.mrf.mxu0
        %v3567 = vadd.f32 0.0, %v3566
        %v3568 = vpop.f32.mrf.mxu0
        %v3569 = vadd.f32 0.0, %v3568
        %v3570 = vpop.f32.mrf.mxu0
        %v3571 = vadd.f32 0.0, %v3570
        %v3572 = vpop.f32.mrf.mxu0
        %v3573 = vadd.f32 0.0, %v3572
        %3574 = vmatprep.mubr.bf16.mxu0 %v2437
        %3575 = vmatmul.mubr.bf16.gmra.mxu0 %v2436
        %v3576 = vpop.f32.mrf.mxu0
        %v3577 = vadd.f32 0.0, %v3576
        %v3578 = vpop.f32.mrf.mxu0
        %v3579 = vadd.f32 0.0, %v3578
        %v3580 = vpop.f32.mrf.mxu0
        %v3581 = vadd.f32 0.0, %v3580
        %v3582 = vpop.f32.mrf.mxu0
        %v3583 = vadd.f32 0.0, %v3582
        %3584 = vmatprep.mubr.bf16.mxu0 %v2439
        %3585 = vmatmul.mubr.bf16.gmra.mxu0 %v2438
        %v3586 = vpop.f32.mrf.mxu0
        %v3587 = vadd.f32 0.0, %v3586
        %v3588 = vpop.f32.mrf.mxu0
        %v3589 = vadd.f32 0.0, %v3588
        %v3590 = vpop.f32.mrf.mxu0
        %v3591 = vadd.f32 0.0, %v3590
        %v3592 = vpop.f32.mrf.mxu0
        %v3593 = vadd.f32 0.0, %v3592
        %3594 = vmatprep.mubr.bf16.mxu0 %v2441
        %3595 = vmatmul.mubr.bf16.gmra.mxu0 %v2440
        %v3596 = vpop.f32.mrf.mxu0
        %v3597 = vadd.f32 0.0, %v3596
        %v3598 = vpop.f32.mrf.mxu0
        %v3599 = vadd.f32 0.0, %v3598
        %v3600 = vpop.f32.mrf.mxu0
        %v3601 = vadd.f32 0.0, %v3600
        %v3602 = vpop.f32.mrf.mxu0
        %v3603 = vadd.f32 0.0, %v3602
        %3604 = vdwg.mxu0
        %vm3621 = vcmask 1041408
        %v3622 = vrot.slane %v3567, 6
        %v3623 = vrot.slane %v3571, 6
        %v3624 = vsel %vm3621, %v3622, %v3623
        %v3625 = vrot.slane %v3569, 6
        %v3626 = vrot.slane %v3573, 6
        %v3627 = vsel %vm3621, %v3625, %v3626
        %v3628 = vrot.slane %v3577, 6
        %v3629 = vsel %vm3621, %v3623, %v3628
        %v3630 = vrot.slane %v3579, 6
        %v3631 = vsel %vm3621, %v3626, %v3630
        %v3632 = vrot.slane %v3581, 6
        %v3633 = vsel %vm3621, %v3628, %v3632
        %v3634 = vrot.slane %v3583, 6
        %v3635 = vsel %vm3621, %v3630, %v3634
        %v3636 = vrot.slane %v3587, 6
        %v3637 = vrot.slane %v3591, 6
        %v3638 = vsel %vm3621, %v3636, %v3637
        %v3639 = vrot.slane %v3589, 6
        %v3640 = vrot.slane %v3593, 6
        %v3641 = vsel %vm3621, %v3639, %v3640
        %v3642 = vrot.slane %v3597, 6
        %v3643 = vsel %vm3621, %v3637, %v3642
        %v3644 = vrot.slane %v3599, 6
        %v3645 = vsel %vm3621, %v3640, %v3644
        %v3646 = vrot.slane %v3601, 6
        %v3647 = vsel %vm3621, %v3642, %v3646
        %v3648 = vrot.slane %v3603, 6
        %v3649 = vsel %vm3621, %v3644, %v3648
        %v3662 = vadd.f32 %v3327, %v3624
        %v3663 = vadd.f32 %v3328, %v3627
        %v3664 = vadd.f32 %v3329, %v3629
        %v3665 = vadd.f32 %v3330, %v3631
        %v3666 = vadd.f32 %v3331, %v3633
        %v3667 = vadd.f32 %v3332, %v3635
        %v3668 = vadd.f32 %v3333, %v3638
        %v3669 = vadd.f32 %v3334, %v3641
        %v3670 = vadd.f32 %v3335, %v3643
        %v3671 = vadd.f32 %v3336, %v3645
        %v3672 = vadd.f32 %v3337, %v3647
        %v3673 = vadd.f32 %v3338, %v3649
        %s3674 = scalar_lea.vmem %s3, 1024
        %v3675 = vld [vmem:[%s3674] sm:$0xff]
        %v3676 = vld [vmem:[%s3674 + $0x8] sm:$0xff]
        %v3677 = vld [vmem:[%s3674 + $0x10] sm:$0xff]
        %v3678 = vld [vmem:[%s3674 + $0x18] sm:$0xff]
        %v3679 = vld [vmem:[%s3674 + $0x20] sm:$0xff]
        %v3680 = vld [vmem:[%s3674 + $0x28] sm:$0xff]
        %v3681 = vld [vmem:[%s3674 + $0x30] sm:$0xff]
        %v3682 = vld [vmem:[%s3674 + $0x38] sm:$0xff]
        %v3683 = vld [vmem:[%s3674 + $0x40] sm:$0xff]
        %v3684 = vld [vmem:[%s3674 + $0x48] sm:$0xff]
        %v3685 = vld [vmem:[%s3674 + $0x50] sm:$0xff]
        %v3686 = vld [vmem:[%s3674 + $0x58] sm:$0xff]
        %v3687 = vld [vmem:[%s3674 + $0x60] sm:$0xff]
        %v3688 = vld [vmem:[%s3674 + $0x68] sm:$0xff]
        %v3689 = vld [vmem:[%s3674 + $0x70] sm:$0xff]
        %v3690 = vld [vmem:[%s3674 + $0x78] sm:$0xff]
        %v3691 = vld [vmem:[%s3674 + $0x80] sm:$0xff]
        %v3692 = vld [vmem:[%s3674 + $0x88] sm:$0xff]
        %v3693 = vld [vmem:[%s3674 + $0x90] sm:$0xff]
        %v3694 = vld [vmem:[%s3674 + $0x98] sm:$0xff]
        %v3695 = vld [vmem:[%s3674 + $0xa0] sm:$0xff]
        %v3696 = vld [vmem:[%s3674 + $0xa8] sm:$0xff]
        %v3697 = vld [vmem:[%s3674 + $0xb0] sm:$0xff]
        %v3698 = vld [vmem:[%s3674 + $0xb8] sm:$0xff]
        %v3699 = vld [vmem:[%s3674 + $0xc0] sm:$0xff]
        %v3700 = vld [vmem:[%s3674 + $0xc8] sm:$0xff]
        %v3701 = vld [vmem:[%s3674 + $0xd0] sm:$0xff]
        %v3702 = vld [vmem:[%s3674 + $0xd8] sm:$0xff]
        %v3703 = vld [vmem:[%s3674 + $0xe0] sm:$0xff]
        %v3704 = vld [vmem:[%s3674 + $0xe8] sm:$0xff]
        %v3705 = vld [vmem:[%s3674 + $0xf0] sm:$0xff]
        %v3706 = vld [vmem:[%s3674 + $0xf8] sm:$0xff]
        %v3739 = vunpack.c.l.b16 %v3675
        %v3740 = vunpack.c.h.b16 %v3675
        %v3741 = vunpack.c.l.b16 %v3676
        %v3742 = vunpack.c.h.b16 %v3676
        %v3743 = vunpack.c.l.b16 %v3677
        %v3744 = vunpack.c.h.b16 %v3677
        %v3745 = vunpack.c.l.b16 %v3678
        %v3746 = vunpack.c.h.b16 %v3678
        %v3747 = vunpack.c.l.b16 %v3679
        %v3748 = vunpack.c.h.b16 %v3679
        %v3749 = vunpack.c.l.b16 %v3680
        %v3750 = vunpack.c.h.b16 %v3680
        %v3751 = vunpack.c.l.b16 %v3681
        %v3752 = vunpack.c.h.b16 %v3681
        %v3753 = vunpack.c.l.b16 %v3682
        %v3754 = vunpack.c.h.b16 %v3682
        %v3755 = vunpack.c.l.b16 %v3683
        %v3756 = vunpack.c.h.b16 %v3683
        %v3757 = vunpack.c.l.b16 %v3684
        %v3758 = vunpack.c.h.b16 %v3684
        %v3759 = vunpack.c.l.b16 %v3685
        %v3760 = vunpack.c.h.b16 %v3685
        %v3761 = vunpack.c.l.b16 %v3686
        %v3762 = vunpack.c.h.b16 %v3686
        %v3763 = vunpack.c.l.b16 %v3687
        %v3764 = vunpack.c.h.b16 %v3687
        %v3765 = vunpack.c.l.b16 %v3688
        %v3766 = vunpack.c.h.b16 %v3688
        %v3767 = vunpack.c.l.b16 %v3689
        %v3768 = vunpack.c.h.b16 %v3689
        %v3769 = vunpack.c.l.b16 %v3690
        %v3770 = vunpack.c.h.b16 %v3690
        %v3771 = vunpack.c.l.b16 %v3691
        %v3772 = vunpack.c.h.b16 %v3691
        %v3773 = vunpack.c.l.b16 %v3692
        %v3774 = vunpack.c.h.b16 %v3692
        %v3775 = vunpack.c.l.b16 %v3693
        %v3776 = vunpack.c.h.b16 %v3693
        %v3777 = vunpack.c.l.b16 %v3694
        %v3778 = vunpack.c.h.b16 %v3694
        %v3779 = vunpack.c.l.b16 %v3695
        %v3780 = vunpack.c.h.b16 %v3695
        %v3781 = vunpack.c.l.b16 %v3696
        %v3782 = vunpack.c.h.b16 %v3696
        %v3783 = vunpack.c.l.b16 %v3697
        %v3784 = vunpack.c.h.b16 %v3697
        %v3785 = vunpack.c.l.b16 %v3698
        %v3786 = vunpack.c.h.b16 %v3698
        %v3787 = vunpack.c.l.b16 %v3699
        %v3788 = vunpack.c.h.b16 %v3699
        %v3789 = vunpack.c.l.b16 %v3700
        %v3790 = vunpack.c.h.b16 %v3700
        %v3791 = vunpack.c.l.b16 %v3701
        %v3792 = vunpack.c.h.b16 %v3701
        %v3793 = vunpack.c.l.b16 %v3702
        %v3794 = vunpack.c.h.b16 %v3702
        %v3795 = vunpack.c.l.b16 %v3703
        %v3796 = vunpack.c.h.b16 %v3703
        %v3797 = vunpack.c.l.b16 %v3704
        %v3798 = vunpack.c.h.b16 %v3704
        %v3799 = vunpack.c.l.b16 %v3705
        %v3800 = vunpack.c.h.b16 %v3705
        %v3801 = vunpack.c.l.b16 %v3706
        %v3802 = vunpack.c.h.b16 %v3706
        %v3803 = vpack.c.b16 %v3741, %v3739
        %v3804 = vpack.c.b16 %v3742, %v3740
        %v3805 = vpack.c.b16 %v3745, %v3743
        %v3806 = vpack.c.b16 %v3746, %v3744
        %v3807 = vpack.c.b16 %v3749, %v3747
        %v3808 = vpack.c.b16 %v3750, %v3748
        %v3809 = vpack.c.b16 %v3753, %v3751
        %v3810 = vpack.c.b16 %v3754, %v3752
        %v3811 = vpack.c.b16 %v3757, %v3755
        %v3812 = vpack.c.b16 %v3758, %v3756
        %v3813 = vpack.c.b16 %v3761, %v3759
        %v3814 = vpack.c.b16 %v3762, %v3760
        %v3815 = vpack.c.b16 %v3765, %v3763
        %v3816 = vpack.c.b16 %v3766, %v3764
        %v3817 = vpack.c.b16 %v3769, %v3767
        %v3818 = vpack.c.b16 %v3770, %v3768
        %v3819 = vpack.c.b16 %v3773, %v3771
        %v3820 = vpack.c.b16 %v3774, %v3772
        %v3821 = vpack.c.b16 %v3777, %v3775
        %v3822 = vpack.c.b16 %v3778, %v3776
        %v3823 = vpack.c.b16 %v3781, %v3779
        %v3824 = vpack.c.b16 %v3782, %v3780
        %v3825 = vpack.c.b16 %v3785, %v3783
        %v3826 = vpack.c.b16 %v3786, %v3784
        %v3827 = vpack.c.b16 %v3789, %v3787
        %v3828 = vpack.c.b16 %v3790, %v3788
        %v3829 = vpack.c.b16 %v3793, %v3791
        %v3830 = vpack.c.b16 %v3794, %v3792
        %v3831 = vpack.c.b16 %v3797, %v3795
        %v3832 = vpack.c.b16 %v3798, %v3796
        %v3833 = vpack.c.b16 %v3801, %v3799
        %v3834 = vpack.c.b16 %v3802, %v3800
        %3867 = vmatprep.subr.bf16.mxu0 %v3818
        %3868 = vmatpush1.bf16.msra.mxu0 %v3817
        %3869 = vmatprep.subr.bf16.mxu0 %v3816
        %3870 = vmatpush1.bf16.msra.mxu0 %v3815
        %3871 = vmatprep.subr.bf16.mxu0 %v3814
        %3872 = vmatpush1.bf16.msra.mxu0 %v3813
        %3873 = vmatprep.subr.bf16.mxu0 %v3812
        %3874 = vmatpush1.bf16.msra.mxu0 %v3811
        %3875 = vmatprep.subr.bf16.mxu0 %v3810
        %3876 = vmatpush1.bf16.msra.mxu0 %v3809
        %3877 = vmatprep.subr.bf16.mxu0 %v3808
        %3878 = vmatpush1.bf16.msra.mxu0 %v3807
        %3879 = vmatprep.subr.bf16.mxu0 %v3806
        %3880 = vmatpush1.bf16.msra.mxu0 %v3805
        %3881 = vmatprep.subr.bf16.mxu0 %v3804
        %3882 = vmatpush1.bf16.msra.mxu0 %v3803
        %3883 = vmatprep.subr.bf16.mxu0 %v3834
        %3884 = vmatpush2.bf16.msra.mxu0 %v3833
        %3885 = vmatprep.subr.bf16.mxu0 %v3832
        %3886 = vmatpush2.bf16.msra.mxu0 %v3831
        %3887 = vmatprep.subr.bf16.mxu0 %v3830
        %3888 = vmatpush2.bf16.msra.mxu0 %v3829
        %3889 = vmatprep.subr.bf16.mxu0 %v3828
        %3890 = vmatpush2.bf16.msra.mxu0 %v3827
        %3891 = vmatprep.subr.bf16.mxu0 %v3826
        %3892 = vmatpush2.bf16.msra.mxu0 %v3825
        %3893 = vmatprep.subr.bf16.mxu0 %v3824
        %3894 = vmatpush2.bf16.msra.mxu0 %v3823
        %3895 = vmatprep.subr.bf16.mxu0 %v3822
        %3896 = vmatpush2.bf16.msra.mxu0 %v3821
        %3897 = vmatprep.subr.bf16.mxu0 %v3820
        %3898 = vmatpush2.bf16.msra.mxu0 %v3819
        %3899 = vmatprep.mubr.bf16.mxu0 %v2435
        %3900 = vmatmul.mubr.bf16.gmra.mxu0 %v2434
        %v3901 = vpop.f32.mrf.mxu0
        %v3902 = vpop.f32.mrf.mxu0
        %v3903 = vpop.f32.mrf.mxu0
        %v3904 = vadd.f32 0.0, %v3903
        %v3905 = vpop.f32.mrf.mxu0
        %v3906 = vadd.f32 0.0, %v3905
        %3907 = vmatprep.mubr.bf16.mxu0 %v2437
        %3908 = vmatmul.mubr.bf16.gmra.mxu0 %v2436
        %v3909 = vpop.f32.mrf.mxu0
        %v3910 = vadd.f32 0.0, %v3909
        %v3911 = vpop.f32.mrf.mxu0
        %v3912 = vadd.f32 0.0, %v3911
        %v3913 = vpop.f32.mrf.mxu0
        %v3914 = vadd.f32 0.0, %v3913
        %v3915 = vpop.f32.mrf.mxu0
        %v3916 = vadd.f32 0.0, %v3915
        %3917 = vmatprep.mubr.bf16.mxu0 %v2439
        %3918 = vmatmul.mubr.bf16.gmra.mxu0 %v2438
        %v3919 = vpop.f32.mrf.mxu0
        %v3920 = vpop.f32.mrf.mxu0
        %v3921 = vpop.f32.mrf.mxu0
        %v3922 = vadd.f32 0.0, %v3921
        %v3923 = vpop.f32.mrf.mxu0
        %v3924 = vadd.f32 0.0, %v3923
        %3925 = vmatprep.mubr.bf16.mxu0 %v2441
        %3926 = vmatmul.mubr.bf16.gmra.mxu0 %v2440
        %v3927 = vpop.f32.mrf.mxu0
        %v3928 = vadd.f32 0.0, %v3927
        %v3929 = vpop.f32.mrf.mxu0
        %v3930 = vadd.f32 0.0, %v3929
        %v3931 = vpop.f32.mrf.mxu0
        %v3932 = vadd.f32 0.0, %v3931
        %v3933 = vpop.f32.mrf.mxu0
        %v3934 = vadd.f32 0.0, %v3933
        %3935 = vdwg.mxu0
        %v3936 = vadd.f32 %v3662, %v3904
        %v3937 = vadd.f32 %v3663, %v3906
        %v3938 = vadd.f32 %v3664, %v3910
        %v3939 = vadd.f32 %v3665, %v3912
        %v3940 = vadd.f32 %v3666, %v3914
        %v3941 = vadd.f32 %v3667, %v3916
        %v3942 = vadd.f32 %v3668, %v3922
        %v3943 = vadd.f32 %v3669, %v3924
        %v3944 = vadd.f32 %v3670, %v3928
        %v3945 = vadd.f32 %v3671, %v3930
        %v3946 = vadd.f32 %v3672, %v3932
        %v3947 = vadd.f32 %v3673, %v3934
        %v3948 = vld [vmem:[%s4] sm:$0x3]
        %v3950 = vlaneseq
        %v3951 = vshrl.u32 %v3950, 7
        %v3952 = vsub.s32 0, %v3951
        %v3953 = vrot.slane %v3948, %v3952
        %v3954 = vlaneseq
        %v3955 = vshrl.u32 %v3954, 7
        %v3956 = vsub.s32 1, %v3955
        %v3957 = vrot.slane %v3948, %v3956
        %v3960 = vadd.f32 %v3936, %v3953
        %v3961 = vadd.f32 %v3937, %v3957
        %v3962 = vadd.f32 %v3938, %v3953
        %v3963 = vadd.f32 %v3939, %v3957
        %v3964 = vadd.f32 %v3940, %v3953
        %v3965 = vadd.f32 %v3941, %v3957
        %v3966 = vadd.f32 %v3942, %v3953
        %v3967 = vadd.f32 %v3943, %v3957
        %v3968 = vadd.f32 %v3944, %v3953
        %v3969 = vadd.f32 %v3945, %v3957
        %v3970 = vadd.f32 %v3946, %v3953
        %v3971 = vadd.f32 %v3947, %v3957
        %v3972 = vmax.f32 %v3960, 0.0
        %v3973 = vmax.f32 %v3961, 0.0
        %v3974 = vmax.f32 %v3962, 0.0
        %v3975 = vmax.f32 %v3963, 0.0
        %v3976 = vmax.f32 %v3964, 0.0
        %v3977 = vmax.f32 %v3965, 0.0
        %v3978 = vmax.f32 %v3966, 0.0
        %v3979 = vmax.f32 %v3967, 0.0
        %v3980 = vmax.f32 %v3968, 0.0
        %v3981 = vmax.f32 %v3969, 0.0
        %v3982 = vmax.f32 %v3970, 0.0
        %v3983 = vmax.f32 %v3971, 0.0
        %v3984 = vmul.f32 %v3972, 8.0
        %v3985 = vmul.f32 %v3973, 8.0
        %v3986 = vmul.f32 %v3974, 8.0
        %v3987 = vmul.f32 %v3975, 8.0
        %v3988 = vmul.f32 %v3976, 8.0
        %v3989 = vmul.f32 %v3977, 8.0
        %v3990 = vmul.f32 %v3978, 8.0
        %v3991 = vmul.f32 %v3979, 8.0
        %v3992 = vmul.f32 %v3980, 8.0
        %v3993 = vmul.f32 %v3981, 8.0
        %v3994 = vmul.f32 %v3982, 8.0
        %v3995 = vmul.f32 %v3983, 8.0
        %v3996 = vround.ne.pseudo %v3984
        %v3997 = vround.ne.pseudo %v3985
        %v3998 = vround.ne.pseudo %v3986
        %v3999 = vround.ne.pseudo %v3987
        %v4000 = vround.ne.pseudo %v3988
        %v4001 = vround.ne.pseudo %v3989
        %v4002 = vround.ne.pseudo %v3990
        %v4003 = vround.ne.pseudo %v3991
        %v4004 = vround.ne.pseudo %v3992
        %v4005 = vround.ne.pseudo %v3993
        %v4006 = vround.ne.pseudo %v3994
        %v4007 = vround.ne.pseudo %v3995
        %v4008 = vmax.f32 %v3996, -127.0
        %v4009 = vmax.f32 %v3997, -127.0
        %v4010 = vmax.f32 %v3998, -127.0
        %v4011 = vmax.f32 %v3999, -127.0
        %v4012 = vmax.f32 %v4000, -127.0
        %v4013 = vmax.f32 %v4001, -127.0
        %v4014 = vmax.f32 %v4002, -127.0
        %v4015 = vmax.f32 %v4003, -127.0
        %v4016 = vmax.f32 %v4004, -127.0
        %v4017 = vmax.f32 %v4005, -127.0
        %v4018 = vmax.f32 %v4006, -127.0
        %v4019 = vmax.f32 %v4007, -127.0
        %v4020 = vmin.f32 %v4008, 127.0
        %v4021 = vmin.f32 %v4009, 127.0
        %v4022 = vmin.f32 %v4010, 127.0
        %v4023 = vmin.f32 %v4011, 127.0
        %v4024 = vmin.f32 %v4012, 127.0
        %v4025 = vmin.f32 %v4013, 127.0
        %v4026 = vmin.f32 %v4014, 127.0
        %v4027 = vmin.f32 %v4015, 127.0
        %v4028 = vmin.f32 %v4016, 127.0
        %v4029 = vmin.f32 %v4017, 127.0
        %v4030 = vmin.f32 %v4018, 127.0
        %v4031 = vmin.f32 %v4019, 127.0
        %v4032 = vmul.f32 %v4020, 0.125
        %v4033 = vmul.f32 %v4021, 0.125
        %v4034 = vmul.f32 %v4022, 0.125
        %v4035 = vmul.f32 %v4023, 0.125
        %v4036 = vmul.f32 %v4024, 0.125
        %v4037 = vmul.f32 %v4025, 0.125
        %v4038 = vmul.f32 %v4026, 0.125
        %v4039 = vmul.f32 %v4027, 0.125
        %v4040 = vmul.f32 %v4028, 0.125
        %v4041 = vmul.f32 %v4029, 0.125
        %v4042 = vmul.f32 %v4030, 0.125
        %v4043 = vmul.f32 %v4031, 0.125
        %4056 = vrot.lane.b32.xlu0 %v4032, 112
        %v4057 = vpop.permute.xlu0 %4056
        %4058 = vrot.lane.b32.xlu0 %v4033, 112
        %v4059 = vpop.permute.xlu0 %4058
        %4060 = vrot.lane.b32.xlu0 %v4034, 112
        %v4061 = vpop.permute.xlu0 %4060
        %4062 = vrot.lane.b32.xlu0 %v4035, 112
        %v4063 = vpop.permute.xlu0 %4062
        %4064 = vrot.lane.b32.xlu0 %v4036, 112
        %v4065 = vpop.permute.xlu0 %4064
        %4066 = vrot.lane.b32.xlu0 %v4037, 112
        %v4067 = vpop.permute.xlu0 %4066
        %4068 = vrot.lane.b32.xlu0 %v4038, 112
        %v4069 = vpop.permute.xlu0 %4068
        %4070 = vrot.lane.b32.xlu0 %v4039, 112
        %v4071 = vpop.permute.xlu0 %4070
        %4072 = vrot.lane.b32.xlu0 %v4040, 112
        %v4073 = vpop.permute.xlu0 %4072
        %4074 = vrot.lane.b32.xlu0 %v4041, 112
        %v4075 = vpop.permute.xlu0 %4074
        %4076 = vrot.lane.b32.xlu0 %v4042, 112
        %v4077 = vpop.permute.xlu0 %4076
        %4078 = vrot.lane.b32.xlu0 %v4043, 112
        %v4079 = vpop.permute.xlu0 %4078
        %vm4080 = vcmask 916480
        %v4081 = vsel %vm4080, %v4057, %v4059
        %v4082 = vsel %vm4080, %v4061, %v4063
        %v4083 = vsel %vm4080, %v4065, %v4067
        %v4084 = vsel %vm4080, %v4069, %v4071
        %v4085 = vsel %vm4080, %v4073, %v4075
        %v4086 = vsel %vm4080, %v4077, %v4079
        %v4099 = vsel %vm4080, %v4059, 0.0
        %v4100 = vsel %vm4080, %v4063, 0.0
        %v4101 = vsel %vm4080, %v4067, 0.0
        %v4102 = vsel %vm4080, %v4071, 0.0
        %v4103 = vsel %vm4080, %v4075, 0.0
        %v4104 = vsel %vm4080, %v4079, 0.0
        %v4105 = vmax.f32 %v4032, %v4081
        %v4106 = vmax.f32 %v4033, %v4099
        %v4107 = vmax.f32 %v4034, %v4082
        %v4108 = vmax.f32 %v4035, %v4100
        %v4109 = vmax.f32 %v4036, %v4083
        %v4110 = vmax.f32 %v4037, %v4101
        %v4111 = vmax.f32 %v4038, %v4084
        %v4112 = vmax.f32 %v4039, %v4102
        %v4113 = vmax.f32 %v4040, %v4085
        %v4114 = vmax.f32 %v4041, %v4103
        %v4115 = vmax.f32 %v4042, %v4086
        %v4116 = vmax.f32 %v4043, %v4104
        %v4121 = vrot.slane %v4105, 2
        %v4122 = vrot.slane %v4106, 2
        %v4123 = vrot.slane %v4111, 2
        %v4124 = vrot.slane %v4112, 2
        %v4129 = vmax.f32 %v4105, %v4121
        %v4130 = vmax.f32 %v4106, %v4122
        %v4131 = vmax.f32 %v4111, %v4123
        %v4132 = vmax.f32 %v4112, %v4124
        %v4133 = vpack.c.bf16 %v4129, %v4129
        %v4134 = vpack.c.bf16 %v4130, %v4130
        %v4135 = vpack.c.bf16 %v4131, %v4131
        %v4136 = vpack.c.bf16 %v4132, %v4132
        %v4137 = vld [vmem:[%s5] sm:$0xf]
        %v4138 = vld [vmem:[%s5 + $0x4] sm:$0xf]
        %v4139 = vld [vmem:[%s5 + $0x8] sm:$0xf]
        %v4140 = vld [vmem:[%s5 + $0xc] sm:$0xf]
        %v4141 = vld [vmem:[%s5 + $0x10] sm:$0xf]
        %v4142 = vld [vmem:[%s5 + $0x14] sm:$0xf]
        %v4143 = vld [vmem:[%s5 + $0x18] sm:$0xf]
        %v4144 = vld [vmem:[%s5 + $0x1c] sm:$0xf]
        %v4145 = vld [vmem:[%s5 + $0x20] sm:$0xf]
        %v4146 = vld [vmem:[%s5 + $0x24] sm:$0xf]
        %v4147 = vld [vmem:[%s5 + $0x28] sm:$0xf]
        %v4148 = vld [vmem:[%s5 + $0x2c] sm:$0xf]
        %v4149 = vld [vmem:[%s5 + $0x30] sm:$0xf]
        %v4150 = vld [vmem:[%s5 + $0x34] sm:$0xf]
        %v4151 = vld [vmem:[%s5 + $0x38] sm:$0xf]
        %v4152 = vld [vmem:[%s5 + $0x3c] sm:$0xf]
        %v4153 = vld [vmem:[%s5 + $0x40] sm:$0xf]
        %v4154 = vld [vmem:[%s5 + $0x44] sm:$0xf]
        %v4155 = vld [vmem:[%s5 + $0x48] sm:$0xf]
        %v4156 = vld [vmem:[%s5 + $0x4c] sm:$0xf]
        %v4157 = vld [vmem:[%s5 + $0x50] sm:$0xf]
        %v4158 = vld [vmem:[%s5 + $0x54] sm:$0xf]
        %v4159 = vld [vmem:[%s5 + $0x58] sm:$0xf]
        %v4160 = vld [vmem:[%s5 + $0x5c] sm:$0xf]
        %v4161 = vld [vmem:[%s5 + $0x60] sm:$0xf]
        %v4162 = vld [vmem:[%s5 + $0x64] sm:$0xf]
        %v4163 = vld [vmem:[%s5 + $0x68] sm:$0xf]
        %v4164 = vld [vmem:[%s5 + $0x6c] sm:$0xf]
        %v4165 = vld [vmem:[%s5 + $0x70] sm:$0xf]
        %v4166 = vld [vmem:[%s5 + $0x74] sm:$0xf]
        %v4167 = vld [vmem:[%s5 + $0x78] sm:$0xf]
        %v4168 = vld [vmem:[%s5 + $0x7c] sm:$0xf]
        %s4169 = scalar_lea.vmem %s5, 128
        %v4170 = vld [vmem:[%s4169] sm:$0xf]
        %v4171 = vld [vmem:[%s4169 + $0x4] sm:$0xf]
        %v4172 = vld [vmem:[%s4169 + $0x8] sm:$0xf]
        %v4173 = vld [vmem:[%s4169 + $0xc] sm:$0xf]
        %v4174 = vld [vmem:[%s4169 + $0x10] sm:$0xf]
        %v4175 = vld [vmem:[%s4169 + $0x14] sm:$0xf]
        %v4176 = vld [vmem:[%s4169 + $0x18] sm:$0xf]
        %v4177 = vld [vmem:[%s4169 + $0x1c] sm:$0xf]
        %v4178 = vld [vmem:[%s4169 + $0x20] sm:$0xf]
        %v4179 = vld [vmem:[%s4169 + $0x24] sm:$0xf]
        %v4180 = vld [vmem:[%s4169 + $0x28] sm:$0xf]
        %v4181 = vld [vmem:[%s4169 + $0x2c] sm:$0xf]
        %v4182 = vld [vmem:[%s4169 + $0x30] sm:$0xf]
        %v4183 = vld [vmem:[%s4169 + $0x34] sm:$0xf]
        %v4184 = vld [vmem:[%s4169 + $0x38] sm:$0xf]
        %v4185 = vld [vmem:[%s4169 + $0x3c] sm:$0xf]
        %v4186 = vld [vmem:[%s4169 + $0x40] sm:$0xf]
        %v4187 = vld [vmem:[%s4169 + $0x44] sm:$0xf]
        %v4188 = vld [vmem:[%s4169 + $0x48] sm:$0xf]
        %v4189 = vld [vmem:[%s4169 + $0x4c] sm:$0xf]
        %v4190 = vld [vmem:[%s4169 + $0x50] sm:$0xf]
        %v4191 = vld [vmem:[%s4169 + $0x54] sm:$0xf]
        %v4192 = vld [vmem:[%s4169 + $0x58] sm:$0xf]
        %v4193 = vld [vmem:[%s4169 + $0x5c] sm:$0xf]
        %v4194 = vld [vmem:[%s4169 + $0x60] sm:$0xf]
        %v4195 = vld [vmem:[%s4169 + $0x64] sm:$0xf]
        %v4196 = vld [vmem:[%s4169 + $0x68] sm:$0xf]
        %v4197 = vld [vmem:[%s4169 + $0x6c] sm:$0xf]
        %v4198 = vld [vmem:[%s4169 + $0x70] sm:$0xf]
        %v4199 = vld [vmem:[%s4169 + $0x74] sm:$0xf]
        %v4200 = vld [vmem:[%s4169 + $0x78] sm:$0xf]
        %v4201 = vld [vmem:[%s4169 + $0x7c] sm:$0xf]
        %v4206 = vunpack.c.l.b16 %v4133
        %v4207 = vunpack.c.l.b16 %v4134
        %v4208 = vunpack.c.l.b16 %v4135
        %v4209 = vunpack.c.l.b16 %v4136
        %v4210 = vrot.slane %v4206, 4
        %v4211 = vrot.slane %v4208, 3
        %vm4212 = vcmask 1041409
        %v4213 = vsel %vm4212, %v4211, %v4210
        %v4214 = vrot.slane %v4207, 4
        %v4215 = vrot.slane %v4209, 3
        %v4216 = vsel %vm4212, %v4215, %v4214
        %v4217 = vpack.c.b16 %v4213, %v4213
        %v4218 = vpack.c.b16 %v4216, %v4216
        %v4253 = vunpack.c.l.b16 %v4170
        %v4254 = vunpack.c.l.b16 %v4171
        %v4255 = vunpack.c.l.b16 %v4172
        %v4256 = vunpack.c.l.b16 %v4173
        %v4257 = vunpack.c.l.b16 %v4174
        %v4258 = vunpack.c.l.b16 %v4175
        %v4259 = vunpack.c.l.b16 %v4176
        %v4260 = vunpack.c.l.b16 %v4177
        %v4261 = vunpack.c.l.b16 %v4178
        %v4262 = vunpack.c.l.b16 %v4179
        %v4263 = vunpack.c.l.b16 %v4180
        %v4264 = vunpack.c.l.b16 %v4181
        %v4265 = vunpack.c.l.b16 %v4182
        %v4266 = vunpack.c.l.b16 %v4183
        %v4267 = vunpack.c.l.b16 %v4184
        %v4268 = vunpack.c.l.b16 %v4185
        %v4269 = vunpack.c.l.b16 %v4186
        %v4270 = vunpack.c.l.b16 %v4187
        %v4271 = vunpack.c.l.b16 %v4188
        %v4272 = vunpack.c.l.b16 %v4189
        %v4273 = vunpack.c.l.b16 %v4190
        %v4274 = vunpack.c.l.b16 %v4191
        %v4275 = vunpack.c.l.b16 %v4192
        %v4276 = vunpack.c.l.b16 %v4193
        %v4277 = vunpack.c.l.b16 %v4194
        %v4278 = vunpack.c.l.b16 %v4195
        %v4279 = vunpack.c.l.b16 %v4196
        %v4280 = vunpack.c.l.b16 %v4197
        %v4281 = vunpack.c.l.b16 %v4198
        %v4282 = vunpack.c.l.b16 %v4199
        %v4283 = vunpack.c.l.b16 %v4200
        %v4284 = vunpack.c.l.b16 %v4201
        %v4285 = vpack.c.b16 %v4254, %v4253
        %v4286 = vpack.c.b16 %v4256, %v4255
        %v4287 = vpack.c.b16 %v4258, %v4257
        %v4288 = vpack.c.b16 %v4260, %v4259
        %v4289 = vpack.c.b16 %v4262, %v4261
        %v4290 = vpack.c.b16 %v4264, %v4263
        %v4291 = vpack.c.b16 %v4266, %v4265
        %v4292 = vpack.c.b16 %v4268, %v4267
        %v4293 = vpack.c.b16 %v4270, %v4269
        %v4294 = vpack.c.b16 %v4272, %v4271
        %v4295 = vpack.c.b16 %v4274, %v4273
        %v4296 = vpack.c.b16 %v4276, %v4275
        %v4297 = vpack.c.b16 %v4278, %v4277
        %v4298 = vpack.c.b16 %v4280, %v4279
        %v4299 = vpack.c.b16 %v4282, %v4281
        %v4300 = vpack.c.b16 %v4284, %v4283
        %4317 = vmatprep.subr.bf16.mxu0 0
        %4318 = vmatpush1.bf16.msra.mxu0 %v4292
        %4319 = vmatprep.subr.bf16.mxu0 0
        %4320 = vmatpush1.bf16.msra.mxu0 %v4291
        %4321 = vmatprep.subr.bf16.mxu0 0
        %4322 = vmatpush1.bf16.msra.mxu0 %v4290
        %4323 = vmatprep.subr.bf16.mxu0 0
        %4324 = vmatpush1.bf16.msra.mxu0 %v4289
        %4325 = vmatprep.subr.bf16.mxu0 0
        %4326 = vmatpush1.bf16.msra.mxu0 %v4288
        %4327 = vmatprep.subr.bf16.mxu0 0
        %4328 = vmatpush1.bf16.msra.mxu0 %v4287
        %4329 = vmatprep.subr.bf16.mxu0 0
        %4330 = vmatpush1.bf16.msra.mxu0 %v4286
        %4331 = vmatprep.subr.bf16.mxu0 0
        %4332 = vmatpush1.bf16.msra.mxu0 %v4285
        %4333 = vmatprep.subr.bf16.mxu0 0
        %4334 = vmatpush2.bf16.msra.mxu0 %v4300
        %4335 = vmatprep.subr.bf16.mxu0 0
        %4336 = vmatpush2.bf16.msra.mxu0 %v4299
        %4337 = vmatprep.subr.bf16.mxu0 0
        %4338 = vmatpush2.bf16.msra.mxu0 %v4298
        %4339 = vmatprep.subr.bf16.mxu0 0
        %4340 = vmatpush2.bf16.msra.mxu0 %v4297
        %4341 = vmatprep.subr.bf16.mxu0 0
        %4342 = vmatpush2.bf16.msra.mxu0 %v4296
        %4343 = vmatprep.subr.bf16.mxu0 0
        %4344 = vmatpush2.bf16.msra.mxu0 %v4295
        %4345 = vmatprep.subr.bf16.mxu0 0
        %4346 = vmatpush2.bf16.msra.mxu0 %v4294
        %4347 = vmatprep.subr.bf16.mxu0 0
        %4348 = vmatpush2.bf16.msra.mxu0 %v4293
        %4349 = vmatprep.mubr.bf16.mxu0 %v4218
        %4350 = vmatmul.mubr.bf16.gmra.mxu0 %v4217
        %v4351 = vpop.f32.mrf.mxu0
        %v4352 = vadd.f32 0.0, %v4351
        %v4353 = vpop.f32.mrf.mxu0
        %v4354 = vpop.f32.mrf.mxu0
        %v4355 = vpop.f32.mrf.mxu0
        %4356 = vdwg.mxu0
        %v4357 = vrot.slane %v4208, 7
        %v4358 = vsel %vm4212, %v4357, %v4206
        %v4359 = vrot.slane %v4209, 7
        %v4360 = vsel %vm4212, %v4359, %v4207
        %v4361 = vpack.c.b16 %v4358, %v4358
        %v4362 = vpack.c.b16 %v4360, %v4360
        %v4397 = vunpack.c.l.b16 %v4137
        %v4398 = vunpack.c.l.b16 %v4138
        %v4399 = vunpack.c.l.b16 %v4139
        %v4400 = vunpack.c.l.b16 %v4140
        %v4401 = vunpack.c.l.b16 %v4141
        %v4402 = vunpack.c.l.b16 %v4142
        %v4403 = vunpack.c.l.b16 %v4143
        %v4404 = vunpack.c.l.b16 %v4144
        %v4405 = vunpack.c.l.b16 %v4145
        %v4406 = vunpack.c.l.b16 %v4146
        %v4407 = vunpack.c.l.b16 %v4147
        %v4408 = vunpack.c.l.b16 %v4148
        %v4409 = vunpack.c.l.b16 %v4149
        %v4410 = vunpack.c.l.b16 %v4150
        %v4411 = vunpack.c.l.b16 %v4151
        %v4412 = vunpack.c.l.b16 %v4152
        %v4413 = vunpack.c.l.b16 %v4153
        %v4414 = vunpack.c.l.b16 %v4154
        %v4415 = vunpack.c.l.b16 %v4155
        %v4416 = vunpack.c.l.b16 %v4156
        %v4417 = vunpack.c.l.b16 %v4157
        %v4418 = vunpack.c.l.b16 %v4158
        %v4419 = vunpack.c.l.b16 %v4159
        %v4420 = vunpack.c.l.b16 %v4160
        %v4421 = vunpack.c.l.b16 %v4161
        %v4422 = vunpack.c.l.b16 %v4162
        %v4423 = vunpack.c.l.b16 %v4163
        %v4424 = vunpack.c.l.b16 %v4164
        %v4425 = vunpack.c.l.b16 %v4165
        %v4426 = vunpack.c.l.b16 %v4166
        %v4427 = vunpack.c.l.b16 %v4167
        %v4428 = vunpack.c.l.b16 %v4168
        %v4429 = vpack.c.b16 %v4398, %v4397
        %v4430 = vpack.c.b16 %v4400, %v4399
        %v4431 = vpack.c.b16 %v4402, %v4401
        %v4432 = vpack.c.b16 %v4404, %v4403
        %v4433 = vpack.c.b16 %v4406, %v4405
        %v4434 = vpack.c.b16 %v4408, %v4407
        %v4435 = vpack.c.b16 %v4410, %v4409
        %v4436 = vpack.c.b16 %v4412, %v4411
        %v4437 = vpack.c.b16 %v4414, %v4413
        %v4438 = vpack.c.b16 %v4416, %v4415
        %v4439 = vpack.c.b16 %v4418, %v4417
        %v4440 = vpack.c.b16 %v4420, %v4419
        %v4441 = vpack.c.b16 %v4422, %v4421
        %v4442 = vpack.c.b16 %v4424, %v4423
        %v4443 = vpack.c.b16 %v4426, %v4425
        %v4444 = vpack.c.b16 %v4428, %v4427
        %4461 = vmatprep.subr.bf16.mxu0 0
        %4462 = vmatpush1.bf16.msra.mxu0 %v4436
        %4463 = vmatprep.subr.bf16.mxu0 0
        %4464 = vmatpush1.bf16.msra.mxu0 %v4435
        %4465 = vmatprep.subr.bf16.mxu0 0
        %4466 = vmatpush1.bf16.msra.mxu0 %v4434
        %4467 = vmatprep.subr.bf16.mxu0 0
        %4468 = vmatpush1.bf16.msra.mxu0 %v4433
        %4469 = vmatprep.subr.bf16.mxu0 0
        %4470 = vmatpush1.bf16.msra.mxu0 %v4432
        %4471 = vmatprep.subr.bf16.mxu0 0
        %4472 = vmatpush1.bf16.msra.mxu0 %v4431
        %4473 = vmatprep.subr.bf16.mxu0 0
        %4474 = vmatpush1.bf16.msra.mxu0 %v4430
        %4475 = vmatprep.subr.bf16.mxu0 0
        %4476 = vmatpush1.bf16.msra.mxu0 %v4429
        %4477 = vmatprep.subr.bf16.mxu0 0
        %4478 = vmatpush2.bf16.msra.mxu0 %v4444
        %4479 = vmatprep.subr.bf16.mxu0 0
        %4480 = vmatpush2.bf16.msra.mxu0 %v4443
        %4481 = vmatprep.subr.bf16.mxu0 0
        %4482 = vmatpush2.bf16.msra.mxu0 %v4442
        %4483 = vmatprep.subr.bf16.mxu0 0
        %4484 = vmatpush2.bf16.msra.mxu0 %v4441
        %4485 = vmatprep.subr.bf16.mxu0 0
        %4486 = vmatpush2.bf16.msra.mxu0 %v4440
        %4487 = vmatprep.subr.bf16.mxu0 0
        %4488 = vmatpush2.bf16.msra.mxu0 %v4439
        %4489 = vmatprep.subr.bf16.mxu0 0
        %4490 = vmatpush2.bf16.msra.mxu0 %v4438
        %4491 = vmatprep.subr.bf16.mxu0 0
        %4492 = vmatpush2.bf16.msra.mxu0 %v4437
        %4493 = vmatprep.mubr.bf16.mxu0 %v4362
        %4494 = vmatmul.mubr.bf16.gmra.mxu0 %v4361
        %v4495 = vpop.f32.mrf.mxu0
        %v4496 = vadd.f32 %v4352, %v4495
        %v4497 = vpop.f32.mrf.mxu0
        %v4498 = vpop.f32.mrf.mxu0
        %v4499 = vpop.f32.mrf.mxu0
        %4500 = vdwg.mxu0
        %v4505 = vrot.slane %v4107, 2
        %v4506 = vrot.slane %v4108, 2
        %v4507 = vrot.slane %v4113, 2
        %v4508 = vrot.slane %v4114, 2
        %v4513 = vmax.f32 %v4107, %v4505
        %v4514 = vmax.f32 %v4108, %v4506
        %v4515 = vmax.f32 %v4113, %v4507
        %v4516 = vmax.f32 %v4114, %v4508
        %v4517 = vpack.c.bf16 %v4513, %v4513
        %v4518 = vpack.c.bf16 %v4514, %v4514
        %v4519 = vpack.c.bf16 %v4515, %v4515
        %v4520 = vpack.c.bf16 %v4516, %v4516
        %s4521 = scalar_lea.vmem %s5, 256
        %v4522 = vld [vmem:[%s4521] sm:$0xf]
        %v4523 = vld [vmem:[%s4521 + $0x4] sm:$0xf]
        %v4524 = vld [vmem:[%s4521 + $0x8] sm:$0xf]
        %v4525 = vld [vmem:[%s4521 + $0xc] sm:$0xf]
        %v4526 = vld [vmem:[%s4521 + $0x10] sm:$0xf]
        %v4527 = vld [vmem:[%s4521 + $0x14] sm:$0xf]
        %v4528 = vld [vmem:[%s4521 + $0x18] sm:$0xf]
        %v4529 = vld [vmem:[%s4521 + $0x1c] sm:$0xf]
        %v4530 = vld [vmem:[%s4521 + $0x20] sm:$0xf]
        %v4531 = vld [vmem:[%s4521 + $0x24] sm:$0xf]
        %v4532 = vld [vmem:[%s4521 + $0x28] sm:$0xf]
        %v4533 = vld [vmem:[%s4521 + $0x2c] sm:$0xf]
        %v4534 = vld [vmem:[%s4521 + $0x30] sm:$0xf]
        %v4535 = vld [vmem:[%s4521 + $0x34] sm:$0xf]
        %v4536 = vld [vmem:[%s4521 + $0x38] sm:$0xf]
        %v4537 = vld [vmem:[%s4521 + $0x3c] sm:$0xf]
        %v4538 = vld [vmem:[%s4521 + $0x40] sm:$0xf]
        %v4539 = vld [vmem:[%s4521 + $0x44] sm:$0xf]
        %v4540 = vld [vmem:[%s4521 + $0x48] sm:$0xf]
        %v4541 = vld [vmem:[%s4521 + $0x4c] sm:$0xf]
        %v4542 = vld [vmem:[%s4521 + $0x50] sm:$0xf]
        %v4543 = vld [vmem:[%s4521 + $0x54] sm:$0xf]
        %v4544 = vld [vmem:[%s4521 + $0x58] sm:$0xf]
        %v4545 = vld [vmem:[%s4521 + $0x5c] sm:$0xf]
        %v4546 = vld [vmem:[%s4521 + $0x60] sm:$0xf]
        %v4547 = vld [vmem:[%s4521 + $0x64] sm:$0xf]
        %v4548 = vld [vmem:[%s4521 + $0x68] sm:$0xf]
        %v4549 = vld [vmem:[%s4521 + $0x6c] sm:$0xf]
        %v4550 = vld [vmem:[%s4521 + $0x70] sm:$0xf]
        %v4551 = vld [vmem:[%s4521 + $0x74] sm:$0xf]
        %v4552 = vld [vmem:[%s4521 + $0x78] sm:$0xf]
        %v4553 = vld [vmem:[%s4521 + $0x7c] sm:$0xf]
        %v4558 = vunpack.c.l.b16 %v4517
        %v4559 = vunpack.c.l.b16 %v4518
        %v4560 = vunpack.c.l.b16 %v4519
        %v4561 = vunpack.c.l.b16 %v4520
        %v4562 = vrot.slane %v4560, 7
        %v4563 = vsel %vm4212, %v4562, %v4558
        %v4564 = vrot.slane %v4561, 7
        %v4565 = vsel %vm4212, %v4564, %v4559
        %v4566 = vpack.c.b16 %v4563, %v4563
        %v4567 = vpack.c.b16 %v4565, %v4565
        %v4602 = vunpack.c.l.b16 %v4522
        %v4603 = vunpack.c.l.b16 %v4523
        %v4604 = vunpack.c.l.b16 %v4524
        %v4605 = vunpack.c.l.b16 %v4525
        %v4606 = vunpack.c.l.b16 %v4526
        %v4607 = vunpack.c.l.b16 %v4527
        %v4608 = vunpack.c.l.b16 %v4528
        %v4609 = vunpack.c.l.b16 %v4529
        %v4610 = vunpack.c.l.b16 %v4530
        %v4611 = vunpack.c.l.b16 %v4531
        %v4612 = vunpack.c.l.b16 %v4532
        %v4613 = vunpack.c.l.b16 %v4533
        %v4614 = vunpack.c.l.b16 %v4534
        %v4615 = vunpack.c.l.b16 %v4535
        %v4616 = vunpack.c.l.b16 %v4536
        %v4617 = vunpack.c.l.b16 %v4537
        %v4618 = vunpack.c.l.b16 %v4538
        %v4619 = vunpack.c.l.b16 %v4539
        %v4620 = vunpack.c.l.b16 %v4540
        %v4621 = vunpack.c.l.b16 %v4541
        %v4622 = vunpack.c.l.b16 %v4542
        %v4623 = vunpack.c.l.b16 %v4543
        %v4624 = vunpack.c.l.b16 %v4544
        %v4625 = vunpack.c.l.b16 %v4545
        %v4626 = vunpack.c.l.b16 %v4546
        %v4627 = vunpack.c.l.b16 %v4547
        %v4628 = vunpack.c.l.b16 %v4548
        %v4629 = vunpack.c.l.b16 %v4549
        %v4630 = vunpack.c.l.b16 %v4550
        %v4631 = vunpack.c.l.b16 %v4551
        %v4632 = vunpack.c.l.b16 %v4552
        %v4633 = vunpack.c.l.b16 %v4553
        %v4634 = vpack.c.b16 %v4603, %v4602
        %v4635 = vpack.c.b16 %v4605, %v4604
        %v4636 = vpack.c.b16 %v4607, %v4606
        %v4637 = vpack.c.b16 %v4609, %v4608
        %v4638 = vpack.c.b16 %v4611, %v4610
        %v4639 = vpack.c.b16 %v4613, %v4612
        %v4640 = vpack.c.b16 %v4615, %v4614
        %v4641 = vpack.c.b16 %v4617, %v4616
        %v4642 = vpack.c.b16 %v4619, %v4618
        %v4643 = vpack.c.b16 %v4621, %v4620
        %v4644 = vpack.c.b16 %v4623, %v4622
        %v4645 = vpack.c.b16 %v4625, %v4624
        %v4646 = vpack.c.b16 %v4627, %v4626
        %v4647 = vpack.c.b16 %v4629, %v4628
        %v4648 = vpack.c.b16 %v4631, %v4630
        %v4649 = vpack.c.b16 %v4633, %v4632
        %4666 = vmatprep.subr.bf16.mxu0 0
        %4667 = vmatpush1.bf16.msra.mxu0 %v4641
        %4668 = vmatprep.subr.bf16.mxu0 0
        %4669 = vmatpush1.bf16.msra.mxu0 %v4640
        %4670 = vmatprep.subr.bf16.mxu0 0
        %4671 = vmatpush1.bf16.msra.mxu0 %v4639
        %4672 = vmatprep.subr.bf16.mxu0 0
        %4673 = vmatpush1.bf16.msra.mxu0 %v4638
        %4674 = vmatprep.subr.bf16.mxu0 0
        %4675 = vmatpush1.bf16.msra.mxu0 %v4637
        %4676 = vmatprep.subr.bf16.mxu0 0
        %4677 = vmatpush1.bf16.msra.mxu0 %v4636
        %4678 = vmatprep.subr.bf16.mxu0 0
        %4679 = vmatpush1.bf16.msra.mxu0 %v4635
        %4680 = vmatprep.subr.bf16.mxu0 0
        %4681 = vmatpush1.bf16.msra.mxu0 %v4634
        %4682 = vmatprep.subr.bf16.mxu0 0
        %4683 = vmatpush2.bf16.msra.mxu0 %v4649
        %4684 = vmatprep.subr.bf16.mxu0 0
        %4685 = vmatpush2.bf16.msra.mxu0 %v4648
        %4686 = vmatprep.subr.bf16.mxu0 0
        %4687 = vmatpush2.bf16.msra.mxu0 %v4647
        %4688 = vmatprep.subr.bf16.mxu0 0
        %4689 = vmatpush2.bf16.msra.mxu0 %v4646
        %4690 = vmatprep.subr.bf16.mxu0 0
        %4691 = vmatpush2.bf16.msra.mxu0 %v4645
        %4692 = vmatprep.subr.bf16.mxu0 0
        %4693 = vmatpush2.bf16.msra.mxu0 %v4644
        %4694 = vmatprep.subr.bf16.mxu0 0
        %4695 = vmatpush2.bf16.msra.mxu0 %v4643
        %4696 = vmatprep.subr.bf16.mxu0 0
        %4697 = vmatpush2.bf16.msra.mxu0 %v4642
        %4698 = vmatprep.mubr.bf16.mxu0 %v4567
        %4699 = vmatmul.mubr.bf16.gmra.mxu0 %v4566
        %v4700 = vpop.f32.mrf.mxu0
        %v4701 = vadd.f32 0.0, %v4700
        %v4702 = vpop.f32.mrf.mxu0
        %v4703 = vpop.f32.mrf.mxu0
        %v4704 = vpop.f32.mrf.mxu0
        %4705 = vdwg.mxu0
        %v4706 = vadd.f32 %v4496, %v4701
        %s4707 = scalar_lea.vmem %s5, 384
        %v4708 = vld [vmem:[%s4707] sm:$0xf]
        %v4709 = vld [vmem:[%s4707 + $0x4] sm:$0xf]
        %v4710 = vld [vmem:[%s4707 + $0x8] sm:$0xf]
        %v4711 = vld [vmem:[%s4707 + $0xc] sm:$0xf]
        %v4712 = vld [vmem:[%s4707 + $0x10] sm:$0xf]
        %v4713 = vld [vmem:[%s4707 + $0x14] sm:$0xf]
        %v4714 = vld [vmem:[%s4707 + $0x18] sm:$0xf]
        %v4715 = vld [vmem:[%s4707 + $0x1c] sm:$0xf]
        %v4716 = vld [vmem:[%s4707 + $0x20] sm:$0xf]
        %v4717 = vld [vmem:[%s4707 + $0x24] sm:$0xf]
        %v4718 = vld [vmem:[%s4707 + $0x28] sm:$0xf]
        %v4719 = vld [vmem:[%s4707 + $0x2c] sm:$0xf]
        %v4720 = vld [vmem:[%s4707 + $0x30] sm:$0xf]
        %v4721 = vld [vmem:[%s4707 + $0x34] sm:$0xf]
        %v4722 = vld [vmem:[%s4707 + $0x38] sm:$0xf]
        %v4723 = vld [vmem:[%s4707 + $0x3c] sm:$0xf]
        %v4724 = vld [vmem:[%s4707 + $0x40] sm:$0xf]
        %v4725 = vld [vmem:[%s4707 + $0x44] sm:$0xf]
        %v4726 = vld [vmem:[%s4707 + $0x48] sm:$0xf]
        %v4727 = vld [vmem:[%s4707 + $0x4c] sm:$0xf]
        %v4728 = vld [vmem:[%s4707 + $0x50] sm:$0xf]
        %v4729 = vld [vmem:[%s4707 + $0x54] sm:$0xf]
        %v4730 = vld [vmem:[%s4707 + $0x58] sm:$0xf]
        %v4731 = vld [vmem:[%s4707 + $0x5c] sm:$0xf]
        %v4732 = vld [vmem:[%s4707 + $0x60] sm:$0xf]
        %v4733 = vld [vmem:[%s4707 + $0x64] sm:$0xf]
        %v4734 = vld [vmem:[%s4707 + $0x68] sm:$0xf]
        %v4735 = vld [vmem:[%s4707 + $0x6c] sm:$0xf]
        %v4736 = vld [vmem:[%s4707 + $0x70] sm:$0xf]
        %v4737 = vld [vmem:[%s4707 + $0x74] sm:$0xf]
        %v4738 = vld [vmem:[%s4707 + $0x78] sm:$0xf]
        %v4739 = vld [vmem:[%s4707 + $0x7c] sm:$0xf]
        %v4740 = vrot.slane %v4558, 4
        %v4741 = vrot.slane %v4560, 3
        %v4742 = vsel %vm4212, %v4741, %v4740
        %v4743 = vrot.slane %v4559, 4
        %v4744 = vrot.slane %v4561, 3
        %v4745 = vsel %vm4212, %v4744, %v4743
        %v4746 = vpack.c.b16 %v4742, %v4742
        %v4747 = vpack.c.b16 %v4745, %v4745
        %v4782 = vunpack.c.l.b16 %v4708
        %v4783 = vunpack.c.l.b16 %v4709
        %v4784 = vunpack.c.l.b16 %v4710
        %v4785 = vunpack.c.l.b16 %v4711
        %v4786 = vunpack.c.l.b16 %v4712
        %v4787 = vunpack.c.l.b16 %v4713
        %v4788 = vunpack.c.l.b16 %v4714
        %v4789 = vunpack.c.l.b16 %v4715
        %v4790 = vunpack.c.l.b16 %v4716
        %v4791 = vunpack.c.l.b16 %v4717
        %v4792 = vunpack.c.l.b16 %v4718
        %v4793 = vunpack.c.l.b16 %v4719
        %v4794 = vunpack.c.l.b16 %v4720
        %v4795 = vunpack.c.l.b16 %v4721
        %v4796 = vunpack.c.l.b16 %v4722
        %v4797 = vunpack.c.l.b16 %v4723
        %v4798 = vunpack.c.l.b16 %v4724
        %v4799 = vunpack.c.l.b16 %v4725
        %v4800 = vunpack.c.l.b16 %v4726
        %v4801 = vunpack.c.l.b16 %v4727
        %v4802 = vunpack.c.l.b16 %v4728
        %v4803 = vunpack.c.l.b16 %v4729
        %v4804 = vunpack.c.l.b16 %v4730
        %v4805 = vunpack.c.l.b16 %v4731
        %v4806 = vunpack.c.l.b16 %v4732
        %v4807 = vunpack.c.l.b16 %v4733
        %v4808 = vunpack.c.l.b16 %v4734
        %v4809 = vunpack.c.l.b16 %v4735
        %v4810 = vunpack.c.l.b16 %v4736
        %v4811 = vunpack.c.l.b16 %v4737
        %v4812 = vunpack.c.l.b16 %v4738
        %v4813 = vunpack.c.l.b16 %v4739
        %v4814 = vpack.c.b16 %v4783, %v4782
        %v4815 = vpack.c.b16 %v4785, %v4784
        %v4816 = vpack.c.b16 %v4787, %v4786
        %v4817 = vpack.c.b16 %v4789, %v4788
        %v4818 = vpack.c.b16 %v4791, %v4790
        %v4819 = vpack.c.b16 %v4793, %v4792
        %v4820 = vpack.c.b16 %v4795, %v4794
        %v4821 = vpack.c.b16 %v4797, %v4796
        %v4822 = vpack.c.b16 %v4799, %v4798
        %v4823 = vpack.c.b16 %v4801, %v4800
        %v4824 = vpack.c.b16 %v4803, %v4802
        %v4825 = vpack.c.b16 %v4805, %v4804
        %v4826 = vpack.c.b16 %v4807, %v4806
        %v4827 = vpack.c.b16 %v4809, %v4808
        %v4828 = vpack.c.b16 %v4811, %v4810
        %v4829 = vpack.c.b16 %v4813, %v4812
        %4846 = vmatprep.subr.bf16.mxu0 0
        %4847 = vmatpush1.bf16.msra.mxu0 %v4821
        %4848 = vmatprep.subr.bf16.mxu0 0
        %4849 = vmatpush1.bf16.msra.mxu0 %v4820
        %4850 = vmatprep.subr.bf16.mxu0 0
        %4851 = vmatpush1.bf16.msra.mxu0 %v4819
        %4852 = vmatprep.subr.bf16.mxu0 0
        %4853 = vmatpush1.bf16.msra.mxu0 %v4818
        %4854 = vmatprep.subr.bf16.mxu0 0
        %4855 = vmatpush1.bf16.msra.mxu0 %v4817
        %4856 = vmatprep.subr.bf16.mxu0 0
        %4857 = vmatpush1.bf16.msra.mxu0 %v4816
        %4858 = vmatprep.subr.bf16.mxu0 0
        %4859 = vmatpush1.bf16.msra.mxu0 %v4815
        %4860 = vmatprep.subr.bf16.mxu0 0
        %4861 = vmatpush1.bf16.msra.mxu0 %v4814
        %4862 = vmatprep.subr.bf16.mxu0 0
        %4863 = vmatpush2.bf16.msra.mxu0 %v4829
        %4864 = vmatprep.subr.bf16.mxu0 0
        %4865 = vmatpush2.bf16.msra.mxu0 %v4828
        %4866 = vmatprep.subr.bf16.mxu0 0
        %4867 = vmatpush2.bf16.msra.mxu0 %v4827
        %4868 = vmatprep.subr.bf16.mxu0 0
        %4869 = vmatpush2.bf16.msra.mxu0 %v4826
        %4870 = vmatprep.subr.bf16.mxu0 0
        %4871 = vmatpush2.bf16.msra.mxu0 %v4825
        %4872 = vmatprep.subr.bf16.mxu0 0
        %4873 = vmatpush2.bf16.msra.mxu0 %v4824
        %4874 = vmatprep.subr.bf16.mxu0 0
        %4875 = vmatpush2.bf16.msra.mxu0 %v4823
        %4876 = vmatprep.subr.bf16.mxu0 0
        %4877 = vmatpush2.bf16.msra.mxu0 %v4822
        %4878 = vmatprep.mubr.bf16.mxu0 %v4747
        %4879 = vmatmul.mubr.bf16.gmra.mxu0 %v4746
        %v4880 = vpop.f32.mrf.mxu0
        %v4881 = vadd.f32 0.0, %v4880
        %v4882 = vpop.f32.mrf.mxu0
        %v4883 = vpop.f32.mrf.mxu0
        %v4884 = vpop.f32.mrf.mxu0
        %4885 = vdwg.mxu0
        %v4886 = vadd.f32 %v4706, %v4881
        %v4891 = vrot.slane %v4109, 2
        %v4892 = vrot.slane %v4110, 2
        %v4893 = vrot.slane %v4115, 2
        %v4894 = vrot.slane %v4116, 2
        %v4899 = vmax.f32 %v4109, %v4891
        %v4900 = vmax.f32 %v4110, %v4892
        %v4901 = vmax.f32 %v4115, %v4893
        %v4902 = vmax.f32 %v4116, %v4894
        %v4903 = vpack.c.bf16 %v4899, %v4899
        %v4904 = vpack.c.bf16 %v4900, %v4900
        %v4905 = vpack.c.bf16 %v4901, %v4901
        %v4906 = vpack.c.bf16 %v4902, %v4902
        %s4907 = scalar_lea.vmem %s5, 512
        %v4908 = vld [vmem:[%s4907] sm:$0xf]
        %v4909 = vld [vmem:[%s4907 + $0x4] sm:$0xf]
        %v4910 = vld [vmem:[%s4907 + $0x8] sm:$0xf]
        %v4911 = vld [vmem:[%s4907 + $0xc] sm:$0xf]
        %v4912 = vld [vmem:[%s4907 + $0x10] sm:$0xf]
        %v4913 = vld [vmem:[%s4907 + $0x14] sm:$0xf]
        %v4914 = vld [vmem:[%s4907 + $0x18] sm:$0xf]
        %v4915 = vld [vmem:[%s4907 + $0x1c] sm:$0xf]
        %v4916 = vld [vmem:[%s4907 + $0x20] sm:$0xf]
        %v4917 = vld [vmem:[%s4907 + $0x24] sm:$0xf]
        %v4918 = vld [vmem:[%s4907 + $0x28] sm:$0xf]
        %v4919 = vld [vmem:[%s4907 + $0x2c] sm:$0xf]
        %v4920 = vld [vmem:[%s4907 + $0x30] sm:$0xf]
        %v4921 = vld [vmem:[%s4907 + $0x34] sm:$0xf]
        %v4922 = vld [vmem:[%s4907 + $0x38] sm:$0xf]
        %v4923 = vld [vmem:[%s4907 + $0x3c] sm:$0xf]
        %v4924 = vld [vmem:[%s4907 + $0x40] sm:$0xf]
        %v4925 = vld [vmem:[%s4907 + $0x44] sm:$0xf]
        %v4926 = vld [vmem:[%s4907 + $0x48] sm:$0xf]
        %v4927 = vld [vmem:[%s4907 + $0x4c] sm:$0xf]
        %v4928 = vld [vmem:[%s4907 + $0x50] sm:$0xf]
        %v4929 = vld [vmem:[%s4907 + $0x54] sm:$0xf]
        %v4930 = vld [vmem:[%s4907 + $0x58] sm:$0xf]
        %v4931 = vld [vmem:[%s4907 + $0x5c] sm:$0xf]
        %v4932 = vld [vmem:[%s4907 + $0x60] sm:$0xf]
        %v4933 = vld [vmem:[%s4907 + $0x64] sm:$0xf]
        %v4934 = vld [vmem:[%s4907 + $0x68] sm:$0xf]
        %v4935 = vld [vmem:[%s4907 + $0x6c] sm:$0xf]
        %v4936 = vld [vmem:[%s4907 + $0x70] sm:$0xf]
        %v4937 = vld [vmem:[%s4907 + $0x74] sm:$0xf]
        %v4938 = vld [vmem:[%s4907 + $0x78] sm:$0xf]
        %v4939 = vld [vmem:[%s4907 + $0x7c] sm:$0xf]
        %v4944 = vunpack.c.l.b16 %v4903
        %v4945 = vunpack.c.l.b16 %v4904
        %v4946 = vunpack.c.l.b16 %v4905
        %v4947 = vunpack.c.l.b16 %v4906
        %v4948 = vrot.slane %v4946, 7
        %v4949 = vsel %vm4212, %v4948, %v4944
        %v4950 = vrot.slane %v4947, 7
        %v4951 = vsel %vm4212, %v4950, %v4945
        %v4952 = vpack.c.b16 %v4949, %v4949
        %v4953 = vpack.c.b16 %v4951, %v4951
        %v4988 = vunpack.c.l.b16 %v4908
        %v4989 = vunpack.c.l.b16 %v4909
        %v4990 = vunpack.c.l.b16 %v4910
        %v4991 = vunpack.c.l.b16 %v4911
        %v4992 = vunpack.c.l.b16 %v4912
        %v4993 = vunpack.c.l.b16 %v4913
        %v4994 = vunpack.c.l.b16 %v4914
        %v4995 = vunpack.c.l.b16 %v4915
        %v4996 = vunpack.c.l.b16 %v4916
        %v4997 = vunpack.c.l.b16 %v4917
        %v4998 = vunpack.c.l.b16 %v4918
        %v4999 = vunpack.c.l.b16 %v4919
        %v5000 = vunpack.c.l.b16 %v4920
        %v5001 = vunpack.c.l.b16 %v4921
        %v5002 = vunpack.c.l.b16 %v4922
        %v5003 = vunpack.c.l.b16 %v4923
        %v5004 = vunpack.c.l.b16 %v4924
        %v5005 = vunpack.c.l.b16 %v4925
        %v5006 = vunpack.c.l.b16 %v4926
        %v5007 = vunpack.c.l.b16 %v4927
        %v5008 = vunpack.c.l.b16 %v4928
        %v5009 = vunpack.c.l.b16 %v4929
        %v5010 = vunpack.c.l.b16 %v4930
        %v5011 = vunpack.c.l.b16 %v4931
        %v5012 = vunpack.c.l.b16 %v4932
        %v5013 = vunpack.c.l.b16 %v4933
        %v5014 = vunpack.c.l.b16 %v4934
        %v5015 = vunpack.c.l.b16 %v4935
        %v5016 = vunpack.c.l.b16 %v4936
        %v5017 = vunpack.c.l.b16 %v4937
        %v5018 = vunpack.c.l.b16 %v4938
        %v5019 = vunpack.c.l.b16 %v4939
        %v5020 = vpack.c.b16 %v4989, %v4988
        %v5021 = vpack.c.b16 %v4991, %v4990
        %v5022 = vpack.c.b16 %v4993, %v4992
        %v5023 = vpack.c.b16 %v4995, %v4994
        %v5024 = vpack.c.b16 %v4997, %v4996
        %v5025 = vpack.c.b16 %v4999, %v4998
        %v5026 = vpack.c.b16 %v5001, %v5000
        %v5027 = vpack.c.b16 %v5003, %v5002
        %v5028 = vpack.c.b16 %v5005, %v5004
        %v5029 = vpack.c.b16 %v5007, %v5006
        %v5030 = vpack.c.b16 %v5009, %v5008
        %v5031 = vpack.c.b16 %v5011, %v5010
        %v5032 = vpack.c.b16 %v5013, %v5012
        %v5033 = vpack.c.b16 %v5015, %v5014
        %v5034 = vpack.c.b16 %v5017, %v5016
        %v5035 = vpack.c.b16 %v5019, %v5018
        %5052 = vmatprep.subr.bf16.mxu0 0
        %5053 = vmatpush1.bf16.msra.mxu0 %v5027
        %5054 = vmatprep.subr.bf16.mxu0 0
        %5055 = vmatpush1.bf16.msra.mxu0 %v5026
        %5056 = vmatprep.subr.bf16.mxu0 0
        %5057 = vmatpush1.bf16.msra.mxu0 %v5025
        %5058 = vmatprep.subr.bf16.mxu0 0
        %5059 = vmatpush1.bf16.msra.mxu0 %v5024
        %5060 = vmatprep.subr.bf16.mxu0 0
        %5061 = vmatpush1.bf16.msra.mxu0 %v5023
        %5062 = vmatprep.subr.bf16.mxu0 0
        %5063 = vmatpush1.bf16.msra.mxu0 %v5022
        %5064 = vmatprep.subr.bf16.mxu0 0
        %5065 = vmatpush1.bf16.msra.mxu0 %v5021
        %5066 = vmatprep.subr.bf16.mxu0 0
        %5067 = vmatpush1.bf16.msra.mxu0 %v5020
        %5068 = vmatprep.subr.bf16.mxu0 0
        %5069 = vmatpush2.bf16.msra.mxu0 %v5035
        %5070 = vmatprep.subr.bf16.mxu0 0
        %5071 = vmatpush2.bf16.msra.mxu0 %v5034
        %5072 = vmatprep.subr.bf16.mxu0 0
        %5073 = vmatpush2.bf16.msra.mxu0 %v5033
        %5074 = vmatprep.subr.bf16.mxu0 0
        %5075 = vmatpush2.bf16.msra.mxu0 %v5032
        %5076 = vmatprep.subr.bf16.mxu0 0
        %5077 = vmatpush2.bf16.msra.mxu0 %v5031
        %5078 = vmatprep.subr.bf16.mxu0 0
        %5079 = vmatpush2.bf16.msra.mxu0 %v5030
        %5080 = vmatprep.subr.bf16.mxu0 0
        %5081 = vmatpush2.bf16.msra.mxu0 %v5029
        %5082 = vmatprep.subr.bf16.mxu0 0
        %5083 = vmatpush2.bf16.msra.mxu0 %v5028
        %5084 = vmatprep.mubr.bf16.mxu0 %v4953
        %5085 = vmatmul.mubr.bf16.gmra.mxu0 %v4952
        %v5086 = vpop.f32.mrf.mxu0
        %v5087 = vadd.f32 0.0, %v5086
        %v5088 = vpop.f32.mrf.mxu0
        %v5089 = vpop.f32.mrf.mxu0
        %v5090 = vpop.f32.mrf.mxu0
        %5091 = vdwg.mxu0
        %v5092 = vadd.f32 %v4886, %v5087
        %v5093 = vld [vmem:[%s6] sm:$0x1]
        %v5095 = vlaneseq
        %v5096 = vshrl.u32 %v5095, 7
        %v5097 = vsub.s32 0, %v5096
        %v5098 = vrot.slane %v5093, %v5097
        %v5100 = vadd.f32 %v5092, %v5098
        %v5101 = vmax.f32 %v5100, 0.0
        %v5102 = vmul.f32 %v5101, 8.0
        %v5103 = vround.ne.pseudo %v5102
        %v5104 = vmax.f32 %v5103, -127.0
        %v5105 = vmin.f32 %v5104, 127.0
        %v5106 = vmul.f32 %v5105, 0.125
        %v5107 = vpack.c.bf16 %v5106, %v5106
        %v5108 = vld [vmem:[%s7] sm:$0xf]
        %v5109 = vld [vmem:[%s7 + $0x4] sm:$0xf]
        %v5110 = vld [vmem:[%s7 + $0x8] sm:$0xf]
        %v5111 = vld [vmem:[%s7 + $0xc] sm:$0xf]
        %v5112 = vld [vmem:[%s7 + $0x10] sm:$0xf]
        %v5113 = vld [vmem:[%s7 + $0x14] sm:$0xf]
        %v5114 = vld [vmem:[%s7 + $0x18] sm:$0xf]
        %v5115 = vld [vmem:[%s7 + $0x1c] sm:$0xf]
        %v5116 = vld [vmem:[%s7 + $0x20] sm:$0xf]
        %v5117 = vld [vmem:[%s7 + $0x24] sm:$0xf]
        %v5118 = vld [vmem:[%s7 + $0x28] sm:$0xf]
        %v5119 = vld [vmem:[%s7 + $0x2c] sm:$0xf]
        %v5120 = vld [vmem:[%s7 + $0x30] sm:$0xf]
        %v5121 = vld [vmem:[%s7 + $0x34] sm:$0xf]
        %v5122 = vld [vmem:[%s7 + $0x38] sm:$0xf]
        %v5123 = vld [vmem:[%s7 + $0x3c] sm:$0xf]
        %v5124 = vld [vmem:[%s8] sm:$0x1]
        %v5126 = vlaneseq
        %v5127 = vshrl.u32 %v5126, 7
        %v5128 = vsub.s32 0, %v5127
        %v5129 = vrot.slane %v5124, %v5128
        %v5147 = vunpack.c.l.b16 %v5108
        %v5148 = vunpack.c.l.b16 %v5109
        %v5149 = vunpack.c.l.b16 %v5110
        %v5150 = vunpack.c.l.b16 %v5111
        %v5151 = vunpack.c.l.b16 %v5112
        %v5152 = vunpack.c.l.b16 %v5113
        %v5153 = vunpack.c.l.b16 %v5114
        %v5154 = vunpack.c.l.b16 %v5115
        %v5155 = vunpack.c.l.b16 %v5116
        %v5156 = vunpack.c.l.b16 %v5117
        %v5157 = vunpack.c.l.b16 %v5118
        %v5158 = vunpack.c.l.b16 %v5119
        %v5159 = vunpack.c.l.b16 %v5120
        %v5160 = vunpack.c.l.b16 %v5121
        %v5161 = vunpack.c.l.b16 %v5122
        %v5162 = vunpack.c.l.b16 %v5123
        %v5163 = vpack.c.b16 %v5148, %v5147
        %v5164 = vpack.c.b16 %v5150, %v5149
        %v5165 = vpack.c.b16 %v5152, %v5151
        %v5166 = vpack.c.b16 %v5154, %v5153
        %v5167 = vpack.c.b16 %v5156, %v5155
        %v5168 = vpack.c.b16 %v5158, %v5157
        %v5169 = vpack.c.b16 %v5160, %v5159
        %v5170 = vpack.c.b16 %v5162, %v5161
        %5179 = vmatprep.subr.bf16.mxu0 0
        %5180 = vmatpush1.bf16.msra.mxu0 %v5170
        %5181 = vmatprep.subr.bf16.mxu0 0
        %5182 = vmatpush1.bf16.msra.mxu0 %v5169
        %5183 = vmatprep.subr.bf16.mxu0 0
        %5184 = vmatpush1.bf16.msra.mxu0 %v5168
        %5185 = vmatprep.subr.bf16.mxu0 0
        %5186 = vmatpush1.bf16.msra.mxu0 %v5167
        %5187 = vmatprep.subr.bf16.mxu0 0
        %5188 = vmatpush1.bf16.msra.mxu0 %v5166
        %5189 = vmatprep.subr.bf16.mxu0 0
        %5190 = vmatpush1.bf16.msra.mxu0 %v5165
        %5191 = vmatprep.subr.bf16.mxu0 0
        %5192 = vmatpush1.bf16.msra.mxu0 %v5164
        %5193 = vmatprep.subr.bf16.mxu0 0
        %5194 = vmatpush1.bf16.msra.mxu0 %v5163
        %5195 = vmatprep.subr.bf16.mxu0 0
        %5196 = vmatpush2.bf16.msra.mxu0 0
        %5197 = vmatprep.subr.bf16.mxu0 0
        %5198 = vmatpush2.bf16.msra.mxu0 0
        %5199 = vmatprep.subr.bf16.mxu0 0
        %5200 = vmatpush2.bf16.msra.mxu0 0
        %5201 = vmatprep.subr.bf16.mxu0 0
        %5202 = vmatpush2.bf16.msra.mxu0 0
        %5203 = vmatprep.subr.bf16.mxu0 0
        %5204 = vmatpush2.bf16.msra.mxu0 0
        %5205 = vmatprep.subr.bf16.mxu0 0
        %5206 = vmatpush2.bf16.msra.mxu0 0
        %5207 = vmatprep.subr.bf16.mxu0 0
        %5208 = vmatpush2.bf16.msra.mxu0 0
        %5209 = vmatprep.subr.bf16.mxu0 0
        %5210 = vmatpush2.bf16.msra.mxu0 0
        %5211 = vmatprep.mubr.bf16.mxu0 0
        %5212 = vmatmul.mubr.bf16.gmra.mxu0 %v5107
        %v5213 = vpop.f32.mrf.mxu0
        %v5214 = vadd.f32 %v5129, %v5213
        %v5215 = vpop.f32.mrf.mxu0
        %v5216 = vpop.f32.mrf.mxu0
        %v5217 = vpop.f32.mrf.mxu0
        %5218 = vdwg.mxu0
        %v5219 = vmax.f32 %v5214, 0.0
        %v5220 = vmul.f32 %v5219, 8.0
        %v5221 = vround.ne.pseudo %v5220
        %v5222 = vmax.f32 %v5221, -127.0
        %v5223 = vmin.f32 %v5222, 127.0
        %v5224 = vmul.f32 %v5223, 0.125
        %v5225 = vpack.c.bf16 %v5224, %v5224
        %v5226 = vld [vmem:[%s9] sm:$0xf]
        %v5227 = vld [vmem:[%s9 + $0x4] sm:$0xf]
        %v5228 = vld [vmem:[%s9 + $0x8] sm:$0xf]
        %v5229 = vld [vmem:[%s9 + $0xc] sm:$0xf]
        %v5230 = vld [vmem:[%s9 + $0x10] sm:$0xf]
        %v5231 = vld [vmem:[%s9 + $0x14] sm:$0xf]
        %v5232 = vld [vmem:[%s9 + $0x18] sm:$0xf]
        %v5233 = vld [vmem:[%s9 + $0x1c] sm:$0xf]
        %v5234 = vld [vmem:[%s9 + $0x20] sm:$0xf]
        %v5235 = vld [vmem:[%s9 + $0x24] sm:$0xf]
        %v5236 = vld [vmem:[%s9 + $0x28] sm:$0xf]
        %v5237 = vld [vmem:[%s9 + $0x2c] sm:$0xf]
        %v5238 = vld [vmem:[%s9 + $0x30] sm:$0xf]
        %v5239 = vld [vmem:[%s9 + $0x34] sm:$0xf]
        %v5240 = vld [vmem:[%s9 + $0x38] sm:$0xf]
        %v5241 = vld [vmem:[%s9 + $0x3c] sm:$0xf]
        %v5242 = vld [vmem:[%s10] sm:$0x1]
        %v5244 = vlaneseq
        %v5245 = vshrl.u32 %v5244, 7
        %v5246 = vsub.s32 0, %v5245
        %v5247 = vrot.slane %v5242, %v5246
        %v5265 = vunpack.c.l.b16 %v5226
        %v5266 = vunpack.c.l.b16 %v5227
        %v5267 = vunpack.c.l.b16 %v5228
        %v5268 = vunpack.c.l.b16 %v5229
        %v5269 = vunpack.c.l.b16 %v5230
        %v5270 = vunpack.c.l.b16 %v5231
        %v5271 = vunpack.c.l.b16 %v5232
        %v5272 = vunpack.c.l.b16 %v5233
        %v5273 = vunpack.c.l.b16 %v5234
        %v5274 = vunpack.c.l.b16 %v5235
        %v5275 = vunpack.c.l.b16 %v5236
        %v5276 = vunpack.c.l.b16 %v5237
        %v5277 = vunpack.c.l.b16 %v5238
        %v5278 = vunpack.c.l.b16 %v5239
        %v5279 = vunpack.c.l.b16 %v5240
        %v5280 = vunpack.c.l.b16 %v5241
        %v5281 = vpack.c.b16 %v5266, %v5265
        %v5282 = vpack.c.b16 %v5268, %v5267
        %v5283 = vpack.c.b16 %v5270, %v5269
        %v5284 = vpack.c.b16 %v5272, %v5271
        %v5285 = vpack.c.b16 %v5274, %v5273
        %v5286 = vpack.c.b16 %v5276, %v5275
        %v5287 = vpack.c.b16 %v5278, %v5277
        %v5288 = vpack.c.b16 %v5280, %v5279
        %5297 = vmatprep.subr.bf16.mxu0 0
        %5298 = vmatpush1.bf16.msra.mxu0 %v5288
        %5299 = vmatprep.subr.bf16.mxu0 0
        %5300 = vmatpush1.bf16.msra.mxu0 %v5287
        %5301 = vmatprep.subr.bf16.mxu0 0
        %5302 = vmatpush1.bf16.msra.mxu0 %v5286
        %5303 = vmatprep.subr.bf16.mxu0 0
        %5304 = vmatpush1.bf16.msra.mxu0 %v5285
        %5305 = vmatprep.subr.bf16.mxu0 0
        %5306 = vmatpush1.bf16.msra.mxu0 %v5284
        %5307 = vmatprep.subr.bf16.mxu0 0
        %5308 = vmatpush1.bf16.msra.mxu0 %v5283
        %5309 = vmatprep.subr.bf16.mxu0 0
        %5310 = vmatpush1.bf16.msra.mxu0 %v5282
        %5311 = vmatprep.subr.bf16.mxu0 0
        %5312 = vmatpush1.bf16.msra.mxu0 %v5281
        %5313 = vmatprep.subr.bf16.mxu0 0
        %5314 = vmatpush2.bf16.msra.mxu0 0
        %5315 = vmatprep.subr.bf16.mxu0 0
        %5316 = vmatpush2.bf16.msra.mxu0 0
        %5317 = vmatprep.subr.bf16.mxu0 0
        %5318 = vmatpush2.bf16.msra.mxu0 0
        %5319 = vmatprep.subr.bf16.mxu0 0
        %5320 = vmatpush2.bf16.msra.mxu0 0
        %5321 = vmatprep.subr.bf16.mxu0 0
        %5322 = vmatpush2.bf16.msra.mxu0 0
        %5323 = vmatprep.subr.bf16.mxu0 0
        %5324 = vmatpush2.bf16.msra.mxu0 0
        %5325 = vmatprep.subr.bf16.mxu0 0
        %5326 = vmatpush2.bf16.msra.mxu0 0
        %5327 = vmatprep.subr.bf16.mxu0 0
        %5328 = vmatpush2.bf16.msra.mxu0 0
        %5329 = vmatprep.mubr.bf16.mxu0 0
        %5330 = vmatmul.mubr.bf16.gmra.mxu0 %v5225
        %v5331 = vpop.f32.mrf.mxu0
        %v5332 = vadd.f32 %v5247, %v5331
        %v5333 = vpop.f32.mrf.mxu0
        %v5334 = vpop.f32.mrf.mxu0
        %v5335 = vpop.f32.mrf.mxu0
        %5336 = vdwg.mxu0
        %5337 = vst [vmem:[%s382] sm:$0x3] %v5332
        %s5338 = sand.u32 %s269, 1
        %s5339 = scalar_lea.sflag [#allocation3], %s5338
        %s5340 = sand.u32 %s269, 1
        %s5341 = smul.addr %s5340, 2
        %s5342 = scalar_lea.vmem [#allocation2], %s5341
        // Predicated region
        $region65: #{_lambda_.1} parent=63 // pred_check
          %p5343 = pneg %p279
        $region66: #{_lambda_.1} parent=63 // pred_check_branch
          %5345 = sbr.rel (%p5343) target = $region68
        $region67: #{_lambda_.1} parent=63 // pred_region
          %s5347 = ssub.s32 32, 32
          %5348 = vsyncadd %s5339, %s5347
          %s5349 = smul.addr %s25, 32
          %s5350 = scalar_lea.hbm %s11, %s5349
          %s5352 = sshll.u32 %s5342, 4
          %s5353 = int_to_ptr.vmem [resolvable:$true] %s5352
          %5355 = dma.vmem_to_hbm [thread:$0]  %s5353, 32, %s5350, %s5339
        $region68: #{_lambda_.1} parent=63 // pred_fallthru
          _
      $region64: #{_lambda_.1} parent=5 // pred_fallthru
        _
      %p5356 = scmp.le.s32.totalorder 2, %s20
      // Predicated region
      $region69: #{_lambda_.1} parent=5 // pred_check
        %p5357 = pneg %p5356
      $region70: #{_lambda_.1} parent=5 // pred_check_branch
        %5359 = sbr.rel (%p5357) target = $region72
      $region71: #{_lambda_.1} parent=5 // pred_region
        %s5360 = ssub.s32 %s20, 2
        // Predicated region
        $region73: #{_lambda_.1} parent=71 // pred_check
          %p5361 = pneg %p285
        $region74: #{_lambda_.1} parent=71 // pred_check_branch
          %5363 = sbr.rel (%p5361) target = $region76
        $region75: #{_lambda_.1} parent=71 // pred_region
          %s5364 = sand.u32 %s270, 1
          %s5365 = scalar_lea.sflag [#allocation3], %s5364
          %s5366 = sand.u32 %s270, 1
          %s5367 = smul.addr %s5366, 2
          %s5368 = scalar_lea.vmem [#allocation2], %s5367
          %5369 = dma.done %s5365, 32
        $region76: #{_lambda_.1} parent=71 // pred_fallthru
          _
      $region72: #{_lambda_.1} parent=5 // pred_fallthru
        _
    $region6: #{_lambda_.1} parent=1 // loop_footer
      %s24 = sadd.s32 1, %s20
    $region7: #{_lambda_.1} parent=1 // loop_footer_branch
      %19 = sbr.rel target = $region3
    $region8: #{_lambda_.1} parent=1 // loop_exit
      _
    %5370 = vsyncpa [#allocation3], 1
    %s5371 = scalar_lea.sflag [#allocation3], 1
    %5372 = vsyncpa %s5371, 1

</llo_original>
